<compile_context>
chip_gen: v6e
topology: v6e:2x2x1
jax: 0.10.0
libtpu: 0.0.40
codegen_flags: <defaults>
</compile_context>

<pallas_src>
import jax
import jax.numpy as jnp
import numpy as np
from jax.experimental import pallas as pl
from jax.experimental.pallas import tpu as pltpu


# ---------------------------------------------------------------------------
# Pallas kernel: whole forward (2-layer GRU recurrence + LayerNorm + MLP head)
# ---------------------------------------------------------------------------
def gru_with_residual_kernel(
    x_ref,        # (B, T, D)
    wi0_ref,      # (D, 3H)    layer-0 input weights packed [r | z | n]
    whh_ref,      # (3H, 3H)   rows: [Wh0_packed ; Wi1_packed ; Wh1_packed]
    fc1w_ref,     # (H, H//2)
    small_ref,    # (8, 128)   all biases / LayerNorm / fc2 params
    out_ref,      # (B, 1)
):
    B, T, D = x_ref.shape
    H3 = whh_ref.shape[1]
    H = H3 // 3
    H2 = fc1w_ref.shape[1]

    # ---- hoisted parameter loads (no per-step reloads / rebroadcasts) ------
    wi0 = wi0_ref[...]                       # (D, 3H)
    whh = whh_ref[...]                       # (3H, 3H)
    wh0 = whh[0:H, :]                        # sublane-aligned static slices
    wi1 = whh[H:2 * H, :]
    wh1 = whh[2 * H:3 * H, :]
    fc1w = fc1w_ref[...]                     # (H, H//2)

    sp = small_ref[...]                      # (8, 128)
    bx0 = sp[0:1, 0:H3]                      # [b_ir0+b_hr0 | b_iz0+b_hz0 | b_in0]
    bhn0 = sp[1:2, 0:H]                      # b_hn0
    bx1 = sp[2:3, 0:H3]                      # [b_ir1+b_hr1 | b_iz1+b_hz1 | b_in1]
    bhn1 = sp[3:4, 0:H]                      # b_hn1
    ln_g = sp[4:5, 0:H]
    ln_b = sp[5:6, 0:H]
    fc1b = sp[6:7, 0:H2]
    fc2b = sp[6:7, H2:H2 + 1]
    fc2w = sp[7:8, 0:H2]

    # ---- hoisted layer-0 input projection: ONE MXU push for all timesteps --
    x_all = x_ref[...]                                                 # (B, T, D)
    xs = jnp.concatenate([x_all[:, t, :] for t in range(T)], axis=0)   # (T*B, D)
    gx_all = jnp.dot(xs, wi0, preferred_element_type=jnp.float32) + bx0  # (T*B, 3H)

    def sigmoid(v):                          # one EUP op (vs. exp + divide)
        return 0.5 * (jnp.tanh(0.5 * v) + 1.0)

    h0 = jnp.zeros((B, H), jnp.float32)
    h1 = jnp.zeros((B, H), jnp.float32)

    # Sequential recurrence over time (T is small -> static unroll).
    for t in range(T):
        # Layer-1 hidden matmul depends only on h1(t-1): issue it first so it
        # overlaps with the layer-0 cell of the same step.
        gh1 = jnp.dot(h1, wh1, preferred_element_type=jnp.float32)

        # ---- layer-0 cell ---------------------------------------------------
        gh0 = jnp.dot(h0, wh0, preferred_element_type=jnp.float32)
        gx0 = gx_all[t * B:(t + 1) * B, :]                    # precomputed slab
        rz0 = sigmoid(gx0[:, 0:2 * H] + gh0[:, 0:2 * H])
        r0 = rz0[:, 0:H]
        z0 = rz0[:, H:2 * H]
        n0 = jnp.tanh(gx0[:, 2 * H:H3] + r0 * (gh0[:, 2 * H:H3] + bhn0))
        h0 = (1.0 - z0) * n0 + z0 * h0

        # ---- layer-1 cell ---------------------------------------------------
        gi1 = jnp.dot(h0, wi1, preferred_element_type=jnp.float32) + bx1
        rz1 = sigmoid(gi1[:, 0:2 * H] + gh1[:, 0:2 * H])
        r1 = rz1[:, 0:H]
        z1 = rz1[:, H:2 * H]
        n1 = jnp.tanh(gi1[:, 2 * H:H3] + r1 * (gh1[:, 2 * H:H3] + bhn1))
        h1 = (1.0 - z1) * n1 + z1 * h1

    # ---- LayerNorm over hidden dim (eps=1e-5, biased variance) -------------
    mu = jnp.mean(h1, axis=-1, keepdims=True)
    var = jnp.mean((h1 - mu) ** 2, axis=-1, keepdims=True)
    y = (h1 - mu) * jax.lax.rsqrt(var + 1e-5) * ln_g + ln_b

    # ---- head: Linear -> ReLU -> (Dropout = identity) -> Linear ------------
    a = jnp.maximum(
        jnp.dot(y, fc1w, preferred_element_type=jnp.float32) + fc1b, 0.0)
    # fc2 (N=1): VPU multiply + lane reduction instead of a masked MXU push.
    out_ref[...] = jnp.sum(a * fc2w, axis=-1, keepdims=True) + fc2b


# ---------------------------------------------------------------------------
# Wrapper (grid-less: the whole problem is a single VMEM-resident block)
# ---------------------------------------------------------------------------
def gru_with_residual_forward(x, packed):
    B = x.shape[0]
    vmem = pl.BlockSpec(memory_space=pltpu.MemorySpace.VMEM)
    out = pl.pallas_call(
        gru_with_residual_kernel,
        out_shape=jax.ShapeDtypeStruct((B, 1), jnp.float32),
        in_specs=[vmem] * (1 + len(packed)),
        out_specs=vmem,
    )(x, *packed)
    return out[:, 0]                                # squeeze(-1) -> (B,)


# ---------------------------------------------------------------------------
# Parameter init (PyTorch-style uniform ranges)
# ---------------------------------------------------------------------------
def init_params(key, input_dim=6, hidden_dim=32):
    H = hidden_dim
    keys = iter(jax.random.split(key, 64))

    def u(shape, bound):
        return jax.random.uniform(next(keys), shape, jnp.float32, -bound, bound)

    k = 1.0 / np.sqrt(H)
    p = {}
    for layer, in_dim in ((0, input_dim), (1, H)):
        for gate in ("r", "z", "n"):
            p[f"wi_{gate}{layer}"] = u((in_dim, H), k)
            p[f"wh_{gate}{layer}"] = u((H, H), k)
        for name in ("b_ir", "b_hr", "b_iz", "b_hz", "b_in", "b_hn"):
            p[f"{name}{layer}"] = u((1, H), k)

    p["ln_g"] = jnp.ones((1, H), jnp.float32)
    p["ln_b"] = jnp.zeros((1, H), jnp.float32)

    p["fc1_w"] = u((H, H // 2), k)
    p["fc1_b"] = u((1, H // 2), k)
    k2 = 1.0 / np.sqrt(H // 2)
    p["fc2_w"] = u((H // 2, 1), k2)
    p["fc2_b"] = u((1, 1), k2)
    # NOTE: the PyTorch module's input_projection is dead code in forward();
    # its parameters are intentionally not created / not computed.
    return p


# ---------------------------------------------------------------------------
# Host-side parameter packing: runs ONCE at parameter-load time (NumPy),
# never per forward call.
# ---------------------------------------------------------------------------
def pack_params(p, input_dim, hidden_dim):
    H = hidden_dim
    pn = {k: np.asarray(v, np.float32) for k, v in p.items()}

    def gates(prefix, layer):
        return np.concatenate([pn[f"{prefix}_r{layer}"],
                               pn[f"{prefix}_z{layer}"],
                               pn[f"{prefix}_n{layer}"]], axis=1)

    wi0 = gates("wi", 0)                                    # (D, 3H)
    whh = np.concatenate([gates("wh", 0),                   # (3H, 3H)
                          gates("wi", 1),
                          gates("wh", 1)], axis=0)

    small = np.zeros((8, 128), np.float32)
    small[0, :3 * H] = np.concatenate(
        [pn["b_ir0"] + pn["b_hr0"], pn["b_iz0"] + pn["b_hz0"], pn["b_in0"]],
        axis=1)[0]
    small[1, :H] = pn["b_hn0"][0]
    small[2, :3 * H] = np.concatenate(
        [pn["b_ir1"] + pn["b_hr1"], pn["b_iz1"] + pn["b_hz1"], pn["b_in1"]],
        axis=1)[0]
    small[3, :H] = pn["b_hn1"][0]
    small[4, :H] = pn["ln_g"][0]
    small[5, :H] = pn["ln_b"][0]
    small[6, :H // 2] = pn["fc1_b"][0]
    small[6, H // 2] = pn["fc2_b"][0, 0]
    small[7, :H // 2] = pn["fc2_w"][:, 0]

    return tuple(jnp.asarray(a) for a in (wi0, whh, pn["fc1_w"], small))


# ---------------------------------------------------------------------------
# Pure-JAX reference (unpacked weights, same math) for a correctness check
# ---------------------------------------------------------------------------
def reference_forward(x, p):
    B, T, D = x.shape
    H = p["wh_r0"].shape[0]
    h0 = jnp.zeros((B, H), jnp.float32)
    h1 = jnp.zeros((B, H), jnp.float32)

    def cell(x_t, h, layer):
        r = jax.nn.sigmoid(x_t @ p[f"wi_r{layer}"] + p[f"b_ir{layer}"]
                           + h @ p[f"wh_r{layer}"] + p[f"b_hr{layer}"])
        z = jax.nn.sigmoid(x_t @ p[f"wi_z{layer}"] + p[f"b_iz{layer}"]
                           + h @ p[f"wh_z{layer}"] + p[f"b_hz{layer}"])
        n = jnp.tanh(x_t @ p[f"wi_n{layer}"] + p[f"b_in{layer}"]
                     + r * (h @ p[f"wh_n{layer}"] + p[f"b_hn{layer}"]))
        return (1.0 - z) * n + z * h

    for t in range(T):
        x_t = x[:, t, :]
        h0 = cell(x_t, h0, 0)
        h1 = cell(h0, h1, 1)

    mu = jnp.mean(h1, axis=-1, keepdims=True)
    var = jnp.mean((h1 - mu) ** 2, axis=-1, keepdims=True)
    y = (h1 - mu) * jax.lax.rsqrt(var + 1e-5) * p["ln_g"] + p["ln_b"]
    a = jnp.maximum(y @ p["fc1_w"] + p["fc1_b"], 0.0)
    return (a @ p["fc2_w"] + p["fc2_b"])[:, 0]


if __name__ == "__main__":
    B, T, D, H = 2, 8, 6, 32
    key = jax.random.PRNGKey(0)
    k_x, k_p = jax.random.split(key)
    x = jax.random.normal(k_x, (B, T, D), jnp.float32)

    params = init_params(k_p, input_dim=D, hidden_dim=H)
    packed = pack_params(params, input_dim=D, hidden_dim=H)   # host-side, once

    out = jax.block_until_ready(gru_with_residual_forward(x, packed))
    ref = jax.block_until_ready(reference_forward(x, params))

    np.testing.assert_allclose(np.asarray(out), np.asarray(ref),
                               rtol=1e-5, atol=1e-5)
    assert out.shape == (B,)
    print("KERNEL_OK")
</pallas_src>

<mosaic_0001>
module attributes {stable_mosaic.version = 11 : i64} {
  func.func @gru_with_residual_kernel(%arg0: memref<2x8x6xf32, #tpu.memory_space<vmem>>, %arg1: memref<6x96xf32, #tpu.memory_space<vmem>>, %arg2: memref<96x96xf32, #tpu.memory_space<vmem>>, %arg3: memref<32x16xf32, #tpu.memory_space<vmem>>, %arg4: memref<8x128xf32, #tpu.memory_space<vmem>>, %arg5: memref<2x1xf32, #tpu.memory_space<vmem>>) attributes {dimension_semantics = [], scalar_prefetch = 0 : i64, scratch_operands = 0 : i64, tpu.core_type = #tpu.core_type<tc>} {
    %c0 = arith.constant 0 : index
    %c0_0 = arith.constant 0 : index
    %0 = vector.load %arg1[%c0, %c0_0] : memref<6x96xf32, #tpu.memory_space<vmem>>, vector<6x96xf32>
    %c0_1 = arith.constant 0 : index
    %c0_2 = arith.constant 0 : index
    %1 = vector.load %arg2[%c0_1, %c0_2] : memref<96x96xf32, #tpu.memory_space<vmem>>, vector<96x96xf32>
    %2 = vector.extract_strided_slice %1 {offsets = [0, 0], sizes = [32, 96], strides = [1, 1]} : vector<96x96xf32> to vector<32x96xf32>
    %3 = vector.extract_strided_slice %1 {offsets = [32, 0], sizes = [32, 96], strides = [1, 1]} : vector<96x96xf32> to vector<32x96xf32>
    %4 = vector.extract_strided_slice %1 {offsets = [64, 0], sizes = [32, 96], strides = [1, 1]} : vector<96x96xf32> to vector<32x96xf32>
    %c0_3 = arith.constant 0 : index
    %c0_4 = arith.constant 0 : index
    %5 = vector.load %arg3[%c0_3, %c0_4] : memref<32x16xf32, #tpu.memory_space<vmem>>, vector<32x16xf32>
    %c0_5 = arith.constant 0 : index
    %c0_6 = arith.constant 0 : index
    %6 = vector.load %arg4[%c0_5, %c0_6] : memref<8x128xf32, #tpu.memory_space<vmem>>, vector<8x128xf32>
    %7 = vector.extract_strided_slice %6 {offsets = [0, 0], sizes = [1, 96], strides = [1, 1]} : vector<8x128xf32> to vector<1x96xf32>
    %8 = vector.extract_strided_slice %6 {offsets = [1, 0], sizes = [1, 32], strides = [1, 1]} : vector<8x128xf32> to vector<1x32xf32>
    %9 = vector.extract_strided_slice %6 {offsets = [2, 0], sizes = [1, 96], strides = [1, 1]} : vector<8x128xf32> to vector<1x96xf32>
    %10 = vector.extract_strided_slice %6 {offsets = [3, 0], sizes = [1, 32], strides = [1, 1]} : vector<8x128xf32> to vector<1x32xf32>
    %11 = vector.extract_strided_slice %6 {offsets = [4, 0], sizes = [1, 32], strides = [1, 1]} : vector<8x128xf32> to vector<1x32xf32>
    %12 = vector.extract_strided_slice %6 {offsets = [5, 0], sizes = [1, 32], strides = [1, 1]} : vector<8x128xf32> to vector<1x32xf32>
    %13 = vector.extract_strided_slice %6 {offsets = [6, 0], sizes = [1, 16], strides = [1, 1]} : vector<8x128xf32> to vector<1x16xf32>
    %14 = vector.extract_strided_slice %6 {offsets = [6, 16], sizes = [1, 1], strides = [1, 1]} : vector<8x128xf32> to vector<1x1xf32>
    %15 = vector.extract_strided_slice %6 {offsets = [7, 0], sizes = [1, 16], strides = [1, 1]} : vector<8x128xf32> to vector<1x16xf32>
    %c0_7 = arith.constant 0 : index
    %c0_8 = arith.constant 0 : index
    %c0_9 = arith.constant 0 : index
    %16 = vector.load %arg0[%c0_7, %c0_8, %c0_9] : memref<2x8x6xf32, #tpu.memory_space<vmem>>, vector<2x8x6xf32>
    %17 = vector.extract_strided_slice %16 {offsets = [0, 0, 0], sizes = [2, 1, 6], strides = [1, 1, 1]} : vector<2x8x6xf32> to vector<2x1x6xf32>
    %18 = vector.shape_cast %17 : vector<2x1x6xf32> to vector<2x6xf32>
    %19 = vector.extract_strided_slice %16 {offsets = [0, 1, 0], sizes = [2, 1, 6], strides = [1, 1, 1]} : vector<2x8x6xf32> to vector<2x1x6xf32>
    %20 = vector.shape_cast %19 : vector<2x1x6xf32> to vector<2x6xf32>
    %21 = vector.extract_strided_slice %16 {offsets = [0, 2, 0], sizes = [2, 1, 6], strides = [1, 1, 1]} : vector<2x8x6xf32> to vector<2x1x6xf32>
    %22 = vector.shape_cast %21 : vector<2x1x6xf32> to vector<2x6xf32>
    %23 = vector.extract_strided_slice %16 {offsets = [0, 3, 0], sizes = [2, 1, 6], strides = [1, 1, 1]} : vector<2x8x6xf32> to vector<2x1x6xf32>
    %24 = vector.shape_cast %23 : vector<2x1x6xf32> to vector<2x6xf32>
    %25 = vector.extract_strided_slice %16 {offsets = [0, 4, 0], sizes = [2, 1, 6], strides = [1, 1, 1]} : vector<2x8x6xf32> to vector<2x1x6xf32>
    %26 = vector.shape_cast %25 : vector<2x1x6xf32> to vector<2x6xf32>
    %27 = vector.extract_strided_slice %16 {offsets = [0, 5, 0], sizes = [2, 1, 6], strides = [1, 1, 1]} : vector<2x8x6xf32> to vector<2x1x6xf32>
    %28 = vector.shape_cast %27 : vector<2x1x6xf32> to vector<2x6xf32>
    %29 = vector.extract_strided_slice %16 {offsets = [0, 6, 0], sizes = [2, 1, 6], strides = [1, 1, 1]} : vector<2x8x6xf32> to vector<2x1x6xf32>
    %30 = vector.shape_cast %29 : vector<2x1x6xf32> to vector<2x6xf32>
    %31 = vector.extract_strided_slice %16 {offsets = [0, 7, 0], sizes = [2, 1, 6], strides = [1, 1, 1]} : vector<2x8x6xf32> to vector<2x1x6xf32>
    %32 = vector.shape_cast %31 : vector<2x1x6xf32> to vector<2x6xf32>
    %33 = tpu.concatenate %18, %20, %22, %24, %26, %28, %30, %32 in 0 : vector<2x6xf32>, vector<2x6xf32>, vector<2x6xf32>, vector<2x6xf32>, vector<2x6xf32>, vector<2x6xf32>, vector<2x6xf32>, vector<2x6xf32> -> vector<16x6xf32>
    %cst = arith.constant dense<0.000000e+00> : vector<16x96xf32>
    %34 = tpu.matmul %33, %0, %cst {dimension_numbers = #tpu.dot_dimension_numbers<[1], [0], [0], [1], [0, 0, 1, 1], [], []>} : vector<16x6xf32>, vector<6x96xf32>, vector<16x96xf32> -> vector<16x96xf32>
    %35 = vector.broadcast %7 : vector<1x96xf32> to vector<16x96xf32>
    %36 = arith.addf %34, %35 : vector<16x96xf32>
    %cst_10 = arith.constant 0.000000e+00 : f32
    %37 = vector.broadcast %cst_10 : f32 to vector<2x32xf32>
    %cst_11 = arith.constant 0.000000e+00 : f32
    %38 = vector.broadcast %cst_11 : f32 to vector<2x32xf32>
    %cst_12 = arith.constant dense<0.000000e+00> : vector<2x96xf32>
    %39 = tpu.matmul %38, %4, %cst_12 {dimension_numbers = #tpu.dot_dimension_numbers<[1], [0], [0], [1], [0, 0, 1, 1], [], []>} : vector<2x32xf32>, vector<32x96xf32>, vector<2x96xf32> -> vector<2x96xf32>
    %cst_13 = arith.constant dense<0.000000e+00> : vector<2x96xf32>
    %40 = tpu.matmul %37, %2, %cst_13 {dimension_numbers = #tpu.dot_dimension_numbers<[1], [0], [0], [1], [0, 0, 1, 1], [], []>} : vector<2x32xf32>, vector<32x96xf32>, vector<2x96xf32> -> vector<2x96xf32>
    %41 = vector.extract_strided_slice %36 {offsets = [0, 0], sizes = [2, 96], strides = [1, 1]} : vector<16x96xf32> to vector<2x96xf32>
    %42 = vector.extract_strided_slice %41 {offsets = [0, 0], sizes = [2, 64], strides = [1, 1]} : vector<2x96xf32> to vector<2x64xf32>
    %43 = vector.extract_strided_slice %40 {offsets = [0, 0], sizes = [2, 64], strides = [1, 1]} : vector<2x96xf32> to vector<2x64xf32>
    %44 = arith.addf %42, %43 : vector<2x64xf32>
    %cst_14 = arith.constant 5.000000e-01 : f32
    %45 = vector.broadcast %cst_14 : f32 to vector<2x64xf32>
    %46 = arith.mulf %45, %44 : vector<2x64xf32>
    %47 = math.tanh %46 : vector<2x64xf32>
    %cst_15 = arith.constant 1.000000e+00 : f32
    %48 = vector.broadcast %cst_15 : f32 to vector<2x64xf32>
    %49 = arith.addf %47, %48 : vector<2x64xf32>
    %cst_16 = arith.constant 5.000000e-01 : f32
    %50 = vector.broadcast %cst_16 : f32 to vector<2x64xf32>
    %51 = arith.mulf %50, %49 : vector<2x64xf32>
    %52 = vector.extract_strided_slice %51 {offsets = [0, 0], sizes = [2, 32], strides = [1, 1]} : vector<2x64xf32> to vector<2x32xf32>
    %53 = vector.extract_strided_slice %51 {offsets = [0, 32], sizes = [2, 32], strides = [1, 1]} : vector<2x64xf32> to vector<2x32xf32>
    %54 = vector.extract_strided_slice %41 {offsets = [0, 64], sizes = [2, 32], strides = [1, 1]} : vector<2x96xf32> to vector<2x32xf32>
    %55 = vector.extract_strided_slice %40 {offsets = [0, 64], sizes = [2, 32], strides = [1, 1]} : vector<2x96xf32> to vector<2x32xf32>
    %56 = vector.broadcast %8 : vector<1x32xf32> to vector<2x32xf32>
    %57 = arith.addf %55, %56 : vector<2x32xf32>
    %58 = arith.mulf %52, %57 : vector<2x32xf32>
    %59 = arith.addf %54, %58 : vector<2x32xf32>
    %60 = math.tanh %59 : vector<2x32xf32>
    %cst_17 = arith.constant 1.000000e+00 : f32
    %61 = vector.broadcast %cst_17 : f32 to vector<2x32xf32>
    %62 = arith.subf %61, %53 : vector<2x32xf32>
    %63 = arith.mulf %62, %60 : vector<2x32xf32>
    %64 = arith.mulf %53, %37 : vector<2x32xf32>
    %65 = arith.addf %63, %64 : vector<2x32xf32>
    %cst_18 = arith.constant dense<0.000000e+00> : vector<2x96xf32>
    %66 = tpu.matmul %65, %3, %cst_18 {dimension_numbers = #tpu.dot_dimension_numbers<[1], [0], [0], [1], [0, 0, 1, 1], [], []>} : vector<2x32xf32>, vector<32x96xf32>, vector<2x96xf32> -> vector<2x96xf32>
    %67 = vector.broadcast %9 : vector<1x96xf32> to vector<2x96xf32>
    %68 = arith.addf %66, %67 : vector<2x96xf32>
    %69 = vector.extract_strided_slice %68 {offsets = [0, 0], sizes = [2, 64], strides = [1, 1]} : vector<2x96xf32> to vector<2x64xf32>
    %70 = vector.extract_strided_slice %39 {offsets = [0, 0], sizes = [2, 64], strides = [1, 1]} : vector<2x96xf32> to vector<2x64xf32>
    %71 = arith.addf %69, %70 : vector<2x64xf32>
    %cst_19 = arith.constant 5.000000e-01 : f32
    %72 = vector.broadcast %cst_19 : f32 to vector<2x64xf32>
    %73 = arith.mulf %72, %71 : vector<2x64xf32>
    %74 = math.tanh %73 : vector<2x64xf32>
    %cst_20 = arith.constant 1.000000e+00 : f32
    %75 = vector.broadcast %cst_20 : f32 to vector<2x64xf32>
    %76 = arith.addf %74, %75 : vector<2x64xf32>
    %cst_21 = arith.constant 5.000000e-01 : f32
    %77 = vector.broadcast %cst_21 : f32 to vector<2x64xf32>
    %78 = arith.mulf %77, %76 : vector<2x64xf32>
    %79 = vector.extract_strided_slice %78 {offsets = [0, 0], sizes = [2, 32], strides = [1, 1]} : vector<2x64xf32> to vector<2x32xf32>
    %80 = vector.extract_strided_slice %78 {offsets = [0, 32], sizes = [2, 32], strides = [1, 1]} : vector<2x64xf32> to vector<2x32xf32>
    %81 = vector.extract_strided_slice %68 {offsets = [0, 64], sizes = [2, 32], strides = [1, 1]} : vector<2x96xf32> to vector<2x32xf32>
    %82 = vector.extract_strided_slice %39 {offsets = [0, 64], sizes = [2, 32], strides = [1, 1]} : vector<2x96xf32> to vector<2x32xf32>
    %83 = vector.broadcast %10 : vector<1x32xf32> to vector<2x32xf32>
    %84 = arith.addf %82, %83 : vector<2x32xf32>
    %85 = arith.mulf %79, %84 : vector<2x32xf32>
    %86 = arith.addf %81, %85 : vector<2x32xf32>
    %87 = math.tanh %86 : vector<2x32xf32>
    %cst_22 = arith.constant 1.000000e+00 : f32
    %88 = vector.broadcast %cst_22 : f32 to vector<2x32xf32>
    %89 = arith.subf %88, %80 : vector<2x32xf32>
    %90 = arith.mulf %89, %87 : vector<2x32xf32>
    %91 = arith.mulf %80, %38 : vector<2x32xf32>
    %92 = arith.addf %90, %91 : vector<2x32xf32>
    %cst_23 = arith.constant dense<0.000000e+00> : vector<2x96xf32>
    %93 = tpu.matmul %92, %4, %cst_23 {dimension_numbers = #tpu.dot_dimension_numbers<[1], [0], [0], [1], [0, 0, 1, 1], [], []>} : vector<2x32xf32>, vector<32x96xf32>, vector<2x96xf32> -> vector<2x96xf32>
    %cst_24 = arith.constant dense<0.000000e+00> : vector<2x96xf32>
    %94 = tpu.matmul %65, %2, %cst_24 {dimension_numbers = #tpu.dot_dimension_numbers<[1], [0], [0], [1], [0, 0, 1, 1], [], []>} : vector<2x32xf32>, vector<32x96xf32>, vector<2x96xf32> -> vector<2x96xf32>
    %95 = vector.extract_strided_slice %36 {offsets = [2, 0], sizes = [2, 96], strides = [1, 1]} : vector<16x96xf32> to vector<2x96xf32>
    %96 = vector.extract_strided_slice %95 {offsets = [0, 0], sizes = [2, 64], strides = [1, 1]} : vector<2x96xf32> to vector<2x64xf32>
    %97 = vector.extract_strided_slice %94 {offsets = [0, 0], sizes = [2, 64], strides = [1, 1]} : vector<2x96xf32> to vector<2x64xf32>
    %98 = arith.addf %96, %97 : vector<2x64xf32>
    %cst_25 = arith.constant 5.000000e-01 : f32
    %99 = vector.broadcast %cst_25 : f32 to vector<2x64xf32>
    %100 = arith.mulf %99, %98 : vector<2x64xf32>
    %101 = math.tanh %100 : vector<2x64xf32>
    %cst_26 = arith.constant 1.000000e+00 : f32
    %102 = vector.broadcast %cst_26 : f32 to vector<2x64xf32>
    %103 = arith.addf %101, %102 : vector<2x64xf32>
    %cst_27 = arith.constant 5.000000e-01 : f32
    %104 = vector.broadcast %cst_27 : f32 to vector<2x64xf32>
    %105 = arith.mulf %104, %103 : vector<2x64xf32>
    %106 = vector.extract_strided_slice %105 {offsets = [0, 0], sizes = [2, 32], strides = [1, 1]} : vector<2x64xf32> to vector<2x32xf32>
    %107 = vector.extract_strided_slice %105 {offsets = [0, 32], sizes = [2, 32], strides = [1, 1]} : vector<2x64xf32> to vector<2x32xf32>
    %108 = vector.extract_strided_slice %95 {offsets = [0, 64], sizes = [2, 32], strides = [1, 1]} : vector<2x96xf32> to vector<2x32xf32>
    %109 = vector.extract_strided_slice %94 {offsets = [0, 64], sizes = [2, 32], strides = [1, 1]} : vector<2x96xf32> to vector<2x32xf32>
    %110 = vector.broadcast %8 : vector<1x32xf32> to vector<2x32xf32>
    %111 = arith.addf %109, %110 : vector<2x32xf32>
    %112 = arith.mulf %106, %111 : vector<2x32xf32>
    %113 = arith.addf %108, %112 : vector<2x32xf32>
    %114 = math.tanh %113 : vector<2x32xf32>
    %cst_28 = arith.constant 1.000000e+00 : f32
    %115 = vector.broadcast %cst_28 : f32 to vector<2x32xf32>
    %116 = arith.subf %115, %107 : vector<2x32xf32>
    %117 = arith.mulf %116, %114 : vector<2x32xf32>
    %118 = arith.mulf %107, %65 : vector<2x32xf32>
    %119 = arith.addf %117, %118 : vector<2x32xf32>
    %cst_29 = arith.constant dense<0.000000e+00> : vector<2x96xf32>
    %120 = tpu.matmul %119, %3, %cst_29 {dimension_numbers = #tpu.dot_dimension_numbers<[1], [0], [0], [1], [0, 0, 1, 1], [], []>} : vector<2x32xf32>, vector<32x96xf32>, vector<2x96xf32> -> vector<2x96xf32>
    %121 = vector.broadcast %9 : vector<1x96xf32> to vector<2x96xf32>
    %122 = arith.addf %120, %121 : vector<2x96xf32>
    %123 = vector.extract_strided_slice %122 {offsets = [0, 0], sizes = [2, 64], strides = [1, 1]} : vector<2x96xf32> to vector<2x64xf32>
    %124 = vector.extract_strided_slice %93 {offsets = [0, 0], sizes = [2, 64], strides = [1, 1]} : vector<2x96xf32> to vector<2x64xf32>
    %125 = arith.addf %123, %124 : vector<2x64xf32>
    %cst_30 = arith.constant 5.000000e-01 : f32
    %126 = vector.broadcast %cst_30 : f32 to vector<2x64xf32>
    %127 = arith.mulf %126, %125 : vector<2x64xf32>
    %128 = math.tanh %127 : vector<2x64xf32>
    %cst_31 = arith.constant 1.000000e+00 : f32
    %129 = vector.broadcast %cst_31 : f32 to vector<2x64xf32>
    %130 = arith.addf %128, %129 : vector<2x64xf32>
    %cst_32 = arith.constant 5.000000e-01 : f32
    %131 = vector.broadcast %cst_32 : f32 to vector<2x64xf32>
    %132 = arith.mulf %131, %130 : vector<2x64xf32>
    %133 = vector.extract_strided_slice %132 {offsets = [0, 0], sizes = [2, 32], strides = [1, 1]} : vector<2x64xf32> to vector<2x32xf32>
    %134 = vector.extract_strided_slice %132 {offsets = [0, 32], sizes = [2, 32], strides = [1, 1]} : vector<2x64xf32> to vector<2x32xf32>
    %135 = vector.extract_strided_slice %122 {offsets = [0, 64], sizes = [2, 32], strides = [1, 1]} : vector<2x96xf32> to vector<2x32xf32>
    %136 = vector.extract_strided_slice %93 {offsets = [0, 64], sizes = [2, 32], strides = [1, 1]} : vector<2x96xf32> to vector<2x32xf32>
    %137 = vector.broadcast %10 : vector<1x32xf32> to vector<2x32xf32>
    %138 = arith.addf %136, %137 : vector<2x32xf32>
    %139 = arith.mulf %133, %138 : vector<2x32xf32>
    %140 = arith.addf %135, %139 : vector<2x32xf32>
    %141 = math.tanh %140 : vector<2x32xf32>
    %cst_33 = arith.constant 1.000000e+00 : f32
    %142 = vector.broadcast %cst_33 : f32 to vector<2x32xf32>
    %143 = arith.subf %142, %134 : vector<2x32xf32>
    %144 = arith.mulf %143, %141 : vector<2x32xf32>
    %145 = arith.mulf %134, %92 : vector<2x32xf32>
    %146 = arith.addf %144, %145 : vector<2x32xf32>
    %cst_34 = arith.constant dense<0.000000e+00> : vector<2x96xf32>
    %147 = tpu.matmul %146, %4, %cst_34 {dimension_numbers = #tpu.dot_dimension_numbers<[1], [0], [0], [1], [0, 0, 1, 1], [], []>} : vector<2x32xf32>, vector<32x96xf32>, vector<2x96xf32> -> vector<2x96xf32>
    %cst_35 = arith.constant dense<0.000000e+00> : vector<2x96xf32>
    %148 = tpu.matmul %119, %2, %cst_35 {dimension_numbers = #tpu.dot_dimension_numbers<[1], [0], [0], [1], [0, 0, 1, 1], [], []>} : vector<2x32xf32>, vector<32x96xf32>, vector<2x96xf32> -> vector<2x96xf32>
    %149 = vector.extract_strided_slice %36 {offsets = [4, 0], sizes = [2, 96], strides = [1, 1]} : vector<16x96xf32> to vector<2x96xf32>
    %150 = vector.extract_strided_slice %149 {offsets = [0, 0], sizes = [2, 64], strides = [1, 1]} : vector<2x96xf32> to vector<2x64xf32>
    %151 = vector.extract_strided_slice %148 {offsets = [0, 0], sizes = [2, 64], strides = [1, 1]} : vector<2x96xf32> to vector<2x64xf32>
    %152 = arith.addf %150, %151 : vector<2x64xf32>
    %cst_36 = arith.constant 5.000000e-01 : f32
    %153 = vector.broadcast %cst_36 : f32 to vector<2x64xf32>
    %154 = arith.mulf %153, %152 : vector<2x64xf32>
    %155 = math.tanh %154 : vector<2x64xf32>
    %cst_37 = arith.constant 1.000000e+00 : f32
    %156 = vector.broadcast %cst_37 : f32 to vector<2x64xf32>
    %157 = arith.addf %155, %156 : vector<2x64xf32>
    %cst_38 = arith.constant 5.000000e-01 : f32
    %158 = vector.broadcast %cst_38 : f32 to vector<2x64xf32>
    %159 = arith.mulf %158, %157 : vector<2x64xf32>
    %160 = vector.extract_strided_slice %159 {offsets = [0, 0], sizes = [2, 32], strides = [1, 1]} : vector<2x64xf32> to vector<2x32xf32>
    %161 = vector.extract_strided_slice %159 {offsets = [0, 32], sizes = [2, 32], strides = [1, 1]} : vector<2x64xf32> to vector<2x32xf32>
    %162 = vector.extract_strided_slice %149 {offsets = [0, 64], sizes = [2, 32], strides = [1, 1]} : vector<2x96xf32> to vector<2x32xf32>
    %163 = vector.extract_strided_slice %148 {offsets = [0, 64], sizes = [2, 32], strides = [1, 1]} : vector<2x96xf32> to vector<2x32xf32>
    %164 = vector.broadcast %8 : vector<1x32xf32> to vector<2x32xf32>
    %165 = arith.addf %163, %164 : vector<2x32xf32>
    %166 = arith.mulf %160, %165 : vector<2x32xf32>
    %167 = arith.addf %162, %166 : vector<2x32xf32>
    %168 = math.tanh %167 : vector<2x32xf32>
    %cst_39 = arith.constant 1.000000e+00 : f32
    %169 = vector.broadcast %cst_39 : f32 to vector<2x32xf32>
    %170 = arith.subf %169, %161 : vector<2x32xf32>
    %171 = arith.mulf %170, %168 : vector<2x32xf32>
    %172 = arith.mulf %161, %119 : vector<2x32xf32>
    %173 = arith.addf %171, %172 : vector<2x32xf32>
    %cst_40 = arith.constant dense<0.000000e+00> : vector<2x96xf32>
    %174 = tpu.matmul %173, %3, %cst_40 {dimension_numbers = #tpu.dot_dimension_numbers<[1], [0], [0], [1], [0, 0, 1, 1], [], []>} : vector<2x32xf32>, vector<32x96xf32>, vector<2x96xf32> -> vector<2x96xf32>
    %175 = vector.broadcast %9 : vector<1x96xf32> to vector<2x96xf32>
    %176 = arith.addf %174, %175 : vector<2x96xf32>
    %177 = vector.extract_strided_slice %176 {offsets = [0, 0], sizes = [2, 64], strides = [1, 1]} : vector<2x96xf32> to vector<2x64xf32>
    %178 = vector.extract_strided_slice %147 {offsets = [0, 0], sizes = [2, 64], strides = [1, 1]} : vector<2x96xf32> to vector<2x64xf32>
    %179 = arith.addf %177, %178 : vector<2x64xf32>
    %cst_41 = arith.constant 5.000000e-01 : f32
    %180 = vector.broadcast %cst_41 : f32 to vector<2x64xf32>
    %181 = arith.mulf %180, %179 : vector<2x64xf32>
    %182 = math.tanh %181 : vector<2x64xf32>
    %cst_42 = arith.constant 1.000000e+00 : f32
    %183 = vector.broadcast %cst_42 : f32 to vector<2x64xf32>
    %184 = arith.addf %182, %183 : vector<2x64xf32>
    %cst_43 = arith.constant 5.000000e-01 : f32
    %185 = vector.broadcast %cst_43 : f32 to vector<2x64xf32>
    %186 = arith.mulf %185, %184 : vector<2x64xf32>
    %187 = vector.extract_strided_slice %186 {offsets = [0, 0], sizes = [2, 32], strides = [1, 1]} : vector<2x64xf32> to vector<2x32xf32>
    %188 = vector.extract_strided_slice %186 {offsets = [0, 32], sizes = [2, 32], strides = [1, 1]} : vector<2x64xf32> to vector<2x32xf32>
    %189 = vector.extract_strided_slice %176 {offsets = [0, 64], sizes = [2, 32], strides = [1, 1]} : vector<2x96xf32> to vector<2x32xf32>
    %190 = vector.extract_strided_slice %147 {offsets = [0, 64], sizes = [2, 32], strides = [1, 1]} : vector<2x96xf32> to vector<2x32xf32>
    %191 = vector.broadcast %10 : vector<1x32xf32> to vector<2x32xf32>
    %192 = arith.addf %190, %191 : vector<2x32xf32>
    %193 = arith.mulf %187, %192 : vector<2x32xf32>
    %194 = arith.addf %189, %193 : vector<2x32xf32>
    %195 = math.tanh %194 : vector<2x32xf32>
    %cst_44 = arith.constant 1.000000e+00 : f32
    %196 = vector.broadcast %cst_44 : f32 to vector<2x32xf32>
    %197 = arith.subf %196, %188 : vector<2x32xf32>
    %198 = arith.mulf %197, %195 : vector<2x32xf32>
    %199 = arith.mulf %188, %146 : vector<2x32xf32>
    %200 = arith.addf %198, %199 : vector<2x32xf32>
    %cst_45 = arith.constant dense<0.000000e+00> : vector<2x96xf32>
    %201 = tpu.matmul %200, %4, %cst_45 {dimension_numbers = #tpu.dot_dimension_numbers<[1], [0], [0], [1], [0, 0, 1, 1], [], []>} : vector<2x32xf32>, vector<32x96xf32>, vector<2x96xf32> -> vector<2x96xf32>
    %cst_46 = arith.constant dense<0.000000e+00> : vector<2x96xf32>
    %202 = tpu.matmul %173, %2, %cst_46 {dimension_numbers = #tpu.dot_dimension_numbers<[1], [0], [0], [1], [0, 0, 1, 1], [], []>} : vector<2x32xf32>, vector<32x96xf32>, vector<2x96xf32> -> vector<2x96xf32>
    %203 = vector.extract_strided_slice %36 {offsets = [6, 0], sizes = [2, 96], strides = [1, 1]} : vector<16x96xf32> to vector<2x96xf32>
    %204 = vector.extract_strided_slice %203 {offsets = [0, 0], sizes = [2, 64], strides = [1, 1]} : vector<2x96xf32> to vector<2x64xf32>
    %205 = vector.extract_strided_slice %202 {offsets = [0, 0], sizes = [2, 64], strides = [1, 1]} : vector<2x96xf32> to vector<2x64xf32>
    %206 = arith.addf %204, %205 : vector<2x64xf32>
    %cst_47 = arith.constant 5.000000e-01 : f32
    %207 = vector.broadcast %cst_47 : f32 to vector<2x64xf32>
    %208 = arith.mulf %207, %206 : vector<2x64xf32>
    %209 = math.tanh %208 : vector<2x64xf32>
    %cst_48 = arith.constant 1.000000e+00 : f32
    %210 = vector.broadcast %cst_48 : f32 to vector<2x64xf32>
    %211 = arith.addf %209, %210 : vector<2x64xf32>
    %cst_49 = arith.constant 5.000000e-01 : f32
    %212 = vector.broadcast %cst_49 : f32 to vector<2x64xf32>
    %213 = arith.mulf %212, %211 : vector<2x64xf32>
    %214 = vector.extract_strided_slice %213 {offsets = [0, 0], sizes = [2, 32], strides = [1, 1]} : vector<2x64xf32> to vector<2x32xf32>
    %215 = vector.extract_strided_slice %213 {offsets = [0, 32], sizes = [2, 32], strides = [1, 1]} : vector<2x64xf32> to vector<2x32xf32>
    %216 = vector.extract_strided_slice %203 {offsets = [0, 64], sizes = [2, 32], strides = [1, 1]} : vector<2x96xf32> to vector<2x32xf32>
    %217 = vector.extract_strided_slice %202 {offsets = [0, 64], sizes = [2, 32], strides = [1, 1]} : vector<2x96xf32> to vector<2x32xf32>
    %218 = vector.broadcast %8 : vector<1x32xf32> to vector<2x32xf32>
    %219 = arith.addf %217, %218 : vector<2x32xf32>
    %220 = arith.mulf %214, %219 : vector<2x32xf32>
    %221 = arith.addf %216, %220 : vector<2x32xf32>
    %222 = math.tanh %221 : vector<2x32xf32>
    %cst_50 = arith.constant 1.000000e+00 : f32
    %223 = vector.broadcast %cst_50 : f32 to vector<2x32xf32>
    %224 = arith.subf %223, %215 : vector<2x32xf32>
    %225 = arith.mulf %224, %222 : vector<2x32xf32>
    %226 = arith.mulf %215, %173 : vector<2x32xf32>
    %227 = arith.addf %225, %226 : vector<2x32xf32>
    %cst_51 = arith.constant dense<0.000000e+00> : vector<2x96xf32>
    %228 = tpu.matmul %227, %3, %cst_51 {dimension_numbers = #tpu.dot_dimension_numbers<[1], [0], [0], [1], [0, 0, 1, 1], [], []>} : vector<2x32xf32>, vector<32x96xf32>, vector<2x96xf32> -> vector<2x96xf32>
    %229 = vector.broadcast %9 : vector<1x96xf32> to vector<2x96xf32>
    %230 = arith.addf %228, %229 : vector<2x96xf32>
    %231 = vector.extract_strided_slice %230 {offsets = [0, 0], sizes = [2, 64], strides = [1, 1]} : vector<2x96xf32> to vector<2x64xf32>
    %232 = vector.extract_strided_slice %201 {offsets = [0, 0], sizes = [2, 64], strides = [1, 1]} : vector<2x96xf32> to vector<2x64xf32>
    %233 = arith.addf %231, %232 : vector<2x64xf32>
    %cst_52 = arith.constant 5.000000e-01 : f32
    %234 = vector.broadcast %cst_52 : f32 to vector<2x64xf32>
    %235 = arith.mulf %234, %233 : vector<2x64xf32>
    %236 = math.tanh %235 : vector<2x64xf32>
    %cst_53 = arith.constant 1.000000e+00 : f32
    %237 = vector.broadcast %cst_53 : f32 to vector<2x64xf32>
    %238 = arith.addf %236, %237 : vector<2x64xf32>
    %cst_54 = arith.constant 5.000000e-01 : f32
    %239 = vector.broadcast %cst_54 : f32 to vector<2x64xf32>
    %240 = arith.mulf %239, %238 : vector<2x64xf32>
    %241 = vector.extract_strided_slice %240 {offsets = [0, 0], sizes = [2, 32], strides = [1, 1]} : vector<2x64xf32> to vector<2x32xf32>
    %242 = vector.extract_strided_slice %240 {offsets = [0, 32], sizes = [2, 32], strides = [1, 1]} : vector<2x64xf32> to vector<2x32xf32>
    %243 = vector.extract_strided_slice %230 {offsets = [0, 64], sizes = [2, 32], strides = [1, 1]} : vector<2x96xf32> to vector<2x32xf32>
    %244 = vector.extract_strided_slice %201 {offsets = [0, 64], sizes = [2, 32], strides = [1, 1]} : vector<2x96xf32> to vector<2x32xf32>
    %245 = vector.broadcast %10 : vector<1x32xf32> to vector<2x32xf32>
    %246 = arith.addf %244, %245 : vector<2x32xf32>
    %247 = arith.mulf %241, %246 : vector<2x32xf32>
    %248 = arith.addf %243, %247 : vector<2x32xf32>
    %249 = math.tanh %248 : vector<2x32xf32>
    %cst_55 = arith.constant 1.000000e+00 : f32
    %250 = vector.broadcast %cst_55 : f32 to vector<2x32xf32>
    %251 = arith.subf %250, %242 : vector<2x32xf32>
    %252 = arith.mulf %251, %249 : vector<2x32xf32>
    %253 = arith.mulf %242, %200 : vector<2x32xf32>
    %254 = arith.addf %252, %253 : vector<2x32xf32>
    %cst_56 = arith.constant dense<0.000000e+00> : vector<2x96xf32>
    %255 = tpu.matmul %254, %4, %cst_56 {dimension_numbers = #tpu.dot_dimension_numbers<[1], [0], [0], [1], [0, 0, 1, 1], [], []>} : vector<2x32xf32>, vector<32x96xf32>, vector<2x96xf32> -> vector<2x96xf32>
    %cst_57 = arith.constant dense<0.000000e+00> : vector<2x96xf32>
    %256 = tpu.matmul %227, %2, %cst_57 {dimension_numbers = #tpu.dot_dimension_numbers<[1], [0], [0], [1], [0, 0, 1, 1], [], []>} : vector<2x32xf32>, vector<32x96xf32>, vector<2x96xf32> -> vector<2x96xf32>
    %257 = vector.extract_strided_slice %36 {offsets = [8, 0], sizes = [2, 96], strides = [1, 1]} : vector<16x96xf32> to vector<2x96xf32>
    %258 = vector.extract_strided_slice %257 {offsets = [0, 0], sizes = [2, 64], strides = [1, 1]} : vector<2x96xf32> to vector<2x64xf32>
    %259 = vector.extract_strided_slice %256 {offsets = [0, 0], sizes = [2, 64], strides = [1, 1]} : vector<2x96xf32> to vector<2x64xf32>
    %260 = arith.addf %258, %259 : vector<2x64xf32>
    %cst_58 = arith.constant 5.000000e-01 : f32
    %261 = vector.broadcast %cst_58 : f32 to vector<2x64xf32>
    %262 = arith.mulf %261, %260 : vector<2x64xf32>
    %263 = math.tanh %262 : vector<2x64xf32>
    %cst_59 = arith.constant 1.000000e+00 : f32
    %264 = vector.broadcast %cst_59 : f32 to vector<2x64xf32>
    %265 = arith.addf %263, %264 : vector<2x64xf32>
    %cst_60 = arith.constant 5.000000e-01 : f32
    %266 = vector.broadcast %cst_60 : f32 to vector<2x64xf32>
    %267 = arith.mulf %266, %265 : vector<2x64xf32>
    %268 = vector.extract_strided_slice %267 {offsets = [0, 0], sizes = [2, 32], strides = [1, 1]} : vector<2x64xf32> to vector<2x32xf32>
    %269 = vector.extract_strided_slice %267 {offsets = [0, 32], sizes = [2, 32], strides = [1, 1]} : vector<2x64xf32> to vector<2x32xf32>
    %270 = vector.extract_strided_slice %257 {offsets = [0, 64], sizes = [2, 32], strides = [1, 1]} : vector<2x96xf32> to vector<2x32xf32>
    %271 = vector.extract_strided_slice %256 {offsets = [0, 64], sizes = [2, 32], strides = [1, 1]} : vector<2x96xf32> to vector<2x32xf32>
    %272 = vector.broadcast %8 : vector<1x32xf32> to vector<2x32xf32>
    %273 = arith.addf %271, %272 : vector<2x32xf32>
    %274 = arith.mulf %268, %273 : vector<2x32xf32>
    %275 = arith.addf %270, %274 : vector<2x32xf32>
    %276 = math.tanh %275 : vector<2x32xf32>
    %cst_61 = arith.constant 1.000000e+00 : f32
    %277 = vector.broadcast %cst_61 : f32 to vector<2x32xf32>
    %278 = arith.subf %277, %269 : vector<2x32xf32>
    %279 = arith.mulf %278, %276 : vector<2x32xf32>
    %280 = arith.mulf %269, %227 : vector<2x32xf32>
    %281 = arith.addf %279, %280 : vector<2x32xf32>
    %cst_62 = arith.constant dense<0.000000e+00> : vector<2x96xf32>
    %282 = tpu.matmul %281, %3, %cst_62 {dimension_numbers = #tpu.dot_dimension_numbers<[1], [0], [0], [1], [0, 0, 1, 1], [], []>} : vector<2x32xf32>, vector<32x96xf32>, vector<2x96xf32> -> vector<2x96xf32>
    %283 = vector.broadcast %9 : vector<1x96xf32> to vector<2x96xf32>
    %284 = arith.addf %282, %283 : vector<2x96xf32>
    %285 = vector.extract_strided_slice %284 {offsets = [0, 0], sizes = [2, 64], strides = [1, 1]} : vector<2x96xf32> to vector<2x64xf32>
    %286 = vector.extract_strided_slice %255 {offsets = [0, 0], sizes = [2, 64], strides = [1, 1]} : vector<2x96xf32> to vector<2x64xf32>
    %287 = arith.addf %285, %286 : vector<2x64xf32>
    %cst_63 = arith.constant 5.000000e-01 : f32
    %288 = vector.broadcast %cst_63 : f32 to vector<2x64xf32>
    %289 = arith.mulf %288, %287 : vector<2x64xf32>
    %290 = math.tanh %289 : vector<2x64xf32>
    %cst_64 = arith.constant 1.000000e+00 : f32
    %291 = vector.broadcast %cst_64 : f32 to vector<2x64xf32>
    %292 = arith.addf %290, %291 : vector<2x64xf32>
    %cst_65 = arith.constant 5.000000e-01 : f32
    %293 = vector.broadcast %cst_65 : f32 to vector<2x64xf32>
    %294 = arith.mulf %293, %292 : vector<2x64xf32>
    %295 = vector.extract_strided_slice %294 {offsets = [0, 0], sizes = [2, 32], strides = [1, 1]} : vector<2x64xf32> to vector<2x32xf32>
    %296 = vector.extract_strided_slice %294 {offsets = [0, 32], sizes = [2, 32], strides = [1, 1]} : vector<2x64xf32> to vector<2x32xf32>
    %297 = vector.extract_strided_slice %284 {offsets = [0, 64], sizes = [2, 32], strides = [1, 1]} : vector<2x96xf32> to vector<2x32xf32>
    %298 = vector.extract_strided_slice %255 {offsets = [0, 64], sizes = [2, 32], strides = [1, 1]} : vector<2x96xf32> to vector<2x32xf32>
    %299 = vector.broadcast %10 : vector<1x32xf32> to vector<2x32xf32>
    %300 = arith.addf %298, %299 : vector<2x32xf32>
    %301 = arith.mulf %295, %300 : vector<2x32xf32>
    %302 = arith.addf %297, %301 : vector<2x32xf32>
    %303 = math.tanh %302 : vector<2x32xf32>
    %cst_66 = arith.constant 1.000000e+00 : f32
    %304 = vector.broadcast %cst_66 : f32 to vector<2x32xf32>
    %305 = arith.subf %304, %296 : vector<2x32xf32>
    %306 = arith.mulf %305, %303 : vector<2x32xf32>
    %307 = arith.mulf %296, %254 : vector<2x32xf32>
    %308 = arith.addf %306, %307 : vector<2x32xf32>
    %cst_67 = arith.constant dense<0.000000e+00> : vector<2x96xf32>
    %309 = tpu.matmul %308, %4, %cst_67 {dimension_numbers = #tpu.dot_dimension_numbers<[1], [0], [0], [1], [0, 0, 1, 1], [], []>} : vector<2x32xf32>, vector<32x96xf32>, vector<2x96xf32> -> vector<2x96xf32>
    %cst_68 = arith.constant dense<0.000000e+00> : vector<2x96xf32>
    %310 = tpu.matmul %281, %2, %cst_68 {dimension_numbers = #tpu.dot_dimension_numbers<[1], [0], [0], [1], [0, 0, 1, 1], [], []>} : vector<2x32xf32>, vector<32x96xf32>, vector<2x96xf32> -> vector<2x96xf32>
    %311 = vector.extract_strided_slice %36 {offsets = [10, 0], sizes = [2, 96], strides = [1, 1]} : vector<16x96xf32> to vector<2x96xf32>
    %312 = vector.extract_strided_slice %311 {offsets = [0, 0], sizes = [2, 64], strides = [1, 1]} : vector<2x96xf32> to vector<2x64xf32>
    %313 = vector.extract_strided_slice %310 {offsets = [0, 0], sizes = [2, 64], strides = [1, 1]} : vector<2x96xf32> to vector<2x64xf32>
    %314 = arith.addf %312, %313 : vector<2x64xf32>
    %cst_69 = arith.constant 5.000000e-01 : f32
    %315 = vector.broadcast %cst_69 : f32 to vector<2x64xf32>
    %316 = arith.mulf %315, %314 : vector<2x64xf32>
    %317 = math.tanh %316 : vector<2x64xf32>
    %cst_70 = arith.constant 1.000000e+00 : f32
    %318 = vector.broadcast %cst_70 : f32 to vector<2x64xf32>
    %319 = arith.addf %317, %318 : vector<2x64xf32>
    %cst_71 = arith.constant 5.000000e-01 : f32
    %320 = vector.broadcast %cst_71 : f32 to vector<2x64xf32>
    %321 = arith.mulf %320, %319 : vector<2x64xf32>
    %322 = vector.extract_strided_slice %321 {offsets = [0, 0], sizes = [2, 32], strides = [1, 1]} : vector<2x64xf32> to vector<2x32xf32>
    %323 = vector.extract_strided_slice %321 {offsets = [0, 32], sizes = [2, 32], strides = [1, 1]} : vector<2x64xf32> to vector<2x32xf32>
    %324 = vector.extract_strided_slice %311 {offsets = [0, 64], sizes = [2, 32], strides = [1, 1]} : vector<2x96xf32> to vector<2x32xf32>
    %325 = vector.extract_strided_slice %310 {offsets = [0, 64], sizes = [2, 32], strides = [1, 1]} : vector<2x96xf32> to vector<2x32xf32>
    %326 = vector.broadcast %8 : vector<1x32xf32> to vector<2x32xf32>
    %327 = arith.addf %325, %326 : vector<2x32xf32>
    %328 = arith.mulf %322, %327 : vector<2x32xf32>
    %329 = arith.addf %324, %328 : vector<2x32xf32>
    %330 = math.tanh %329 : vector<2x32xf32>
    %cst_72 = arith.constant 1.000000e+00 : f32
    %331 = vector.broadcast %cst_72 : f32 to vector<2x32xf32>
    %332 = arith.subf %331, %323 : vector<2x32xf32>
    %333 = arith.mulf %332, %330 : vector<2x32xf32>
    %334 = arith.mulf %323, %281 : vector<2x32xf32>
    %335 = arith.addf %333, %334 : vector<2x32xf32>
    %cst_73 = arith.constant dense<0.000000e+00> : vector<2x96xf32>
    %336 = tpu.matmul %335, %3, %cst_73 {dimension_numbers = #tpu.dot_dimension_numbers<[1], [0], [0], [1], [0, 0, 1, 1], [], []>} : vector<2x32xf32>, vector<32x96xf32>, vector<2x96xf32> -> vector<2x96xf32>
    %337 = vector.broadcast %9 : vector<1x96xf32> to vector<2x96xf32>
    %338 = arith.addf %336, %337 : vector<2x96xf32>
    %339 = vector.extract_strided_slice %338 {offsets = [0, 0], sizes = [2, 64], strides = [1, 1]} : vector<2x96xf32> to vector<2x64xf32>
    %340 = vector.extract_strided_slice %309 {offsets = [0, 0], sizes = [2, 64], strides = [1, 1]} : vector<2x96xf32> to vector<2x64xf32>
    %341 = arith.addf %339, %340 : vector<2x64xf32>
    %cst_74 = arith.constant 5.000000e-01 : f32
    %342 = vector.broadcast %cst_74 : f32 to vector<2x64xf32>
    %343 = arith.mulf %342, %341 : vector<2x64xf32>
    %344 = math.tanh %343 : vector<2x64xf32>
    %cst_75 = arith.constant 1.000000e+00 : f32
    %345 = vector.broadcast %cst_75 : f32 to vector<2x64xf32>
    %346 = arith.addf %344, %345 : vector<2x64xf32>
    %cst_76 = arith.constant 5.000000e-01 : f32
    %347 = vector.broadcast %cst_76 : f32 to vector<2x64xf32>
    %348 = arith.mulf %347, %346 : vector<2x64xf32>
    %349 = vector.extract_strided_slice %348 {offsets = [0, 0], sizes = [2, 32], strides = [1, 1]} : vector<2x64xf32> to vector<2x32xf32>
    %350 = vector.extract_strided_slice %348 {offsets = [0, 32], sizes = [2, 32], strides = [1, 1]} : vector<2x64xf32> to vector<2x32xf32>
    %351 = vector.extract_strided_slice %338 {offsets = [0, 64], sizes = [2, 32], strides = [1, 1]} : vector<2x96xf32> to vector<2x32xf32>
    %352 = vector.extract_strided_slice %309 {offsets = [0, 64], sizes = [2, 32], strides = [1, 1]} : vector<2x96xf32> to vector<2x32xf32>
    %353 = vector.broadcast %10 : vector<1x32xf32> to vector<2x32xf32>
    %354 = arith.addf %352, %353 : vector<2x32xf32>
    %355 = arith.mulf %349, %354 : vector<2x32xf32>
    %356 = arith.addf %351, %355 : vector<2x32xf32>
    %357 = math.tanh %356 : vector<2x32xf32>
    %cst_77 = arith.constant 1.000000e+00 : f32
    %358 = vector.broadcast %cst_77 : f32 to vector<2x32xf32>
    %359 = arith.subf %358, %350 : vector<2x32xf32>
    %360 = arith.mulf %359, %357 : vector<2x32xf32>
    %361 = arith.mulf %350, %308 : vector<2x32xf32>
    %362 = arith.addf %360, %361 : vector<2x32xf32>
    %cst_78 = arith.constant dense<0.000000e+00> : vector<2x96xf32>
    %363 = tpu.matmul %362, %4, %cst_78 {dimension_numbers = #tpu.dot_dimension_numbers<[1], [0], [0], [1], [0, 0, 1, 1], [], []>} : vector<2x32xf32>, vector<32x96xf32>, vector<2x96xf32> -> vector<2x96xf32>
    %cst_79 = arith.constant dense<0.000000e+00> : vector<2x96xf32>
    %364 = tpu.matmul %335, %2, %cst_79 {dimension_numbers = #tpu.dot_dimension_numbers<[1], [0], [0], [1], [0, 0, 1, 1], [], []>} : vector<2x32xf32>, vector<32x96xf32>, vector<2x96xf32> -> vector<2x96xf32>
    %365 = vector.extract_strided_slice %36 {offsets = [12, 0], sizes = [2, 96], strides = [1, 1]} : vector<16x96xf32> to vector<2x96xf32>
    %366 = vector.extract_strided_slice %365 {offsets = [0, 0], sizes = [2, 64], strides = [1, 1]} : vector<2x96xf32> to vector<2x64xf32>
    %367 = vector.extract_strided_slice %364 {offsets = [0, 0], sizes = [2, 64], strides = [1, 1]} : vector<2x96xf32> to vector<2x64xf32>
    %368 = arith.addf %366, %367 : vector<2x64xf32>
    %cst_80 = arith.constant 5.000000e-01 : f32
    %369 = vector.broadcast %cst_80 : f32 to vector<2x64xf32>
    %370 = arith.mulf %369, %368 : vector<2x64xf32>
    %371 = math.tanh %370 : vector<2x64xf32>
    %cst_81 = arith.constant 1.000000e+00 : f32
    %372 = vector.broadcast %cst_81 : f32 to vector<2x64xf32>
    %373 = arith.addf %371, %372 : vector<2x64xf32>
    %cst_82 = arith.constant 5.000000e-01 : f32
    %374 = vector.broadcast %cst_82 : f32 to vector<2x64xf32>
    %375 = arith.mulf %374, %373 : vector<2x64xf32>
    %376 = vector.extract_strided_slice %375 {offsets = [0, 0], sizes = [2, 32], strides = [1, 1]} : vector<2x64xf32> to vector<2x32xf32>
    %377 = vector.extract_strided_slice %375 {offsets = [0, 32], sizes = [2, 32], strides = [1, 1]} : vector<2x64xf32> to vector<2x32xf32>
    %378 = vector.extract_strided_slice %365 {offsets = [0, 64], sizes = [2, 32], strides = [1, 1]} : vector<2x96xf32> to vector<2x32xf32>
    %379 = vector.extract_strided_slice %364 {offsets = [0, 64], sizes = [2, 32], strides = [1, 1]} : vector<2x96xf32> to vector<2x32xf32>
    %380 = vector.broadcast %8 : vector<1x32xf32> to vector<2x32xf32>
    %381 = arith.addf %379, %380 : vector<2x32xf32>
    %382 = arith.mulf %376, %381 : vector<2x32xf32>
    %383 = arith.addf %378, %382 : vector<2x32xf32>
    %384 = math.tanh %383 : vector<2x32xf32>
    %cst_83 = arith.constant 1.000000e+00 : f32
    %385 = vector.broadcast %cst_83 : f32 to vector<2x32xf32>
    %386 = arith.subf %385, %377 : vector<2x32xf32>
    %387 = arith.mulf %386, %384 : vector<2x32xf32>
    %388 = arith.mulf %377, %335 : vector<2x32xf32>
    %389 = arith.addf %387, %388 : vector<2x32xf32>
    %cst_84 = arith.constant dense<0.000000e+00> : vector<2x96xf32>
    %390 = tpu.matmul %389, %3, %cst_84 {dimension_numbers = #tpu.dot_dimension_numbers<[1], [0], [0], [1], [0, 0, 1, 1], [], []>} : vector<2x32xf32>, vector<32x96xf32>, vector<2x96xf32> -> vector<2x96xf32>
    %391 = vector.broadcast %9 : vector<1x96xf32> to vector<2x96xf32>
    %392 = arith.addf %390, %391 : vector<2x96xf32>
    %393 = vector.extract_strided_slice %392 {offsets = [0, 0], sizes = [2, 64], strides = [1, 1]} : vector<2x96xf32> to vector<2x64xf32>
    %394 = vector.extract_strided_slice %363 {offsets = [0, 0], sizes = [2, 64], strides = [1, 1]} : vector<2x96xf32> to vector<2x64xf32>
    %395 = arith.addf %393, %394 : vector<2x64xf32>
    %cst_85 = arith.constant 5.000000e-01 : f32
    %396 = vector.broadcast %cst_85 : f32 to vector<2x64xf32>
    %397 = arith.mulf %396, %395 : vector<2x64xf32>
    %398 = math.tanh %397 : vector<2x64xf32>
    %cst_86 = arith.constant 1.000000e+00 : f32
    %399 = vector.broadcast %cst_86 : f32 to vector<2x64xf32>
    %400 = arith.addf %398, %399 : vector<2x64xf32>
    %cst_87 = arith.constant 5.000000e-01 : f32
    %401 = vector.broadcast %cst_87 : f32 to vector<2x64xf32>
    %402 = arith.mulf %401, %400 : vector<2x64xf32>
    %403 = vector.extract_strided_slice %402 {offsets = [0, 0], sizes = [2, 32], strides = [1, 1]} : vector<2x64xf32> to vector<2x32xf32>
    %404 = vector.extract_strided_slice %402 {offsets = [0, 32], sizes = [2, 32], strides = [1, 1]} : vector<2x64xf32> to vector<2x32xf32>
    %405 = vector.extract_strided_slice %392 {offsets = [0, 64], sizes = [2, 32], strides = [1, 1]} : vector<2x96xf32> to vector<2x32xf32>
    %406 = vector.extract_strided_slice %363 {offsets = [0, 64], sizes = [2, 32], strides = [1, 1]} : vector<2x96xf32> to vector<2x32xf32>
    %407 = vector.broadcast %10 : vector<1x32xf32> to vector<2x32xf32>
    %408 = arith.addf %406, %407 : vector<2x32xf32>
    %409 = arith.mulf %403, %408 : vector<2x32xf32>
    %410 = arith.addf %405, %409 : vector<2x32xf32>
    %411 = math.tanh %410 : vector<2x32xf32>
    %cst_88 = arith.constant 1.000000e+00 : f32
    %412 = vector.broadcast %cst_88 : f32 to vector<2x32xf32>
    %413 = arith.subf %412, %404 : vector<2x32xf32>
    %414 = arith.mulf %413, %411 : vector<2x32xf32>
    %415 = arith.mulf %404, %362 : vector<2x32xf32>
    %416 = arith.addf %414, %415 : vector<2x32xf32>
    %cst_89 = arith.constant dense<0.000000e+00> : vector<2x96xf32>
    %417 = tpu.matmul %416, %4, %cst_89 {dimension_numbers = #tpu.dot_dimension_numbers<[1], [0], [0], [1], [0, 0, 1, 1], [], []>} : vector<2x32xf32>, vector<32x96xf32>, vector<2x96xf32> -> vector<2x96xf32>
    %cst_90 = arith.constant dense<0.000000e+00> : vector<2x96xf32>
    %418 = tpu.matmul %389, %2, %cst_90 {dimension_numbers = #tpu.dot_dimension_numbers<[1], [0], [0], [1], [0, 0, 1, 1], [], []>} : vector<2x32xf32>, vector<32x96xf32>, vector<2x96xf32> -> vector<2x96xf32>
    %419 = vector.extract_strided_slice %36 {offsets = [14, 0], sizes = [2, 96], strides = [1, 1]} : vector<16x96xf32> to vector<2x96xf32>
    %420 = vector.extract_strided_slice %419 {offsets = [0, 0], sizes = [2, 64], strides = [1, 1]} : vector<2x96xf32> to vector<2x64xf32>
    %421 = vector.extract_strided_slice %418 {offsets = [0, 0], sizes = [2, 64], strides = [1, 1]} : vector<2x96xf32> to vector<2x64xf32>
    %422 = arith.addf %420, %421 : vector<2x64xf32>
    %cst_91 = arith.constant 5.000000e-01 : f32
    %423 = vector.broadcast %cst_91 : f32 to vector<2x64xf32>
    %424 = arith.mulf %423, %422 : vector<2x64xf32>
    %425 = math.tanh %424 : vector<2x64xf32>
    %cst_92 = arith.constant 1.000000e+00 : f32
    %426 = vector.broadcast %cst_92 : f32 to vector<2x64xf32>
    %427 = arith.addf %425, %426 : vector<2x64xf32>
    %cst_93 = arith.constant 5.000000e-01 : f32
    %428 = vector.broadcast %cst_93 : f32 to vector<2x64xf32>
    %429 = arith.mulf %428, %427 : vector<2x64xf32>
    %430 = vector.extract_strided_slice %429 {offsets = [0, 0], sizes = [2, 32], strides = [1, 1]} : vector<2x64xf32> to vector<2x32xf32>
    %431 = vector.extract_strided_slice %429 {offsets = [0, 32], sizes = [2, 32], strides = [1, 1]} : vector<2x64xf32> to vector<2x32xf32>
    %432 = vector.extract_strided_slice %419 {offsets = [0, 64], sizes = [2, 32], strides = [1, 1]} : vector<2x96xf32> to vector<2x32xf32>
    %433 = vector.extract_strided_slice %418 {offsets = [0, 64], sizes = [2, 32], strides = [1, 1]} : vector<2x96xf32> to vector<2x32xf32>
    %434 = vector.broadcast %8 : vector<1x32xf32> to vector<2x32xf32>
    %435 = arith.addf %433, %434 : vector<2x32xf32>
    %436 = arith.mulf %430, %435 : vector<2x32xf32>
    %437 = arith.addf %432, %436 : vector<2x32xf32>
    %438 = math.tanh %437 : vector<2x32xf32>
    %cst_94 = arith.constant 1.000000e+00 : f32
    %439 = vector.broadcast %cst_94 : f32 to vector<2x32xf32>
    %440 = arith.subf %439, %431 : vector<2x32xf32>
    %441 = arith.mulf %440, %438 : vector<2x32xf32>
    %442 = arith.mulf %431, %389 : vector<2x32xf32>
    %443 = arith.addf %441, %442 : vector<2x32xf32>
    %cst_95 = arith.constant dense<0.000000e+00> : vector<2x96xf32>
    %444 = tpu.matmul %443, %3, %cst_95 {dimension_numbers = #tpu.dot_dimension_numbers<[1], [0], [0], [1], [0, 0, 1, 1], [], []>} : vector<2x32xf32>, vector<32x96xf32>, vector<2x96xf32> -> vector<2x96xf32>
    %445 = vector.broadcast %9 : vector<1x96xf32> to vector<2x96xf32>
    %446 = arith.addf %444, %445 : vector<2x96xf32>
    %447 = vector.extract_strided_slice %446 {offsets = [0, 0], sizes = [2, 64], strides = [1, 1]} : vector<2x96xf32> to vector<2x64xf32>
    %448 = vector.extract_strided_slice %417 {offsets = [0, 0], sizes = [2, 64], strides = [1, 1]} : vector<2x96xf32> to vector<2x64xf32>
    %449 = arith.addf %447, %448 : vector<2x64xf32>
    %cst_96 = arith.constant 5.000000e-01 : f32
    %450 = vector.broadcast %cst_96 : f32 to vector<2x64xf32>
    %451 = arith.mulf %450, %449 : vector<2x64xf32>
    %452 = math.tanh %451 : vector<2x64xf32>
    %cst_97 = arith.constant 1.000000e+00 : f32
    %453 = vector.broadcast %cst_97 : f32 to vector<2x64xf32>
    %454 = arith.addf %452, %453 : vector<2x64xf32>
    %cst_98 = arith.constant 5.000000e-01 : f32
    %455 = vector.broadcast %cst_98 : f32 to vector<2x64xf32>
    %456 = arith.mulf %455, %454 : vector<2x64xf32>
    %457 = vector.extract_strided_slice %456 {offsets = [0, 0], sizes = [2, 32], strides = [1, 1]} : vector<2x64xf32> to vector<2x32xf32>
    %458 = vector.extract_strided_slice %456 {offsets = [0, 32], sizes = [2, 32], strides = [1, 1]} : vector<2x64xf32> to vector<2x32xf32>
    %459 = vector.extract_strided_slice %446 {offsets = [0, 64], sizes = [2, 32], strides = [1, 1]} : vector<2x96xf32> to vector<2x32xf32>
    %460 = vector.extract_strided_slice %417 {offsets = [0, 64], sizes = [2, 32], strides = [1, 1]} : vector<2x96xf32> to vector<2x32xf32>
    %461 = vector.broadcast %10 : vector<1x32xf32> to vector<2x32xf32>
    %462 = arith.addf %460, %461 : vector<2x32xf32>
    %463 = arith.mulf %457, %462 : vector<2x32xf32>
    %464 = arith.addf %459, %463 : vector<2x32xf32>
    %465 = math.tanh %464 : vector<2x32xf32>
    %cst_99 = arith.constant 1.000000e+00 : f32
    %466 = vector.broadcast %cst_99 : f32 to vector<2x32xf32>
    %467 = arith.subf %466, %458 : vector<2x32xf32>
    %468 = arith.mulf %467, %465 : vector<2x32xf32>
    %469 = arith.mulf %458, %416 : vector<2x32xf32>
    %470 = arith.addf %468, %469 : vector<2x32xf32>
    %cst_100 = arith.constant dense<0.000000e+00> : vector<2xf32>
    %471 = vector.multi_reduction <add>, %470, %cst_100 [1] : vector<2x32xf32> to vector<2xf32>
    %472 = vector.shape_cast %471 : vector<2xf32> to vector<2x1xf32>
    %cst_101 = arith.constant 3.200000e+01 : f32
    %473 = vector.broadcast %cst_101 : f32 to vector<2x1xf32>
    %474 = arith.divf %472, %473 : vector<2x1xf32>
    %475 = vector.broadcast %474 : vector<2x1xf32> to vector<2x32xf32>
    %476 = arith.subf %470, %475 : vector<2x32xf32>
    %477 = arith.mulf %476, %476 : vector<2x32xf32>
    %cst_102 = arith.constant dense<0.000000e+00> : vector<2xf32>
    %478 = vector.multi_reduction <add>, %477, %cst_102 [1] : vector<2x32xf32> to vector<2xf32>
    %479 = vector.shape_cast %478 : vector<2xf32> to vector<2x1xf32>
    %cst_103 = arith.constant 3.200000e+01 : f32
    %480 = vector.broadcast %cst_103 : f32 to vector<2x1xf32>
    %481 = arith.divf %479, %480 : vector<2x1xf32>
    %482 = vector.broadcast %474 : vector<2x1xf32> to vector<2x32xf32>
    %483 = arith.subf %470, %482 : vector<2x32xf32>
    %cst_104 = arith.constant 9.99999974E-6 : f32
    %484 = vector.broadcast %cst_104 : f32 to vector<2x1xf32>
    %485 = arith.addf %481, %484 : vector<2x1xf32>
    %486 = math.rsqrt %485 : vector<2x1xf32>
    %487 = vector.broadcast %486 : vector<2x1xf32> to vector<2x32xf32>
    %488 = arith.mulf %483, %487 : vector<2x32xf32>
    %489 = vector.broadcast %11 : vector<1x32xf32> to vector<2x32xf32>
    %490 = arith.mulf %488, %489 : vector<2x32xf32>
    %491 = vector.broadcast %12 : vector<1x32xf32> to vector<2x32xf32>
    %492 = arith.addf %490, %491 : vector<2x32xf32>
    %cst_105 = arith.constant dense<0.000000e+00> : vector<2x16xf32>
    %493 = tpu.matmul %492, %5, %cst_105 {dimension_numbers = #tpu.dot_dimension_numbers<[1], [0], [0], [1], [0, 0, 1, 1], [], []>} : vector<2x32xf32>, vector<32x16xf32>, vector<2x16xf32> -> vector<2x16xf32>
    %494 = vector.broadcast %13 : vector<1x16xf32> to vector<2x16xf32>
    %495 = arith.addf %493, %494 : vector<2x16xf32>
    %cst_106 = arith.constant 0.000000e+00 : f32
    %496 = vector.broadcast %cst_106 : f32 to vector<2x16xf32>
    %497 = arith.maximumf %495, %496 : vector<2x16xf32>
    %498 = vector.broadcast %15 : vector<1x16xf32> to vector<2x16xf32>
    %499 = arith.mulf %497, %498 : vector<2x16xf32>
    %cst_107 = arith.constant dense<0.000000e+00> : vector<2xf32>
    %500 = vector.multi_reduction <add>, %499, %cst_107 [1] : vector<2x16xf32> to vector<2xf32>
    %501 = vector.shape_cast %500 : vector<2xf32> to vector<2x1xf32>
    %502 = vector.broadcast %14 : vector<1x1xf32> to vector<2x1xf32>
    %503 = arith.addf %501, %502 : vector<2x1xf32>
    %c0_108 = arith.constant 0 : index
    %c0_109 = arith.constant 0 : index
    %504 = vector.load %arg5[%c0_108, %c0_109] : memref<2x1xf32, #tpu.memory_space<vmem>>, vector<2x1xf32>
    tpu.vector_store %arg5[%c0_108, %c0_109], %503 {strides = array<i32>} : memref<2x1xf32, #tpu.memory_space<vmem>>, vector<2x1xf32>,
    return
  }
}

</mosaic_0001>

<llo_original>
// kernel: tpu_custom_call.1
$region0: #{tpu_custom_call.1}
  #allocation0 [shape = 'u32[]', space=smem, size = 0x4, offset = 0x4, fixed_abs, tag = 'smem constant byte address 0x4 - core index']
  #allocation1 [shape = 'u32[144,128]{1,0:T(1,128)}', space=vmem, size = 0x12000, scoped, tag = 'internal scratch']
  %s0 = inlined_call_operand.vmem [shape: f32[2,8,6], index: 0, kind: input, shape index: {}]
  %s1 = inlined_call_operand.vmem [shape: f32[6,96], index: 1, kind: input, shape index: {}]
  %s2 = inlined_call_operand.hbm [shape: f32[96,96], index: 2, kind: input, shape index: {}]
  %s3 = inlined_call_operand.vmem [shape: f32[32,16], index: 3, kind: input, shape index: {}]
  %s4 = inlined_call_operand.vmem [shape: f32[8,128], index: 4, kind: input, shape index: {}]
  %s5 = inlined_call_operand.vmem [shape: f32[2,1], index: 5, kind: output, shape index: {}]
  %s6 = sld [smem:[#allocation0]]
  $region34: #{tpu_custom_call.1} parent=0
    _
  %s8 = ssub.s32 1, %s6
  %s9 = scalar_select 0, %s8, %s6
  $region1: #{tpu_custom_call.1} parent=0
    #allocation2 [shape = 'u8[49152]{0}', space=vmem, size = 0xc000, scoped, tag = 'input window, operand 2, single buffered']
    #allocation3 [shape = 's32[1]{0}', space=sflag, size = 0x4, scoped, tag = 'scoped memory for tpu_custom_call.1']
    %10 = vsyncpa [#allocation3], 0
    // Predicated region
    $region2: #{tpu_custom_call.1} parent=1 // pred_check
      _
    $region3: #{tpu_custom_call.1} parent=1 // pred_check_branch
      %12 = sbr.rel (0) target = $region5
    $region4: #{tpu_custom_call.1} parent=1 // pred_region
      _
    $region5: #{tpu_custom_call.1} parent=1 // pred_fallthru
      _
    // Predicated region
    $region6: #{tpu_custom_call.1} parent=1 // pred_check
      _
    $region7: #{tpu_custom_call.1} parent=1 // pred_check_branch
      %14 = sbr.rel (0) target = $region9
    $region8: #{tpu_custom_call.1} parent=1 // pred_region
      _
    $region9: #{tpu_custom_call.1} parent=1 // pred_fallthru
      _
    // Predicated region
    $region10: #{tpu_custom_call.1} parent=1 // pred_check
      _
    $region11: #{tpu_custom_call.1} parent=1 // pred_check_branch
      %16 = sbr.rel (0) target = $region13
    $region12: #{tpu_custom_call.1} parent=1 // pred_region
      %s18 = ssub.s32 1536, 1536
      %19 = vsyncadd [#allocation3], %s18
      %s20 = sshll.u32 [#allocation2], 4
      %s21 = int_to_ptr.vmem [resolvable:$true] %s20
      %26 = dma.hbm_to_vmem [thread:$0]  %s2, 1536, %s21, [#allocation3], 128, 128, 8
    $region13: #{tpu_custom_call.1} parent=1 // pred_fallthru
      _
    // Predicated region
    $region14: #{tpu_custom_call.1} parent=1 // pred_check
      _
    $region15: #{tpu_custom_call.1} parent=1 // pred_check_branch
      %28 = sbr.rel (0) target = $region17
    $region16: #{tpu_custom_call.1} parent=1 // pred_region
      _
    $region17: #{tpu_custom_call.1} parent=1 // pred_fallthru
      _
    // Predicated region
    $region18: #{tpu_custom_call.1} parent=1 // pred_check
      _
    $region19: #{tpu_custom_call.1} parent=1 // pred_check_branch
      %30 = sbr.rel (0) target = $region21
    $region20: #{tpu_custom_call.1} parent=1 // pred_region
      _
    $region21: #{tpu_custom_call.1} parent=1 // pred_fallthru
      _
    // Predicated region
    $region22: #{tpu_custom_call.1} parent=1 // pred_check
      _
    $region23: #{tpu_custom_call.1} parent=1 // pred_check_branch
      %32 = sbr.rel (0) target = $region25
    $region24: #{tpu_custom_call.1} parent=1 // pred_region
      %33 = dma.done [#allocation3], 1536
    $region25: #{tpu_custom_call.1} parent=1 // pred_fallthru
      _
    %v34 = vld [vmem:[%s1] sm:$0x3f]
    %v35 = vld [vmem:[#allocation2] sm:$0xff]
    %v36 = vld [vmem:[#allocation2 + $0x8] sm:$0xff]
    %v37 = vld [vmem:[#allocation2 + $0x10] sm:$0xff]
    %v38 = vld [vmem:[#allocation2 + $0x18] sm:$0xff]
    %v39 = vld [vmem:[#allocation2 + $0x20] sm:$0xff]
    %v40 = vld [vmem:[#allocation2 + $0x28] sm:$0xff]
    %v41 = vld [vmem:[#allocation2 + $0x30] sm:$0xff]
    %v42 = vld [vmem:[#allocation2 + $0x38] sm:$0xff]
    %v43 = vld [vmem:[#allocation2 + $0x40] sm:$0xff]
    %v44 = vld [vmem:[#allocation2 + $0x48] sm:$0xff]
    %v45 = vld [vmem:[#allocation2 + $0x50] sm:$0xff]
    %v46 = vld [vmem:[#allocation2 + $0x58] sm:$0xff]
    %v47 = vld [vmem:[%s3] sm:$0xff]
    %v48 = vld [vmem:[%s3 + $0x8] sm:$0xff]
    %v49 = vld [vmem:[%s3 + $0x10] sm:$0xff]
    %v50 = vld [vmem:[%s3 + $0x18] sm:$0xff]
    %v51 = vld [vmem:[%s4] sm:$0xff]
    %v52 = vld [vmem:[%s0] sm:$0xff]
    %v53 = vld [vmem:[%s0 + $0x8] sm:$0xff]
    %v56 = vrot.slane %v53, 7
    %vm57 = vcmask 1041409
    %v58 = vsel %vm57, %v56, %v52
    %v60 = vrot.slane %v52, 7
    %v61 = vrot.slane %v53, 6
    %vm62 = vcmask 1043459
    %v63 = vsel %vm62, %v61, %v60
    %v65 = vrot.slane %v52, 6
    %v66 = vrot.slane %v53, 5
    %vm67 = vcmask 1045509
    %v68 = vsel %vm67, %v66, %v65
    %v70 = vrot.slane %v52, 5
    %v71 = vrot.slane %v53, 4
    %vm72 = vcmask 1047559
    %v73 = vsel %vm72, %v71, %v70
    %v75 = vrot.slane %v52, 4
    %v76 = vrot.slane %v53, 3
    %v77 = vsel %vm57, %v76, %v75
    %v79 = vrot.slane %v52, 3
    %v80 = vrot.slane %v53, 2
    %v81 = vsel %vm62, %v80, %v79
    %v83 = vrot.slane %v52, 2
    %v84 = vrot.slane %v53, 1
    %v85 = vsel %vm67, %v84, %v83
    %v87 = vrot.slane %v52, 1
    %v88 = vsel %vm72, %v53, %v87
    %vm90 = vcmask 1041408
    %v91 = vsel %vm90, %v58, %v63
    %vm92 = vcmask 1043456
    %v93 = vsel %vm92, %v91, %v68
    %vm94 = vcmask 1045504
    %v95 = vsel %vm94, %v93, %v73
    %v96 = vsel %vm90, %v77, %v81
    %v97 = vsel %vm92, %v96, %v85
    %v98 = vsel %vm94, %v97, %v88
    %v99 = vlaneseq
    %v100 = vshrl.u32 %v99, 7
    %v101 = vsub.s32 0, %v100
    %v102 = vrot.slane %v51, %v101
    %vm103 = vcmask 48128
    %v105 = vsel %vm103, %v95, 0
    %v108 = vsel %vm103, %v98, 0
    %v111 = vsel %vm94, %v34, 0
    %113 = vmatprep.subr.mxu0 0.0
    %114 = vmatpush1.msra.mxu0 0.0
    %115 = vmatprep.subr.mxu0 0.0
    %116 = vmatpush1.msra.mxu0 0.0
    %117 = vmatprep.subr.mxu0 0.0
    %118 = vmatpush1.msra.mxu0 0.0
    %119 = vmatprep.subr.mxu0 0.0
    %120 = vmatpush1.msra.mxu0 0.0
    %121 = vmatprep.subr.mxu0 0.0
    %122 = vmatpush1.msra.mxu0 0.0
    %123 = vmatprep.subr.mxu0 0.0
    %124 = vmatpush1.msra.mxu0 0.0
    %125 = vmatprep.subr.mxu0 0.0
    %126 = vmatpush1.msra.mxu0 0.0
    %127 = vmatprep.subr.mxu0 0.0
    %128 = vmatpush1.msra.mxu0 0.0
    %129 = vmatprep.subr.mxu0 0.0
    %130 = vmatpush1.msra.mxu0 0.0
    %131 = vmatprep.subr.mxu0 0.0
    %132 = vmatpush1.msra.mxu0 0.0
    %133 = vmatprep.subr.mxu0 0.0
    %134 = vmatpush1.msra.mxu0 0.0
    %135 = vmatprep.subr.mxu0 0.0
    %136 = vmatpush1.msra.mxu0 0.0
    %137 = vmatprep.subr.mxu0 0.0
    %138 = vmatpush1.msra.mxu0 0.0
    %139 = vmatprep.subr.mxu0 0.0
    %140 = vmatpush1.msra.mxu0 0.0
    %141 = vmatprep.subr.mxu0 0.0
    %142 = vmatpush1.msra.mxu0 0.0
    %143 = vmatprep.subr.mxu0 0.0
    %144 = vmatpush1.msra.mxu0 %v111
    %145 = vmatprep.subr.mxu0 0.0
    %146 = vmatpush2.msra.mxu0 0.0
    %147 = vmatprep.subr.mxu0 0.0
    %148 = vmatpush2.msra.mxu0 0.0
    %149 = vmatprep.subr.mxu0 0.0
    %150 = vmatpush2.msra.mxu0 0.0
    %151 = vmatprep.subr.mxu0 0.0
    %152 = vmatpush2.msra.mxu0 0.0
    %153 = vmatprep.subr.mxu0 0.0
    %154 = vmatpush2.msra.mxu0 0.0
    %155 = vmatprep.subr.mxu0 0.0
    %156 = vmatpush2.msra.mxu0 0.0
    %157 = vmatprep.subr.mxu0 0.0
    %158 = vmatpush2.msra.mxu0 0.0
    %159 = vmatprep.subr.mxu0 0.0
    %160 = vmatpush2.msra.mxu0 0.0
    %161 = vmatprep.subr.mxu0 0.0
    %162 = vmatpush2.msra.mxu0 0.0
    %163 = vmatprep.subr.mxu0 0.0
    %164 = vmatpush2.msra.mxu0 0.0
    %165 = vmatprep.subr.mxu0 0.0
    %166 = vmatpush2.msra.mxu0 0.0
    %167 = vmatprep.subr.mxu0 0.0
    %168 = vmatpush2.msra.mxu0 0.0
    %169 = vmatprep.subr.mxu0 0.0
    %170 = vmatpush2.msra.mxu0 0.0
    %171 = vmatprep.subr.mxu0 0.0
    %172 = vmatpush2.msra.mxu0 0.0
    %173 = vmatprep.subr.mxu0 0.0
    %174 = vmatpush2.msra.mxu0 0.0
    %175 = vmatprep.subr.mxu0 0.0
    %176 = vmatpush2.msra.mxu0 0.0
    %177 = vmatprep.mubr.f32.mxu0 0.0
    %178 = vmatmul.mubr.f32.gmra.mxu0 %v105
    %v179 = vpop.f32.mrf.mxu0
    %v180 = vadd.f32 %v102, %v179
    %v181 = vpop.f32.mrf.mxu0
    %182 = vmatprep.mubr.f32.mxu0 0.0
    %183 = vmatmul.mubr.f32.gmra.mxu0 %v108
    %v184 = vpop.f32.mrf.mxu0
    %v185 = vadd.f32 %v102, %v184
    %v186 = vpop.f32.mrf.mxu0
    %187 = vdwg.mxu0
    %vm188 = vcmask 261120
    %v190 = vsel %vm188, 0.0, 0
    %192 = vmatprep.subr.mxu0 0.0
    %193 = vmatpush1.msra.mxu0 0.0
    %194 = vmatprep.subr.mxu0 0.0
    %195 = vmatpush1.msra.mxu0 0.0
    %196 = vmatprep.subr.mxu0 0.0
    %197 = vmatpush1.msra.mxu0 0.0
    %198 = vmatprep.subr.mxu0 0.0
    %199 = vmatpush1.msra.mxu0 0.0
    %200 = vmatprep.subr.mxu0 0.0
    %201 = vmatpush1.msra.mxu0 0.0
    %202 = vmatprep.subr.mxu0 0.0
    %203 = vmatpush1.msra.mxu0 0.0
    %204 = vmatprep.subr.mxu0 0.0
    %205 = vmatpush1.msra.mxu0 0.0
    %206 = vmatprep.subr.mxu0 0.0
    %207 = vmatpush1.msra.mxu0 0.0
    %208 = vmatprep.subr.mxu0 0.0
    %209 = vmatpush1.msra.mxu0 0.0
    %210 = vmatprep.subr.mxu0 0.0
    %211 = vmatpush1.msra.mxu0 0.0
    %212 = vmatprep.subr.mxu0 0.0
    %213 = vmatpush1.msra.mxu0 0.0
    %214 = vmatprep.subr.mxu0 0.0
    %215 = vmatpush1.msra.mxu0 0.0
    %216 = vmatprep.subr.mxu0 0.0
    %217 = vmatpush1.msra.mxu0 %v46
    %218 = vmatprep.subr.mxu0 0.0
    %219 = vmatpush1.msra.mxu0 %v45
    %220 = vmatprep.subr.mxu0 0.0
    %221 = vmatpush1.msra.mxu0 %v44
    %222 = vmatprep.subr.mxu0 0.0
    %223 = vmatpush1.msra.mxu0 %v43
    %224 = vmatprep.subr.mxu0 0.0
    %225 = vmatpush2.msra.mxu0 0.0
    %226 = vmatprep.subr.mxu0 0.0
    %227 = vmatpush2.msra.mxu0 0.0
    %228 = vmatprep.subr.mxu0 0.0
    %229 = vmatpush2.msra.mxu0 0.0
    %230 = vmatprep.subr.mxu0 0.0
    %231 = vmatpush2.msra.mxu0 0.0
    %232 = vmatprep.subr.mxu0 0.0
    %233 = vmatpush2.msra.mxu0 0.0
    %234 = vmatprep.subr.mxu0 0.0
    %235 = vmatpush2.msra.mxu0 0.0
    %236 = vmatprep.subr.mxu0 0.0
    %237 = vmatpush2.msra.mxu0 0.0
    %238 = vmatprep.subr.mxu0 0.0
    %239 = vmatpush2.msra.mxu0 0.0
    %240 = vmatprep.subr.mxu0 0.0
    %241 = vmatpush2.msra.mxu0 0.0
    %242 = vmatprep.subr.mxu0 0.0
    %243 = vmatpush2.msra.mxu0 0.0
    %244 = vmatprep.subr.mxu0 0.0
    %245 = vmatpush2.msra.mxu0 0.0
    %246 = vmatprep.subr.mxu0 0.0
    %247 = vmatpush2.msra.mxu0 0.0
    %248 = vmatprep.subr.mxu0 0.0
    %249 = vmatpush2.msra.mxu0 0.0
    %250 = vmatprep.subr.mxu0 0.0
    %251 = vmatpush2.msra.mxu0 0.0
    %252 = vmatprep.subr.mxu0 0.0
    %253 = vmatpush2.msra.mxu0 0.0
    %254 = vmatprep.subr.mxu0 0.0
    %255 = vmatpush2.msra.mxu0 0.0
    %256 = vmatprep.mubr.f32.mxu0 0.0
    %257 = vmatmul.mubr.f32.gmra.mxu0 %v190
    %v258 = vpop.f32.mrf.mxu0
    %v259 = vadd.f32 0.0, %v258
    %v260 = vpop.f32.mrf.mxu0
    %261 = vdwg.mxu0
    %262 = vmatprep.subr.mxu0 0.0
    %263 = vmatpush1.msra.mxu0 0.0
    %264 = vmatprep.subr.mxu0 0.0
    %265 = vmatpush1.msra.mxu0 0.0
    %266 = vmatprep.subr.mxu0 0.0
    %267 = vmatpush1.msra.mxu0 0.0
    %268 = vmatprep.subr.mxu0 0.0
    %269 = vmatpush1.msra.mxu0 0.0
    %270 = vmatprep.subr.mxu0 0.0
    %271 = vmatpush1.msra.mxu0 0.0
    %272 = vmatprep.subr.mxu0 0.0
    %273 = vmatpush1.msra.mxu0 0.0
    %274 = vmatprep.subr.mxu0 0.0
    %275 = vmatpush1.msra.mxu0 0.0
    %276 = vmatprep.subr.mxu0 0.0
    %277 = vmatpush1.msra.mxu0 0.0
    %278 = vmatprep.subr.mxu0 0.0
    %279 = vmatpush1.msra.mxu0 0.0
    %280 = vmatprep.subr.mxu0 0.0
    %281 = vmatpush1.msra.mxu0 0.0
    %282 = vmatprep.subr.mxu0 0.0
    %283 = vmatpush1.msra.mxu0 0.0
    %284 = vmatprep.subr.mxu0 0.0
    %285 = vmatpush1.msra.mxu0 0.0
    %286 = vmatprep.subr.mxu0 0.0
    %287 = vmatpush1.msra.mxu0 %v38
    %288 = vmatprep.subr.mxu0 0.0
    %289 = vmatpush1.msra.mxu0 %v37
    %290 = vmatprep.subr.mxu0 0.0
    %291 = vmatpush1.msra.mxu0 %v36
    %292 = vmatprep.subr.mxu0 0.0
    %293 = vmatpush1.msra.mxu0 %v35
    %294 = vmatprep.subr.mxu0 0.0
    %295 = vmatpush2.msra.mxu0 0.0
    %296 = vmatprep.subr.mxu0 0.0
    %297 = vmatpush2.msra.mxu0 0.0
    %298 = vmatprep.subr.mxu0 0.0
    %299 = vmatpush2.msra.mxu0 0.0
    %300 = vmatprep.subr.mxu0 0.0
    %301 = vmatpush2.msra.mxu0 0.0
    %302 = vmatprep.subr.mxu0 0.0
    %303 = vmatpush2.msra.mxu0 0.0
    %304 = vmatprep.subr.mxu0 0.0
    %305 = vmatpush2.msra.mxu0 0.0
    %306 = vmatprep.subr.mxu0 0.0
    %307 = vmatpush2.msra.mxu0 0.0
    %308 = vmatprep.subr.mxu0 0.0
    %309 = vmatpush2.msra.mxu0 0.0
    %310 = vmatprep.subr.mxu0 0.0
    %311 = vmatpush2.msra.mxu0 0.0
    %312 = vmatprep.subr.mxu0 0.0
    %313 = vmatpush2.msra.mxu0 0.0
    %314 = vmatprep.subr.mxu0 0.0
    %315 = vmatpush2.msra.mxu0 0.0
    %316 = vmatprep.subr.mxu0 0.0
    %317 = vmatpush2.msra.mxu0 0.0
    %318 = vmatprep.subr.mxu0 0.0
    %319 = vmatpush2.msra.mxu0 0.0
    %320 = vmatprep.subr.mxu0 0.0
    %321 = vmatpush2.msra.mxu0 0.0
    %322 = vmatprep.subr.mxu0 0.0
    %323 = vmatpush2.msra.mxu0 0.0
    %324 = vmatprep.subr.mxu0 0.0
    %325 = vmatpush2.msra.mxu0 0.0
    %326 = vmatprep.mubr.f32.mxu0 0.0
    %327 = vmatmul.mubr.f32.gmra.mxu0 %v190
    %v328 = vpop.f32.mrf.mxu0
    %v329 = vadd.f32 0.0, %v328
    %v330 = vpop.f32.mrf.mxu0
    %331 = vdwg.mxu0
    %v332 = vadd.f32 %v180, %v329
    %v333 = vmul.f32 %v332, 0.5
    %v334 = vtanh.pop %v333
    %v335 = vadd.f32 %v334, 1.0
    %v336 = vmul.f32 %v335, 0.5
    %v337 = vlaneseq
    %v338 = vshrl.u32 %v337, 7
    %v339 = vsub.s32 1, %v338
    %v340 = vrot.slane %v51, %v339
    %342 = vrot.lane.b32.xlu0 %v340, 64
    %v343 = vpop.permute.xlu0 %342
    %v345 = vadd.f32 %v329, %v343
    %347 = vrot.lane.b32.xlu0 %v345, 64
    %v348 = vpop.permute.xlu0 %347
    %v350 = vmul.f32 %v336, %v348
    %352 = vrot.lane.b32.xlu0 %v350, 64
    %v353 = vpop.permute.xlu0 %352
    %v355 = vadd.f32 %v180, %v353
    %v356 = vtanh.pop %v355
    %v357 = vsub.f32 1.0, %v336
    %359 = vrot.lane.b32.xlu0 %v356, 96
    %v360 = vpop.permute.xlu0 %359
    %v362 = vmul.f32 %v357, %v360
    %v363 = vmul.f32 %v336, 0.0
    %v364 = vadd.f32 %v362, %v363
    %v365 = vlaneseq
    %v366 = vshrl.u32 %v365, 7
    %v367 = vsub.s32 2, %v366
    %v368 = vrot.slane %v51, %v367
    %370 = vrot.lane.b32.xlu0 %v364, 96
    %v371 = vpop.permute.xlu0 %370
    %v372 = vsel %vm188, %v371, 0
    %374 = vmatprep.subr.mxu0 0.0
    %375 = vmatpush1.msra.mxu0 0.0
    %376 = vmatprep.subr.mxu0 0.0
    %377 = vmatpush1.msra.mxu0 0.0
    %378 = vmatprep.subr.mxu0 0.0
    %379 = vmatpush1.msra.mxu0 0.0
    %380 = vmatprep.subr.mxu0 0.0
    %381 = vmatpush1.msra.mxu0 0.0
    %382 = vmatprep.subr.mxu0 0.0
    %383 = vmatpush1.msra.mxu0 0.0
    %384 = vmatprep.subr.mxu0 0.0
    %385 = vmatpush1.msra.mxu0 0.0
    %386 = vmatprep.subr.mxu0 0.0
    %387 = vmatpush1.msra.mxu0 0.0
    %388 = vmatprep.subr.mxu0 0.0
    %389 = vmatpush1.msra.mxu0 0.0
    %390 = vmatprep.subr.mxu0 0.0
    %391 = vmatpush1.msra.mxu0 0.0
    %392 = vmatprep.subr.mxu0 0.0
    %393 = vmatpush1.msra.mxu0 0.0
    %394 = vmatprep.subr.mxu0 0.0
    %395 = vmatpush1.msra.mxu0 0.0
    %396 = vmatprep.subr.mxu0 0.0
    %397 = vmatpush1.msra.mxu0 0.0
    %398 = vmatprep.subr.mxu0 0.0
    %399 = vmatpush1.msra.mxu0 %v42
    %400 = vmatprep.subr.mxu0 0.0
    %401 = vmatpush1.msra.mxu0 %v41
    %402 = vmatprep.subr.mxu0 0.0
    %403 = vmatpush1.msra.mxu0 %v40
    %404 = vmatprep.subr.mxu0 0.0
    %405 = vmatpush1.msra.mxu0 %v39
    %406 = vmatprep.subr.mxu0 0.0
    %407 = vmatpush2.msra.mxu0 0.0
    %408 = vmatprep.subr.mxu0 0.0
    %409 = vmatpush2.msra.mxu0 0.0
    %410 = vmatprep.subr.mxu0 0.0
    %411 = vmatpush2.msra.mxu0 0.0
    %412 = vmatprep.subr.mxu0 0.0
    %413 = vmatpush2.msra.mxu0 0.0
    %414 = vmatprep.subr.mxu0 0.0
    %415 = vmatpush2.msra.mxu0 0.0
    %416 = vmatprep.subr.mxu0 0.0
    %417 = vmatpush2.msra.mxu0 0.0
    %418 = vmatprep.subr.mxu0 0.0
    %419 = vmatpush2.msra.mxu0 0.0
    %420 = vmatprep.subr.mxu0 0.0
    %421 = vmatpush2.msra.mxu0 0.0
    %422 = vmatprep.subr.mxu0 0.0
    %423 = vmatpush2.msra.mxu0 0.0
    %424 = vmatprep.subr.mxu0 0.0
    %425 = vmatpush2.msra.mxu0 0.0
    %426 = vmatprep.subr.mxu0 0.0
    %427 = vmatpush2.msra.mxu0 0.0
    %428 = vmatprep.subr.mxu0 0.0
    %429 = vmatpush2.msra.mxu0 0.0
    %430 = vmatprep.subr.mxu0 0.0
    %431 = vmatpush2.msra.mxu0 0.0
    %432 = vmatprep.subr.mxu0 0.0
    %433 = vmatpush2.msra.mxu0 0.0
    %434 = vmatprep.subr.mxu0 0.0
    %435 = vmatpush2.msra.mxu0 0.0
    %436 = vmatprep.subr.mxu0 0.0
    %437 = vmatpush2.msra.mxu0 0.0
    %438 = vmatprep.mubr.f32.mxu0 0.0
    %439 = vmatmul.mubr.f32.gmra.mxu0 %v372
    %v440 = vpop.f32.mrf.mxu0
    %v441 = vadd.f32 %v368, %v440
    %v442 = vpop.f32.mrf.mxu0
    %443 = vdwg.mxu0
    %v444 = vadd.f32 %v441, %v259
    %v445 = vmul.f32 %v444, 0.5
    %v446 = vtanh.pop %v445
    %v447 = vadd.f32 %v446, 1.0
    %v448 = vmul.f32 %v447, 0.5
    %v449 = vlaneseq
    %v450 = vshrl.u32 %v449, 7
    %v451 = vsub.s32 3, %v450
    %v452 = vrot.slane %v51, %v451
    %454 = vrot.lane.b32.xlu0 %v452, 64
    %v455 = vpop.permute.xlu0 %454
    %v457 = vadd.f32 %v259, %v455
    %459 = vrot.lane.b32.xlu0 %v457, 64
    %v460 = vpop.permute.xlu0 %459
    %v462 = vmul.f32 %v448, %v460
    %464 = vrot.lane.b32.xlu0 %v462, 64
    %v465 = vpop.permute.xlu0 %464
    %v467 = vadd.f32 %v441, %v465
    %v468 = vtanh.pop %v467
    %v469 = vsub.f32 1.0, %v448
    %471 = vrot.lane.b32.xlu0 %v468, 96
    %v472 = vpop.permute.xlu0 %471
    %v474 = vmul.f32 %v469, %v472
    %v475 = vmul.f32 %v448, 0.0
    %v476 = vadd.f32 %v474, %v475
    %478 = vrot.lane.b32.xlu0 %v476, 96
    %v479 = vpop.permute.xlu0 %478
    %v480 = vsel %vm188, %v479, 0
    %482 = vmatprep.subr.mxu0 0.0
    %483 = vmatpush1.msra.mxu0 0.0
    %484 = vmatprep.subr.mxu0 0.0
    %485 = vmatpush1.msra.mxu0 0.0
    %486 = vmatprep.subr.mxu0 0.0
    %487 = vmatpush1.msra.mxu0 0.0
    %488 = vmatprep.subr.mxu0 0.0
    %489 = vmatpush1.msra.mxu0 0.0
    %490 = vmatprep.subr.mxu0 0.0
    %491 = vmatpush1.msra.mxu0 0.0
    %492 = vmatprep.subr.mxu0 0.0
    %493 = vmatpush1.msra.mxu0 0.0
    %494 = vmatprep.subr.mxu0 0.0
    %495 = vmatpush1.msra.mxu0 0.0
    %496 = vmatprep.subr.mxu0 0.0
    %497 = vmatpush1.msra.mxu0 0.0
    %498 = vmatprep.subr.mxu0 0.0
    %499 = vmatpush1.msra.mxu0 0.0
    %500 = vmatprep.subr.mxu0 0.0
    %501 = vmatpush1.msra.mxu0 0.0
    %502 = vmatprep.subr.mxu0 0.0
    %503 = vmatpush1.msra.mxu0 0.0
    %504 = vmatprep.subr.mxu0 0.0
    %505 = vmatpush1.msra.mxu0 0.0
    %506 = vmatprep.subr.mxu0 0.0
    %507 = vmatpush1.msra.mxu0 %v46
    %508 = vmatprep.subr.mxu0 0.0
    %509 = vmatpush1.msra.mxu0 %v45
    %510 = vmatprep.subr.mxu0 0.0
    %511 = vmatpush1.msra.mxu0 %v44
    %512 = vmatprep.subr.mxu0 0.0
    %513 = vmatpush1.msra.mxu0 %v43
    %514 = vmatprep.subr.mxu0 0.0
    %515 = vmatpush2.msra.mxu0 0.0
    %516 = vmatprep.subr.mxu0 0.0
    %517 = vmatpush2.msra.mxu0 0.0
    %518 = vmatprep.subr.mxu0 0.0
    %519 = vmatpush2.msra.mxu0 0.0
    %520 = vmatprep.subr.mxu0 0.0
    %521 = vmatpush2.msra.mxu0 0.0
    %522 = vmatprep.subr.mxu0 0.0
    %523 = vmatpush2.msra.mxu0 0.0
    %524 = vmatprep.subr.mxu0 0.0
    %525 = vmatpush2.msra.mxu0 0.0
    %526 = vmatprep.subr.mxu0 0.0
    %527 = vmatpush2.msra.mxu0 0.0
    %528 = vmatprep.subr.mxu0 0.0
    %529 = vmatpush2.msra.mxu0 0.0
    %530 = vmatprep.subr.mxu0 0.0
    %531 = vmatpush2.msra.mxu0 0.0
    %532 = vmatprep.subr.mxu0 0.0
    %533 = vmatpush2.msra.mxu0 0.0
    %534 = vmatprep.subr.mxu0 0.0
    %535 = vmatpush2.msra.mxu0 0.0
    %536 = vmatprep.subr.mxu0 0.0
    %537 = vmatpush2.msra.mxu0 0.0
    %538 = vmatprep.subr.mxu0 0.0
    %539 = vmatpush2.msra.mxu0 0.0
    %540 = vmatprep.subr.mxu0 0.0
    %541 = vmatpush2.msra.mxu0 0.0
    %542 = vmatprep.subr.mxu0 0.0
    %543 = vmatpush2.msra.mxu0 0.0
    %544 = vmatprep.subr.mxu0 0.0
    %545 = vmatpush2.msra.mxu0 0.0
    %546 = vmatprep.mubr.f32.mxu0 0.0
    %547 = vmatmul.mubr.f32.gmra.mxu0 %v480
    %v548 = vpop.f32.mrf.mxu0
    %v549 = vadd.f32 0.0, %v548
    %v550 = vpop.f32.mrf.mxu0
    %551 = vdwg.mxu0
    %552 = vmatprep.subr.mxu0 0.0
    %553 = vmatpush1.msra.mxu0 0.0
    %554 = vmatprep.subr.mxu0 0.0
    %555 = vmatpush1.msra.mxu0 0.0
    %556 = vmatprep.subr.mxu0 0.0
    %557 = vmatpush1.msra.mxu0 0.0
    %558 = vmatprep.subr.mxu0 0.0
    %559 = vmatpush1.msra.mxu0 0.0
    %560 = vmatprep.subr.mxu0 0.0
    %561 = vmatpush1.msra.mxu0 0.0
    %562 = vmatprep.subr.mxu0 0.0
    %563 = vmatpush1.msra.mxu0 0.0
    %564 = vmatprep.subr.mxu0 0.0
    %565 = vmatpush1.msra.mxu0 0.0
    %566 = vmatprep.subr.mxu0 0.0
    %567 = vmatpush1.msra.mxu0 0.0
    %568 = vmatprep.subr.mxu0 0.0
    %569 = vmatpush1.msra.mxu0 0.0
    %570 = vmatprep.subr.mxu0 0.0
    %571 = vmatpush1.msra.mxu0 0.0
    %572 = vmatprep.subr.mxu0 0.0
    %573 = vmatpush1.msra.mxu0 0.0
    %574 = vmatprep.subr.mxu0 0.0
    %575 = vmatpush1.msra.mxu0 0.0
    %576 = vmatprep.subr.mxu0 0.0
    %577 = vmatpush1.msra.mxu0 %v38
    %578 = vmatprep.subr.mxu0 0.0
    %579 = vmatpush1.msra.mxu0 %v37
    %580 = vmatprep.subr.mxu0 0.0
    %581 = vmatpush1.msra.mxu0 %v36
    %582 = vmatprep.subr.mxu0 0.0
    %583 = vmatpush1.msra.mxu0 %v35
    %584 = vmatprep.subr.mxu0 0.0
    %585 = vmatpush2.msra.mxu0 0.0
    %586 = vmatprep.subr.mxu0 0.0
    %587 = vmatpush2.msra.mxu0 0.0
    %588 = vmatprep.subr.mxu0 0.0
    %589 = vmatpush2.msra.mxu0 0.0
    %590 = vmatprep.subr.mxu0 0.0
    %591 = vmatpush2.msra.mxu0 0.0
    %592 = vmatprep.subr.mxu0 0.0
    %593 = vmatpush2.msra.mxu0 0.0
    %594 = vmatprep.subr.mxu0 0.0
    %595 = vmatpush2.msra.mxu0 0.0
    %596 = vmatprep.subr.mxu0 0.0
    %597 = vmatpush2.msra.mxu0 0.0
    %598 = vmatprep.subr.mxu0 0.0
    %599 = vmatpush2.msra.mxu0 0.0
    %600 = vmatprep.subr.mxu0 0.0
    %601 = vmatpush2.msra.mxu0 0.0
    %602 = vmatprep.subr.mxu0 0.0
    %603 = vmatpush2.msra.mxu0 0.0
    %604 = vmatprep.subr.mxu0 0.0
    %605 = vmatpush2.msra.mxu0 0.0
    %606 = vmatprep.subr.mxu0 0.0
    %607 = vmatpush2.msra.mxu0 0.0
    %608 = vmatprep.subr.mxu0 0.0
    %609 = vmatpush2.msra.mxu0 0.0
    %610 = vmatprep.subr.mxu0 0.0
    %611 = vmatpush2.msra.mxu0 0.0
    %612 = vmatprep.subr.mxu0 0.0
    %613 = vmatpush2.msra.mxu0 0.0
    %614 = vmatprep.subr.mxu0 0.0
    %615 = vmatpush2.msra.mxu0 0.0
    %616 = vmatprep.mubr.f32.mxu0 0.0
    %617 = vmatmul.mubr.f32.gmra.mxu0 %v372
    %v618 = vpop.f32.mrf.mxu0
    %v619 = vadd.f32 0.0, %v618
    %v620 = vpop.f32.mrf.mxu0
    %621 = vdwg.mxu0
    %v623 = vrot.slane %v619, 6
    %v625 = vadd.f32 %v180, %v623
    %v626 = vmul.f32 %v625, 0.5
    %v627 = vtanh.pop %v626
    %v628 = vadd.f32 %v627, 1.0
    %v629 = vmul.f32 %v628, 0.5
    %v630 = vadd.f32 %v619, %v343
    %v632 = vrot.slane %v630, 6
    %633 = vrot.lane.b32.xlu0 %v632, 64
    %v634 = vpop.permute.xlu0 %633
    %v636 = vmul.f32 %v629, %v634
    %638 = vrot.lane.b32.xlu0 %v636, 64
    %v639 = vpop.permute.xlu0 %638
    %v641 = vadd.f32 %v180, %v639
    %v642 = vtanh.pop %v641
    %v643 = vsub.f32 1.0, %v629
    %645 = vrot.lane.b32.xlu0 %v642, 96
    %v646 = vpop.permute.xlu0 %645
    %v648 = vmul.f32 %v643, %v646
    %v649 = vrot.slane %v364, 6
    %v651 = vmul.f32 %v629, %v649
    %v652 = vadd.f32 %v648, %v651
    %v654 = vrot.slane %v652, 2
    %655 = vrot.lane.b32.xlu0 %v654, 96
    %v656 = vpop.permute.xlu0 %655
    %v657 = vsel %vm188, %v656, 0
    %659 = vmatprep.subr.mxu0 0.0
    %660 = vmatpush1.msra.mxu0 0.0
    %661 = vmatprep.subr.mxu0 0.0
    %662 = vmatpush1.msra.mxu0 0.0
    %663 = vmatprep.subr.mxu0 0.0
    %664 = vmatpush1.msra.mxu0 0.0
    %665 = vmatprep.subr.mxu0 0.0
    %666 = vmatpush1.msra.mxu0 0.0
    %667 = vmatprep.subr.mxu0 0.0
    %668 = vmatpush1.msra.mxu0 0.0
    %669 = vmatprep.subr.mxu0 0.0
    %670 = vmatpush1.msra.mxu0 0.0
    %671 = vmatprep.subr.mxu0 0.0
    %672 = vmatpush1.msra.mxu0 0.0
    %673 = vmatprep.subr.mxu0 0.0
    %674 = vmatpush1.msra.mxu0 0.0
    %675 = vmatprep.subr.mxu0 0.0
    %676 = vmatpush1.msra.mxu0 0.0
    %677 = vmatprep.subr.mxu0 0.0
    %678 = vmatpush1.msra.mxu0 0.0
    %679 = vmatprep.subr.mxu0 0.0
    %680 = vmatpush1.msra.mxu0 0.0
    %681 = vmatprep.subr.mxu0 0.0
    %682 = vmatpush1.msra.mxu0 0.0
    %683 = vmatprep.subr.mxu0 0.0
    %684 = vmatpush1.msra.mxu0 %v42
    %685 = vmatprep.subr.mxu0 0.0
    %686 = vmatpush1.msra.mxu0 %v41
    %687 = vmatprep.subr.mxu0 0.0
    %688 = vmatpush1.msra.mxu0 %v40
    %689 = vmatprep.subr.mxu0 0.0
    %690 = vmatpush1.msra.mxu0 %v39
    %691 = vmatprep.subr.mxu0 0.0
    %692 = vmatpush2.msra.mxu0 0.0
    %693 = vmatprep.subr.mxu0 0.0
    %694 = vmatpush2.msra.mxu0 0.0
    %695 = vmatprep.subr.mxu0 0.0
    %696 = vmatpush2.msra.mxu0 0.0
    %697 = vmatprep.subr.mxu0 0.0
    %698 = vmatpush2.msra.mxu0 0.0
    %699 = vmatprep.subr.mxu0 0.0
    %700 = vmatpush2.msra.mxu0 0.0
    %701 = vmatprep.subr.mxu0 0.0
    %702 = vmatpush2.msra.mxu0 0.0
    %703 = vmatprep.subr.mxu0 0.0
    %704 = vmatpush2.msra.mxu0 0.0
    %705 = vmatprep.subr.mxu0 0.0
    %706 = vmatpush2.msra.mxu0 0.0
    %707 = vmatprep.subr.mxu0 0.0
    %708 = vmatpush2.msra.mxu0 0.0
    %709 = vmatprep.subr.mxu0 0.0
    %710 = vmatpush2.msra.mxu0 0.0
    %711 = vmatprep.subr.mxu0 0.0
    %712 = vmatpush2.msra.mxu0 0.0
    %713 = vmatprep.subr.mxu0 0.0
    %714 = vmatpush2.msra.mxu0 0.0
    %715 = vmatprep.subr.mxu0 0.0
    %716 = vmatpush2.msra.mxu0 0.0
    %717 = vmatprep.subr.mxu0 0.0
    %718 = vmatpush2.msra.mxu0 0.0
    %719 = vmatprep.subr.mxu0 0.0
    %720 = vmatpush2.msra.mxu0 0.0
    %721 = vmatprep.subr.mxu0 0.0
    %722 = vmatpush2.msra.mxu0 0.0
    %723 = vmatprep.mubr.f32.mxu0 0.0
    %724 = vmatmul.mubr.f32.gmra.mxu0 %v657
    %v725 = vpop.f32.mrf.mxu0
    %v726 = vadd.f32 %v368, %v725
    %v727 = vpop.f32.mrf.mxu0
    %728 = vdwg.mxu0
    %v729 = vadd.f32 %v726, %v549
    %v730 = vmul.f32 %v729, 0.5
    %v731 = vtanh.pop %v730
    %v732 = vadd.f32 %v731, 1.0
    %v733 = vmul.f32 %v732, 0.5
    %v734 = vadd.f32 %v549, %v455
    %736 = vrot.lane.b32.xlu0 %v734, 64
    %v737 = vpop.permute.xlu0 %736
    %v739 = vmul.f32 %v733, %v737
    %741 = vrot.lane.b32.xlu0 %v739, 64
    %v742 = vpop.permute.xlu0 %741
    %v744 = vadd.f32 %v726, %v742
    %v745 = vtanh.pop %v744
    %v746 = vsub.f32 1.0, %v733
    %748 = vrot.lane.b32.xlu0 %v745, 96
    %v749 = vpop.permute.xlu0 %748
    %v751 = vmul.f32 %v746, %v749
    %v752 = vmul.f32 %v733, %v476
    %v753 = vadd.f32 %v751, %v752
    %755 = vrot.lane.b32.xlu0 %v753, 96
    %v756 = vpop.permute.xlu0 %755
    %v757 = vsel %vm188, %v756, 0
    %759 = vmatprep.subr.mxu0 0.0
    %760 = vmatpush1.msra.mxu0 0.0
    %761 = vmatprep.subr.mxu0 0.0
    %762 = vmatpush1.msra.mxu0 0.0
    %763 = vmatprep.subr.mxu0 0.0
    %764 = vmatpush1.msra.mxu0 0.0
    %765 = vmatprep.subr.mxu0 0.0
    %766 = vmatpush1.msra.mxu0 0.0
    %767 = vmatprep.subr.mxu0 0.0
    %768 = vmatpush1.msra.mxu0 0.0
    %769 = vmatprep.subr.mxu0 0.0
    %770 = vmatpush1.msra.mxu0 0.0
    %771 = vmatprep.subr.mxu0 0.0
    %772 = vmatpush1.msra.mxu0 0.0
    %773 = vmatprep.subr.mxu0 0.0
    %774 = vmatpush1.msra.mxu0 0.0
    %775 = vmatprep.subr.mxu0 0.0
    %776 = vmatpush1.msra.mxu0 0.0
    %777 = vmatprep.subr.mxu0 0.0
    %778 = vmatpush1.msra.mxu0 0.0
    %779 = vmatprep.subr.mxu0 0.0
    %780 = vmatpush1.msra.mxu0 0.0
    %781 = vmatprep.subr.mxu0 0.0
    %782 = vmatpush1.msra.mxu0 0.0
    %783 = vmatprep.subr.mxu0 0.0
    %784 = vmatpush1.msra.mxu0 %v46
    %785 = vmatprep.subr.mxu0 0.0
    %786 = vmatpush1.msra.mxu0 %v45
    %787 = vmatprep.subr.mxu0 0.0
    %788 = vmatpush1.msra.mxu0 %v44
    %789 = vmatprep.subr.mxu0 0.0
    %790 = vmatpush1.msra.mxu0 %v43
    %791 = vmatprep.subr.mxu0 0.0
    %792 = vmatpush2.msra.mxu0 0.0
    %793 = vmatprep.subr.mxu0 0.0
    %794 = vmatpush2.msra.mxu0 0.0
    %795 = vmatprep.subr.mxu0 0.0
    %796 = vmatpush2.msra.mxu0 0.0
    %797 = vmatprep.subr.mxu0 0.0
    %798 = vmatpush2.msra.mxu0 0.0
    %799 = vmatprep.subr.mxu0 0.0
    %800 = vmatpush2.msra.mxu0 0.0
    %801 = vmatprep.subr.mxu0 0.0
    %802 = vmatpush2.msra.mxu0 0.0
    %803 = vmatprep.subr.mxu0 0.0
    %804 = vmatpush2.msra.mxu0 0.0
    %805 = vmatprep.subr.mxu0 0.0
    %806 = vmatpush2.msra.mxu0 0.0
    %807 = vmatprep.subr.mxu0 0.0
    %808 = vmatpush2.msra.mxu0 0.0
    %809 = vmatprep.subr.mxu0 0.0
    %810 = vmatpush2.msra.mxu0 0.0
    %811 = vmatprep.subr.mxu0 0.0
    %812 = vmatpush2.msra.mxu0 0.0
    %813 = vmatprep.subr.mxu0 0.0
    %814 = vmatpush2.msra.mxu0 0.0
    %815 = vmatprep.subr.mxu0 0.0
    %816 = vmatpush2.msra.mxu0 0.0
    %817 = vmatprep.subr.mxu0 0.0
    %818 = vmatpush2.msra.mxu0 0.0
    %819 = vmatprep.subr.mxu0 0.0
    %820 = vmatpush2.msra.mxu0 0.0
    %821 = vmatprep.subr.mxu0 0.0
    %822 = vmatpush2.msra.mxu0 0.0
    %823 = vmatprep.mubr.f32.mxu0 0.0
    %824 = vmatmul.mubr.f32.gmra.mxu0 %v757
    %v825 = vpop.f32.mrf.mxu0
    %v826 = vadd.f32 0.0, %v825
    %v827 = vpop.f32.mrf.mxu0
    %828 = vdwg.mxu0
    %829 = vmatprep.subr.mxu0 0.0
    %830 = vmatpush1.msra.mxu0 0.0
    %831 = vmatprep.subr.mxu0 0.0
    %832 = vmatpush1.msra.mxu0 0.0
    %833 = vmatprep.subr.mxu0 0.0
    %834 = vmatpush1.msra.mxu0 0.0
    %835 = vmatprep.subr.mxu0 0.0
    %836 = vmatpush1.msra.mxu0 0.0
    %837 = vmatprep.subr.mxu0 0.0
    %838 = vmatpush1.msra.mxu0 0.0
    %839 = vmatprep.subr.mxu0 0.0
    %840 = vmatpush1.msra.mxu0 0.0
    %841 = vmatprep.subr.mxu0 0.0
    %842 = vmatpush1.msra.mxu0 0.0
    %843 = vmatprep.subr.mxu0 0.0
    %844 = vmatpush1.msra.mxu0 0.0
    %845 = vmatprep.subr.mxu0 0.0
    %846 = vmatpush1.msra.mxu0 0.0
    %847 = vmatprep.subr.mxu0 0.0
    %848 = vmatpush1.msra.mxu0 0.0
    %849 = vmatprep.subr.mxu0 0.0
    %850 = vmatpush1.msra.mxu0 0.0
    %851 = vmatprep.subr.mxu0 0.0
    %852 = vmatpush1.msra.mxu0 0.0
    %853 = vmatprep.subr.mxu0 0.0
    %854 = vmatpush1.msra.mxu0 %v38
    %855 = vmatprep.subr.mxu0 0.0
    %856 = vmatpush1.msra.mxu0 %v37
    %857 = vmatprep.subr.mxu0 0.0
    %858 = vmatpush1.msra.mxu0 %v36
    %859 = vmatprep.subr.mxu0 0.0
    %860 = vmatpush1.msra.mxu0 %v35
    %861 = vmatprep.subr.mxu0 0.0
    %862 = vmatpush2.msra.mxu0 0.0
    %863 = vmatprep.subr.mxu0 0.0
    %864 = vmatpush2.msra.mxu0 0.0
    %865 = vmatprep.subr.mxu0 0.0
    %866 = vmatpush2.msra.mxu0 0.0
    %867 = vmatprep.subr.mxu0 0.0
    %868 = vmatpush2.msra.mxu0 0.0
    %869 = vmatprep.subr.mxu0 0.0
    %870 = vmatpush2.msra.mxu0 0.0
    %871 = vmatprep.subr.mxu0 0.0
    %872 = vmatpush2.msra.mxu0 0.0
    %873 = vmatprep.subr.mxu0 0.0
    %874 = vmatpush2.msra.mxu0 0.0
    %875 = vmatprep.subr.mxu0 0.0
    %876 = vmatpush2.msra.mxu0 0.0
    %877 = vmatprep.subr.mxu0 0.0
    %878 = vmatpush2.msra.mxu0 0.0
    %879 = vmatprep.subr.mxu0 0.0
    %880 = vmatpush2.msra.mxu0 0.0
    %881 = vmatprep.subr.mxu0 0.0
    %882 = vmatpush2.msra.mxu0 0.0
    %883 = vmatprep.subr.mxu0 0.0
    %884 = vmatpush2.msra.mxu0 0.0
    %885 = vmatprep.subr.mxu0 0.0
    %886 = vmatpush2.msra.mxu0 0.0
    %887 = vmatprep.subr.mxu0 0.0
    %888 = vmatpush2.msra.mxu0 0.0
    %889 = vmatprep.subr.mxu0 0.0
    %890 = vmatpush2.msra.mxu0 0.0
    %891 = vmatprep.subr.mxu0 0.0
    %892 = vmatpush2.msra.mxu0 0.0
    %893 = vmatprep.mubr.f32.mxu0 0.0
    %894 = vmatmul.mubr.f32.gmra.mxu0 %v657
    %v895 = vpop.f32.mrf.mxu0
    %v896 = vadd.f32 0.0, %v895
    %v897 = vpop.f32.mrf.mxu0
    %898 = vdwg.mxu0
    %v900 = vrot.slane %v896, 4
    %v902 = vadd.f32 %v180, %v900
    %v903 = vmul.f32 %v902, 0.5
    %v904 = vtanh.pop %v903
    %v905 = vadd.f32 %v904, 1.0
    %v906 = vmul.f32 %v905, 0.5
    %v907 = vadd.f32 %v896, %v343
    %v909 = vrot.slane %v907, 4
    %910 = vrot.lane.b32.xlu0 %v909, 64
    %v911 = vpop.permute.xlu0 %910
    %v913 = vmul.f32 %v906, %v911
    %915 = vrot.lane.b32.xlu0 %v913, 64
    %v916 = vpop.permute.xlu0 %915
    %v918 = vadd.f32 %v180, %v916
    %v919 = vtanh.pop %v918
    %v920 = vsub.f32 1.0, %v906
    %922 = vrot.lane.b32.xlu0 %v919, 96
    %v923 = vpop.permute.xlu0 %922
    %v925 = vmul.f32 %v920, %v923
    %v926 = vrot.slane %v652, 6
    %v928 = vmul.f32 %v906, %v926
    %v929 = vadd.f32 %v925, %v928
    %v931 = vrot.slane %v929, 4
    %932 = vrot.lane.b32.xlu0 %v931, 96
    %v933 = vpop.permute.xlu0 %932
    %v934 = vsel %vm188, %v933, 0
    %936 = vmatprep.subr.mxu0 0.0
    %937 = vmatpush1.msra.mxu0 0.0
    %938 = vmatprep.subr.mxu0 0.0
    %939 = vmatpush1.msra.mxu0 0.0
    %940 = vmatprep.subr.mxu0 0.0
    %941 = vmatpush1.msra.mxu0 0.0
    %942 = vmatprep.subr.mxu0 0.0
    %943 = vmatpush1.msra.mxu0 0.0
    %944 = vmatprep.subr.mxu0 0.0
    %945 = vmatpush1.msra.mxu0 0.0
    %946 = vmatprep.subr.mxu0 0.0
    %947 = vmatpush1.msra.mxu0 0.0
    %948 = vmatprep.subr.mxu0 0.0
    %949 = vmatpush1.msra.mxu0 0.0
    %950 = vmatprep.subr.mxu0 0.0
    %951 = vmatpush1.msra.mxu0 0.0
    %952 = vmatprep.subr.mxu0 0.0
    %953 = vmatpush1.msra.mxu0 0.0
    %954 = vmatprep.subr.mxu0 0.0
    %955 = vmatpush1.msra.mxu0 0.0
    %956 = vmatprep.subr.mxu0 0.0
    %957 = vmatpush1.msra.mxu0 0.0
    %958 = vmatprep.subr.mxu0 0.0
    %959 = vmatpush1.msra.mxu0 0.0
    %960 = vmatprep.subr.mxu0 0.0
    %961 = vmatpush1.msra.mxu0 %v42
    %962 = vmatprep.subr.mxu0 0.0
    %963 = vmatpush1.msra.mxu0 %v41
    %964 = vmatprep.subr.mxu0 0.0
    %965 = vmatpush1.msra.mxu0 %v40
    %966 = vmatprep.subr.mxu0 0.0
    %967 = vmatpush1.msra.mxu0 %v39
    %968 = vmatprep.subr.mxu0 0.0
    %969 = vmatpush2.msra.mxu0 0.0
    %970 = vmatprep.subr.mxu0 0.0
    %971 = vmatpush2.msra.mxu0 0.0
    %972 = vmatprep.subr.mxu0 0.0
    %973 = vmatpush2.msra.mxu0 0.0
    %974 = vmatprep.subr.mxu0 0.0
    %975 = vmatpush2.msra.mxu0 0.0
    %976 = vmatprep.subr.mxu0 0.0
    %977 = vmatpush2.msra.mxu0 0.0
    %978 = vmatprep.subr.mxu0 0.0
    %979 = vmatpush2.msra.mxu0 0.0
    %980 = vmatprep.subr.mxu0 0.0
    %981 = vmatpush2.msra.mxu0 0.0
    %982 = vmatprep.subr.mxu0 0.0
    %983 = vmatpush2.msra.mxu0 0.0
    %984 = vmatprep.subr.mxu0 0.0
    %985 = vmatpush2.msra.mxu0 0.0
    %986 = vmatprep.subr.mxu0 0.0
    %987 = vmatpush2.msra.mxu0 0.0
    %988 = vmatprep.subr.mxu0 0.0
    %989 = vmatpush2.msra.mxu0 0.0
    %990 = vmatprep.subr.mxu0 0.0
    %991 = vmatpush2.msra.mxu0 0.0
    %992 = vmatprep.subr.mxu0 0.0
    %993 = vmatpush2.msra.mxu0 0.0
    %994 = vmatprep.subr.mxu0 0.0
    %995 = vmatpush2.msra.mxu0 0.0
    %996 = vmatprep.subr.mxu0 0.0
    %997 = vmatpush2.msra.mxu0 0.0
    %998 = vmatprep.subr.mxu0 0.0
    %999 = vmatpush2.msra.mxu0 0.0
    %1000 = vmatprep.mubr.f32.mxu0 0.0
    %1001 = vmatmul.mubr.f32.gmra.mxu0 %v934
    %v1002 = vpop.f32.mrf.mxu0
    %v1003 = vadd.f32 %v368, %v1002
    %v1004 = vpop.f32.mrf.mxu0
    %1005 = vdwg.mxu0
    %v1006 = vadd.f32 %v1003, %v826
    %v1007 = vmul.f32 %v1006, 0.5
    %v1008 = vtanh.pop %v1007
    %v1009 = vadd.f32 %v1008, 1.0
    %v1010 = vmul.f32 %v1009, 0.5
    %v1011 = vadd.f32 %v826, %v455
    %1013 = vrot.lane.b32.xlu0 %v1011, 64
    %v1014 = vpop.permute.xlu0 %1013
    %v1016 = vmul.f32 %v1010, %v1014
    %1018 = vrot.lane.b32.xlu0 %v1016, 64
    %v1019 = vpop.permute.xlu0 %1018
    %v1021 = vadd.f32 %v1003, %v1019
    %v1022 = vtanh.pop %v1021
    %v1023 = vsub.f32 1.0, %v1010
    %1025 = vrot.lane.b32.xlu0 %v1022, 96
    %v1026 = vpop.permute.xlu0 %1025
    %v1028 = vmul.f32 %v1023, %v1026
    %v1029 = vmul.f32 %v1010, %v753
    %v1030 = vadd.f32 %v1028, %v1029
    %1032 = vrot.lane.b32.xlu0 %v1030, 96
    %v1033 = vpop.permute.xlu0 %1032
    %v1034 = vsel %vm188, %v1033, 0
    %1036 = vmatprep.subr.mxu0 0.0
    %1037 = vmatpush1.msra.mxu0 0.0
    %1038 = vmatprep.subr.mxu0 0.0
    %1039 = vmatpush1.msra.mxu0 0.0
    %1040 = vmatprep.subr.mxu0 0.0
    %1041 = vmatpush1.msra.mxu0 0.0
    %1042 = vmatprep.subr.mxu0 0.0
    %1043 = vmatpush1.msra.mxu0 0.0
    %1044 = vmatprep.subr.mxu0 0.0
    %1045 = vmatpush1.msra.mxu0 0.0
    %1046 = vmatprep.subr.mxu0 0.0
    %1047 = vmatpush1.msra.mxu0 0.0
    %1048 = vmatprep.subr.mxu0 0.0
    %1049 = vmatpush1.msra.mxu0 0.0
    %1050 = vmatprep.subr.mxu0 0.0
    %1051 = vmatpush1.msra.mxu0 0.0
    %1052 = vmatprep.subr.mxu0 0.0
    %1053 = vmatpush1.msra.mxu0 0.0
    %1054 = vmatprep.subr.mxu0 0.0
    %1055 = vmatpush1.msra.mxu0 0.0
    %1056 = vmatprep.subr.mxu0 0.0
    %1057 = vmatpush1.msra.mxu0 0.0
    %1058 = vmatprep.subr.mxu0 0.0
    %1059 = vmatpush1.msra.mxu0 0.0
    %1060 = vmatprep.subr.mxu0 0.0
    %1061 = vmatpush1.msra.mxu0 %v46
    %1062 = vmatprep.subr.mxu0 0.0
    %1063 = vmatpush1.msra.mxu0 %v45
    %1064 = vmatprep.subr.mxu0 0.0
    %1065 = vmatpush1.msra.mxu0 %v44
    %1066 = vmatprep.subr.mxu0 0.0
    %1067 = vmatpush1.msra.mxu0 %v43
    %1068 = vmatprep.subr.mxu0 0.0
    %1069 = vmatpush2.msra.mxu0 0.0
    %1070 = vmatprep.subr.mxu0 0.0
    %1071 = vmatpush2.msra.mxu0 0.0
    %1072 = vmatprep.subr.mxu0 0.0
    %1073 = vmatpush2.msra.mxu0 0.0
    %1074 = vmatprep.subr.mxu0 0.0
    %1075 = vmatpush2.msra.mxu0 0.0
    %1076 = vmatprep.subr.mxu0 0.0
    %1077 = vmatpush2.msra.mxu0 0.0
    %1078 = vmatprep.subr.mxu0 0.0
    %1079 = vmatpush2.msra.mxu0 0.0
    %1080 = vmatprep.subr.mxu0 0.0
    %1081 = vmatpush2.msra.mxu0 0.0
    %1082 = vmatprep.subr.mxu0 0.0
    %1083 = vmatpush2.msra.mxu0 0.0
    %1084 = vmatprep.subr.mxu0 0.0
    %1085 = vmatpush2.msra.mxu0 0.0
    %1086 = vmatprep.subr.mxu0 0.0
    %1087 = vmatpush2.msra.mxu0 0.0
    %1088 = vmatprep.subr.mxu0 0.0
    %1089 = vmatpush2.msra.mxu0 0.0
    %1090 = vmatprep.subr.mxu0 0.0
    %1091 = vmatpush2.msra.mxu0 0.0
    %1092 = vmatprep.subr.mxu0 0.0
    %1093 = vmatpush2.msra.mxu0 0.0
    %1094 = vmatprep.subr.mxu0 0.0
    %1095 = vmatpush2.msra.mxu0 0.0
    %1096 = vmatprep.subr.mxu0 0.0
    %1097 = vmatpush2.msra.mxu0 0.0
    %1098 = vmatprep.subr.mxu0 0.0
    %1099 = vmatpush2.msra.mxu0 0.0
    %1100 = vmatprep.mubr.f32.mxu0 0.0
    %1101 = vmatmul.mubr.f32.gmra.mxu0 %v1034
    %v1102 = vpop.f32.mrf.mxu0
    %v1103 = vadd.f32 0.0, %v1102
    %v1104 = vpop.f32.mrf.mxu0
    %1105 = vdwg.mxu0
    %1106 = vmatprep.subr.mxu0 0.0
    %1107 = vmatpush1.msra.mxu0 0.0
    %1108 = vmatprep.subr.mxu0 0.0
    %1109 = vmatpush1.msra.mxu0 0.0
    %1110 = vmatprep.subr.mxu0 0.0
    %1111 = vmatpush1.msra.mxu0 0.0
    %1112 = vmatprep.subr.mxu0 0.0
    %1113 = vmatpush1.msra.mxu0 0.0
    %1114 = vmatprep.subr.mxu0 0.0
    %1115 = vmatpush1.msra.mxu0 0.0
    %1116 = vmatprep.subr.mxu0 0.0
    %1117 = vmatpush1.msra.mxu0 0.0
    %1118 = vmatprep.subr.mxu0 0.0
    %1119 = vmatpush1.msra.mxu0 0.0
    %1120 = vmatprep.subr.mxu0 0.0
    %1121 = vmatpush1.msra.mxu0 0.0
    %1122 = vmatprep.subr.mxu0 0.0
    %1123 = vmatpush1.msra.mxu0 0.0
    %1124 = vmatprep.subr.mxu0 0.0
    %1125 = vmatpush1.msra.mxu0 0.0
    %1126 = vmatprep.subr.mxu0 0.0
    %1127 = vmatpush1.msra.mxu0 0.0
    %1128 = vmatprep.subr.mxu0 0.0
    %1129 = vmatpush1.msra.mxu0 0.0
    %1130 = vmatprep.subr.mxu0 0.0
    %1131 = vmatpush1.msra.mxu0 %v38
    %1132 = vmatprep.subr.mxu0 0.0
    %1133 = vmatpush1.msra.mxu0 %v37
    %1134 = vmatprep.subr.mxu0 0.0
    %1135 = vmatpush1.msra.mxu0 %v36
    %1136 = vmatprep.subr.mxu0 0.0
    %1137 = vmatpush1.msra.mxu0 %v35
    %1138 = vmatprep.subr.mxu0 0.0
    %1139 = vmatpush2.msra.mxu0 0.0
    %1140 = vmatprep.subr.mxu0 0.0
    %1141 = vmatpush2.msra.mxu0 0.0
    %1142 = vmatprep.subr.mxu0 0.0
    %1143 = vmatpush2.msra.mxu0 0.0
    %1144 = vmatprep.subr.mxu0 0.0
    %1145 = vmatpush2.msra.mxu0 0.0
    %1146 = vmatprep.subr.mxu0 0.0
    %1147 = vmatpush2.msra.mxu0 0.0
    %1148 = vmatprep.subr.mxu0 0.0
    %1149 = vmatpush2.msra.mxu0 0.0
    %1150 = vmatprep.subr.mxu0 0.0
    %1151 = vmatpush2.msra.mxu0 0.0
    %1152 = vmatprep.subr.mxu0 0.0
    %1153 = vmatpush2.msra.mxu0 0.0
    %1154 = vmatprep.subr.mxu0 0.0
    %1155 = vmatpush2.msra.mxu0 0.0
    %1156 = vmatprep.subr.mxu0 0.0
    %1157 = vmatpush2.msra.mxu0 0.0
    %1158 = vmatprep.subr.mxu0 0.0
    %1159 = vmatpush2.msra.mxu0 0.0
    %1160 = vmatprep.subr.mxu0 0.0
    %1161 = vmatpush2.msra.mxu0 0.0
    %1162 = vmatprep.subr.mxu0 0.0
    %1163 = vmatpush2.msra.mxu0 0.0
    %1164 = vmatprep.subr.mxu0 0.0
    %1165 = vmatpush2.msra.mxu0 0.0
    %1166 = vmatprep.subr.mxu0 0.0
    %1167 = vmatpush2.msra.mxu0 0.0
    %1168 = vmatprep.subr.mxu0 0.0
    %1169 = vmatpush2.msra.mxu0 0.0
    %1170 = vmatprep.mubr.f32.mxu0 0.0
    %1171 = vmatmul.mubr.f32.gmra.mxu0 %v934
    %v1172 = vpop.f32.mrf.mxu0
    %v1173 = vadd.f32 0.0, %v1172
    %v1174 = vpop.f32.mrf.mxu0
    %1175 = vdwg.mxu0
    %v1177 = vrot.slane %v1173, 2
    %v1179 = vadd.f32 %v180, %v1177
    %v1180 = vmul.f32 %v1179, 0.5
    %v1181 = vtanh.pop %v1180
    %v1182 = vadd.f32 %v1181, 1.0
    %v1183 = vmul.f32 %v1182, 0.5
    %v1184 = vadd.f32 %v1173, %v343
    %v1186 = vrot.slane %v1184, 2
    %1187 = vrot.lane.b32.xlu0 %v1186, 64
    %v1188 = vpop.permute.xlu0 %1187
    %v1190 = vmul.f32 %v1183, %v1188
    %1192 = vrot.lane.b32.xlu0 %v1190, 64
    %v1193 = vpop.permute.xlu0 %1192
    %v1195 = vadd.f32 %v180, %v1193
    %v1196 = vtanh.pop %v1195
    %v1197 = vsub.f32 1.0, %v1183
    %1199 = vrot.lane.b32.xlu0 %v1196, 96
    %v1200 = vpop.permute.xlu0 %1199
    %v1202 = vmul.f32 %v1197, %v1200
    %v1203 = vrot.slane %v929, 6
    %v1205 = vmul.f32 %v1183, %v1203
    %v1206 = vadd.f32 %v1202, %v1205
    %v1208 = vrot.slane %v1206, 6
    %1209 = vrot.lane.b32.xlu0 %v1208, 96
    %v1210 = vpop.permute.xlu0 %1209
    %v1211 = vsel %vm188, %v1210, 0
    %1213 = vmatprep.subr.mxu0 0.0
    %1214 = vmatpush1.msra.mxu0 0.0
    %1215 = vmatprep.subr.mxu0 0.0
    %1216 = vmatpush1.msra.mxu0 0.0
    %1217 = vmatprep.subr.mxu0 0.0
    %1218 = vmatpush1.msra.mxu0 0.0
    %1219 = vmatprep.subr.mxu0 0.0
    %1220 = vmatpush1.msra.mxu0 0.0
    %1221 = vmatprep.subr.mxu0 0.0
    %1222 = vmatpush1.msra.mxu0 0.0
    %1223 = vmatprep.subr.mxu0 0.0
    %1224 = vmatpush1.msra.mxu0 0.0
    %1225 = vmatprep.subr.mxu0 0.0
    %1226 = vmatpush1.msra.mxu0 0.0
    %1227 = vmatprep.subr.mxu0 0.0
    %1228 = vmatpush1.msra.mxu0 0.0
    %1229 = vmatprep.subr.mxu0 0.0
    %1230 = vmatpush1.msra.mxu0 0.0
    %1231 = vmatprep.subr.mxu0 0.0
    %1232 = vmatpush1.msra.mxu0 0.0
    %1233 = vmatprep.subr.mxu0 0.0
    %1234 = vmatpush1.msra.mxu0 0.0
    %1235 = vmatprep.subr.mxu0 0.0
    %1236 = vmatpush1.msra.mxu0 0.0
    %1237 = vmatprep.subr.mxu0 0.0
    %1238 = vmatpush1.msra.mxu0 %v42
    %1239 = vmatprep.subr.mxu0 0.0
    %1240 = vmatpush1.msra.mxu0 %v41
    %1241 = vmatprep.subr.mxu0 0.0
    %1242 = vmatpush1.msra.mxu0 %v40
    %1243 = vmatprep.subr.mxu0 0.0
    %1244 = vmatpush1.msra.mxu0 %v39
    %1245 = vmatprep.subr.mxu0 0.0
    %1246 = vmatpush2.msra.mxu0 0.0
    %1247 = vmatprep.subr.mxu0 0.0
    %1248 = vmatpush2.msra.mxu0 0.0
    %1249 = vmatprep.subr.mxu0 0.0
    %1250 = vmatpush2.msra.mxu0 0.0
    %1251 = vmatprep.subr.mxu0 0.0
    %1252 = vmatpush2.msra.mxu0 0.0
    %1253 = vmatprep.subr.mxu0 0.0
    %1254 = vmatpush2.msra.mxu0 0.0
    %1255 = vmatprep.subr.mxu0 0.0
    %1256 = vmatpush2.msra.mxu0 0.0
    %1257 = vmatprep.subr.mxu0 0.0
    %1258 = vmatpush2.msra.mxu0 0.0
    %1259 = vmatprep.subr.mxu0 0.0
    %1260 = vmatpush2.msra.mxu0 0.0
    %1261 = vmatprep.subr.mxu0 0.0
    %1262 = vmatpush2.msra.mxu0 0.0
    %1263 = vmatprep.subr.mxu0 0.0
    %1264 = vmatpush2.msra.mxu0 0.0
    %1265 = vmatprep.subr.mxu0 0.0
    %1266 = vmatpush2.msra.mxu0 0.0
    %1267 = vmatprep.subr.mxu0 0.0
    %1268 = vmatpush2.msra.mxu0 0.0
    %1269 = vmatprep.subr.mxu0 0.0
    %1270 = vmatpush2.msra.mxu0 0.0
    %1271 = vmatprep.subr.mxu0 0.0
    %1272 = vmatpush2.msra.mxu0 0.0
    %1273 = vmatprep.subr.mxu0 0.0
    %1274 = vmatpush2.msra.mxu0 0.0
    %1275 = vmatprep.subr.mxu0 0.0
    %1276 = vmatpush2.msra.mxu0 0.0
    %1277 = vmatprep.mubr.f32.mxu0 0.0
    %1278 = vmatmul.mubr.f32.gmra.mxu0 %v1211
    %v1279 = vpop.f32.mrf.mxu0
    %v1280 = vadd.f32 %v368, %v1279
    %v1281 = vpop.f32.mrf.mxu0
    %1282 = vdwg.mxu0
    %v1283 = vadd.f32 %v1280, %v1103
    %v1284 = vmul.f32 %v1283, 0.5
    %v1285 = vtanh.pop %v1284
    %v1286 = vadd.f32 %v1285, 1.0
    %v1287 = vmul.f32 %v1286, 0.5
    %v1288 = vadd.f32 %v1103, %v455
    %1290 = vrot.lane.b32.xlu0 %v1288, 64
    %v1291 = vpop.permute.xlu0 %1290
    %v1293 = vmul.f32 %v1287, %v1291
    %1295 = vrot.lane.b32.xlu0 %v1293, 64
    %v1296 = vpop.permute.xlu0 %1295
    %v1298 = vadd.f32 %v1280, %v1296
    %v1299 = vtanh.pop %v1298
    %v1300 = vsub.f32 1.0, %v1287
    %1302 = vrot.lane.b32.xlu0 %v1299, 96
    %v1303 = vpop.permute.xlu0 %1302
    %v1305 = vmul.f32 %v1300, %v1303
    %v1306 = vmul.f32 %v1287, %v1030
    %v1307 = vadd.f32 %v1305, %v1306
    %1309 = vrot.lane.b32.xlu0 %v1307, 96
    %v1310 = vpop.permute.xlu0 %1309
    %v1311 = vsel %vm188, %v1310, 0
    %1313 = vmatprep.subr.mxu0 0.0
    %1314 = vmatpush1.msra.mxu0 0.0
    %1315 = vmatprep.subr.mxu0 0.0
    %1316 = vmatpush1.msra.mxu0 0.0
    %1317 = vmatprep.subr.mxu0 0.0
    %1318 = vmatpush1.msra.mxu0 0.0
    %1319 = vmatprep.subr.mxu0 0.0
    %1320 = vmatpush1.msra.mxu0 0.0
    %1321 = vmatprep.subr.mxu0 0.0
    %1322 = vmatpush1.msra.mxu0 0.0
    %1323 = vmatprep.subr.mxu0 0.0
    %1324 = vmatpush1.msra.mxu0 0.0
    %1325 = vmatprep.subr.mxu0 0.0
    %1326 = vmatpush1.msra.mxu0 0.0
    %1327 = vmatprep.subr.mxu0 0.0
    %1328 = vmatpush1.msra.mxu0 0.0
    %1329 = vmatprep.subr.mxu0 0.0
    %1330 = vmatpush1.msra.mxu0 0.0
    %1331 = vmatprep.subr.mxu0 0.0
    %1332 = vmatpush1.msra.mxu0 0.0
    %1333 = vmatprep.subr.mxu0 0.0
    %1334 = vmatpush1.msra.mxu0 0.0
    %1335 = vmatprep.subr.mxu0 0.0
    %1336 = vmatpush1.msra.mxu0 0.0
    %1337 = vmatprep.subr.mxu0 0.0
    %1338 = vmatpush1.msra.mxu0 %v46
    %1339 = vmatprep.subr.mxu0 0.0
    %1340 = vmatpush1.msra.mxu0 %v45
    %1341 = vmatprep.subr.mxu0 0.0
    %1342 = vmatpush1.msra.mxu0 %v44
    %1343 = vmatprep.subr.mxu0 0.0
    %1344 = vmatpush1.msra.mxu0 %v43
    %1345 = vmatprep.subr.mxu0 0.0
    %1346 = vmatpush2.msra.mxu0 0.0
    %1347 = vmatprep.subr.mxu0 0.0
    %1348 = vmatpush2.msra.mxu0 0.0
    %1349 = vmatprep.subr.mxu0 0.0
    %1350 = vmatpush2.msra.mxu0 0.0
    %1351 = vmatprep.subr.mxu0 0.0
    %1352 = vmatpush2.msra.mxu0 0.0
    %1353 = vmatprep.subr.mxu0 0.0
    %1354 = vmatpush2.msra.mxu0 0.0
    %1355 = vmatprep.subr.mxu0 0.0
    %1356 = vmatpush2.msra.mxu0 0.0
    %1357 = vmatprep.subr.mxu0 0.0
    %1358 = vmatpush2.msra.mxu0 0.0
    %1359 = vmatprep.subr.mxu0 0.0
    %1360 = vmatpush2.msra.mxu0 0.0
    %1361 = vmatprep.subr.mxu0 0.0
    %1362 = vmatpush2.msra.mxu0 0.0
    %1363 = vmatprep.subr.mxu0 0.0
    %1364 = vmatpush2.msra.mxu0 0.0
    %1365 = vmatprep.subr.mxu0 0.0
    %1366 = vmatpush2.msra.mxu0 0.0
    %1367 = vmatprep.subr.mxu0 0.0
    %1368 = vmatpush2.msra.mxu0 0.0
    %1369 = vmatprep.subr.mxu0 0.0
    %1370 = vmatpush2.msra.mxu0 0.0
    %1371 = vmatprep.subr.mxu0 0.0
    %1372 = vmatpush2.msra.mxu0 0.0
    %1373 = vmatprep.subr.mxu0 0.0
    %1374 = vmatpush2.msra.mxu0 0.0
    %1375 = vmatprep.subr.mxu0 0.0
    %1376 = vmatpush2.msra.mxu0 0.0
    %1377 = vmatprep.mubr.f32.mxu0 0.0
    %1378 = vmatmul.mubr.f32.gmra.mxu0 %v1311
    %v1379 = vpop.f32.mrf.mxu0
    %v1380 = vadd.f32 0.0, %v1379
    %v1381 = vpop.f32.mrf.mxu0
    %1382 = vdwg.mxu0
    %1383 = vmatprep.subr.mxu0 0.0
    %1384 = vmatpush1.msra.mxu0 0.0
    %1385 = vmatprep.subr.mxu0 0.0
    %1386 = vmatpush1.msra.mxu0 0.0
    %1387 = vmatprep.subr.mxu0 0.0
    %1388 = vmatpush1.msra.mxu0 0.0
    %1389 = vmatprep.subr.mxu0 0.0
    %1390 = vmatpush1.msra.mxu0 0.0
    %1391 = vmatprep.subr.mxu0 0.0
    %1392 = vmatpush1.msra.mxu0 0.0
    %1393 = vmatprep.subr.mxu0 0.0
    %1394 = vmatpush1.msra.mxu0 0.0
    %1395 = vmatprep.subr.mxu0 0.0
    %1396 = vmatpush1.msra.mxu0 0.0
    %1397 = vmatprep.subr.mxu0 0.0
    %1398 = vmatpush1.msra.mxu0 0.0
    %1399 = vmatprep.subr.mxu0 0.0
    %1400 = vmatpush1.msra.mxu0 0.0
    %1401 = vmatprep.subr.mxu0 0.0
    %1402 = vmatpush1.msra.mxu0 0.0
    %1403 = vmatprep.subr.mxu0 0.0
    %1404 = vmatpush1.msra.mxu0 0.0
    %1405 = vmatprep.subr.mxu0 0.0
    %1406 = vmatpush1.msra.mxu0 0.0
    %1407 = vmatprep.subr.mxu0 0.0
    %1408 = vmatpush1.msra.mxu0 %v38
    %1409 = vmatprep.subr.mxu0 0.0
    %1410 = vmatpush1.msra.mxu0 %v37
    %1411 = vmatprep.subr.mxu0 0.0
    %1412 = vmatpush1.msra.mxu0 %v36
    %1413 = vmatprep.subr.mxu0 0.0
    %1414 = vmatpush1.msra.mxu0 %v35
    %1415 = vmatprep.subr.mxu0 0.0
    %1416 = vmatpush2.msra.mxu0 0.0
    %1417 = vmatprep.subr.mxu0 0.0
    %1418 = vmatpush2.msra.mxu0 0.0
    %1419 = vmatprep.subr.mxu0 0.0
    %1420 = vmatpush2.msra.mxu0 0.0
    %1421 = vmatprep.subr.mxu0 0.0
    %1422 = vmatpush2.msra.mxu0 0.0
    %1423 = vmatprep.subr.mxu0 0.0
    %1424 = vmatpush2.msra.mxu0 0.0
    %1425 = vmatprep.subr.mxu0 0.0
    %1426 = vmatpush2.msra.mxu0 0.0
    %1427 = vmatprep.subr.mxu0 0.0
    %1428 = vmatpush2.msra.mxu0 0.0
    %1429 = vmatprep.subr.mxu0 0.0
    %1430 = vmatpush2.msra.mxu0 0.0
    %1431 = vmatprep.subr.mxu0 0.0
    %1432 = vmatpush2.msra.mxu0 0.0
    %1433 = vmatprep.subr.mxu0 0.0
    %1434 = vmatpush2.msra.mxu0 0.0
    %1435 = vmatprep.subr.mxu0 0.0
    %1436 = vmatpush2.msra.mxu0 0.0
    %1437 = vmatprep.subr.mxu0 0.0
    %1438 = vmatpush2.msra.mxu0 0.0
    %1439 = vmatprep.subr.mxu0 0.0
    %1440 = vmatpush2.msra.mxu0 0.0
    %1441 = vmatprep.subr.mxu0 0.0
    %1442 = vmatpush2.msra.mxu0 0.0
    %1443 = vmatprep.subr.mxu0 0.0
    %1444 = vmatpush2.msra.mxu0 0.0
    %1445 = vmatprep.subr.mxu0 0.0
    %1446 = vmatpush2.msra.mxu0 0.0
    %1447 = vmatprep.mubr.f32.mxu0 0.0
    %1448 = vmatmul.mubr.f32.gmra.mxu0 %v1211
    %v1449 = vpop.f32.mrf.mxu0
    %v1450 = vadd.f32 0.0, %v1449
    %v1451 = vpop.f32.mrf.mxu0
    %1452 = vdwg.mxu0
    %v1453 = vadd.f32 %v185, %v1450
    %v1454 = vmul.f32 %v1453, 0.5
    %v1455 = vtanh.pop %v1454
    %v1456 = vadd.f32 %v1455, 1.0
    %v1457 = vmul.f32 %v1456, 0.5
    %v1458 = vadd.f32 %v1450, %v343
    %1460 = vrot.lane.b32.xlu0 %v1458, 64
    %v1461 = vpop.permute.xlu0 %1460
    %v1463 = vmul.f32 %v1457, %v1461
    %1465 = vrot.lane.b32.xlu0 %v1463, 64
    %v1466 = vpop.permute.xlu0 %1465
    %v1468 = vadd.f32 %v185, %v1466
    %v1469 = vtanh.pop %v1468
    %v1470 = vsub.f32 1.0, %v1457
    %1472 = vrot.lane.b32.xlu0 %v1469, 96
    %v1473 = vpop.permute.xlu0 %1472
    %v1475 = vmul.f32 %v1470, %v1473
    %v1477 = vmul.f32 %v1457, %v1208
    %v1478 = vadd.f32 %v1475, %v1477
    %1480 = vrot.lane.b32.xlu0 %v1478, 96
    %v1481 = vpop.permute.xlu0 %1480
    %v1482 = vsel %vm188, %v1481, 0
    %1484 = vmatprep.subr.mxu0 0.0
    %1485 = vmatpush1.msra.mxu0 0.0
    %1486 = vmatprep.subr.mxu0 0.0
    %1487 = vmatpush1.msra.mxu0 0.0
    %1488 = vmatprep.subr.mxu0 0.0
    %1489 = vmatpush1.msra.mxu0 0.0
    %1490 = vmatprep.subr.mxu0 0.0
    %1491 = vmatpush1.msra.mxu0 0.0
    %1492 = vmatprep.subr.mxu0 0.0
    %1493 = vmatpush1.msra.mxu0 0.0
    %1494 = vmatprep.subr.mxu0 0.0
    %1495 = vmatpush1.msra.mxu0 0.0
    %1496 = vmatprep.subr.mxu0 0.0
    %1497 = vmatpush1.msra.mxu0 0.0
    %1498 = vmatprep.subr.mxu0 0.0
    %1499 = vmatpush1.msra.mxu0 0.0
    %1500 = vmatprep.subr.mxu0 0.0
    %1501 = vmatpush1.msra.mxu0 0.0
    %1502 = vmatprep.subr.mxu0 0.0
    %1503 = vmatpush1.msra.mxu0 0.0
    %1504 = vmatprep.subr.mxu0 0.0
    %1505 = vmatpush1.msra.mxu0 0.0
    %1506 = vmatprep.subr.mxu0 0.0
    %1507 = vmatpush1.msra.mxu0 0.0
    %1508 = vmatprep.subr.mxu0 0.0
    %1509 = vmatpush1.msra.mxu0 %v42
    %1510 = vmatprep.subr.mxu0 0.0
    %1511 = vmatpush1.msra.mxu0 %v41
    %1512 = vmatprep.subr.mxu0 0.0
    %1513 = vmatpush1.msra.mxu0 %v40
    %1514 = vmatprep.subr.mxu0 0.0
    %1515 = vmatpush1.msra.mxu0 %v39
    %1516 = vmatprep.subr.mxu0 0.0
    %1517 = vmatpush2.msra.mxu0 0.0
    %1518 = vmatprep.subr.mxu0 0.0
    %1519 = vmatpush2.msra.mxu0 0.0
    %1520 = vmatprep.subr.mxu0 0.0
    %1521 = vmatpush2.msra.mxu0 0.0
    %1522 = vmatprep.subr.mxu0 0.0
    %1523 = vmatpush2.msra.mxu0 0.0
    %1524 = vmatprep.subr.mxu0 0.0
    %1525 = vmatpush2.msra.mxu0 0.0
    %1526 = vmatprep.subr.mxu0 0.0
    %1527 = vmatpush2.msra.mxu0 0.0
    %1528 = vmatprep.subr.mxu0 0.0
    %1529 = vmatpush2.msra.mxu0 0.0
    %1530 = vmatprep.subr.mxu0 0.0
    %1531 = vmatpush2.msra.mxu0 0.0
    %1532 = vmatprep.subr.mxu0 0.0
    %1533 = vmatpush2.msra.mxu0 0.0
    %1534 = vmatprep.subr.mxu0 0.0
    %1535 = vmatpush2.msra.mxu0 0.0
    %1536 = vmatprep.subr.mxu0 0.0
    %1537 = vmatpush2.msra.mxu0 0.0
    %1538 = vmatprep.subr.mxu0 0.0
    %1539 = vmatpush2.msra.mxu0 0.0
    %1540 = vmatprep.subr.mxu0 0.0
    %1541 = vmatpush2.msra.mxu0 0.0
    %1542 = vmatprep.subr.mxu0 0.0
    %1543 = vmatpush2.msra.mxu0 0.0
    %1544 = vmatprep.subr.mxu0 0.0
    %1545 = vmatpush2.msra.mxu0 0.0
    %1546 = vmatprep.subr.mxu0 0.0
    %1547 = vmatpush2.msra.mxu0 0.0
    %1548 = vmatprep.mubr.f32.mxu0 0.0
    %1549 = vmatmul.mubr.f32.gmra.mxu0 %v1482
    %v1550 = vpop.f32.mrf.mxu0
    %v1551 = vadd.f32 %v368, %v1550
    %v1552 = vpop.f32.mrf.mxu0
    %1553 = vdwg.mxu0
    %v1554 = vadd.f32 %v1551, %v1380
    %v1555 = vmul.f32 %v1554, 0.5
    %v1556 = vtanh.pop %v1555
    %v1557 = vadd.f32 %v1556, 1.0
    %v1558 = vmul.f32 %v1557, 0.5
    %v1559 = vadd.f32 %v1380, %v455
    %1561 = vrot.lane.b32.xlu0 %v1559, 64
    %v1562 = vpop.permute.xlu0 %1561
    %v1564 = vmul.f32 %v1558, %v1562
    %1566 = vrot.lane.b32.xlu0 %v1564, 64
    %v1567 = vpop.permute.xlu0 %1566
    %v1569 = vadd.f32 %v1551, %v1567
    %v1570 = vtanh.pop %v1569
    %v1571 = vsub.f32 1.0, %v1558
    %1573 = vrot.lane.b32.xlu0 %v1570, 96
    %v1574 = vpop.permute.xlu0 %1573
    %v1576 = vmul.f32 %v1571, %v1574
    %v1577 = vmul.f32 %v1558, %v1307
    %v1578 = vadd.f32 %v1576, %v1577
    %1580 = vrot.lane.b32.xlu0 %v1578, 96
    %v1581 = vpop.permute.xlu0 %1580
    %v1582 = vsel %vm188, %v1581, 0
    %1584 = vmatprep.subr.mxu0 0.0
    %1585 = vmatpush1.msra.mxu0 0.0
    %1586 = vmatprep.subr.mxu0 0.0
    %1587 = vmatpush1.msra.mxu0 0.0
    %1588 = vmatprep.subr.mxu0 0.0
    %1589 = vmatpush1.msra.mxu0 0.0
    %1590 = vmatprep.subr.mxu0 0.0
    %1591 = vmatpush1.msra.mxu0 0.0
    %1592 = vmatprep.subr.mxu0 0.0
    %1593 = vmatpush1.msra.mxu0 0.0
    %1594 = vmatprep.subr.mxu0 0.0
    %1595 = vmatpush1.msra.mxu0 0.0
    %1596 = vmatprep.subr.mxu0 0.0
    %1597 = vmatpush1.msra.mxu0 0.0
    %1598 = vmatprep.subr.mxu0 0.0
    %1599 = vmatpush1.msra.mxu0 0.0
    %1600 = vmatprep.subr.mxu0 0.0
    %1601 = vmatpush1.msra.mxu0 0.0
    %1602 = vmatprep.subr.mxu0 0.0
    %1603 = vmatpush1.msra.mxu0 0.0
    %1604 = vmatprep.subr.mxu0 0.0
    %1605 = vmatpush1.msra.mxu0 0.0
    %1606 = vmatprep.subr.mxu0 0.0
    %1607 = vmatpush1.msra.mxu0 0.0
    %1608 = vmatprep.subr.mxu0 0.0
    %1609 = vmatpush1.msra.mxu0 %v46
    %1610 = vmatprep.subr.mxu0 0.0
    %1611 = vmatpush1.msra.mxu0 %v45
    %1612 = vmatprep.subr.mxu0 0.0
    %1613 = vmatpush1.msra.mxu0 %v44
    %1614 = vmatprep.subr.mxu0 0.0
    %1615 = vmatpush1.msra.mxu0 %v43
    %1616 = vmatprep.subr.mxu0 0.0
    %1617 = vmatpush2.msra.mxu0 0.0
    %1618 = vmatprep.subr.mxu0 0.0
    %1619 = vmatpush2.msra.mxu0 0.0
    %1620 = vmatprep.subr.mxu0 0.0
    %1621 = vmatpush2.msra.mxu0 0.0
    %1622 = vmatprep.subr.mxu0 0.0
    %1623 = vmatpush2.msra.mxu0 0.0
    %1624 = vmatprep.subr.mxu0 0.0
    %1625 = vmatpush2.msra.mxu0 0.0
    %1626 = vmatprep.subr.mxu0 0.0
    %1627 = vmatpush2.msra.mxu0 0.0
    %1628 = vmatprep.subr.mxu0 0.0
    %1629 = vmatpush2.msra.mxu0 0.0
    %1630 = vmatprep.subr.mxu0 0.0
    %1631 = vmatpush2.msra.mxu0 0.0
    %1632 = vmatprep.subr.mxu0 0.0
    %1633 = vmatpush2.msra.mxu0 0.0
    %1634 = vmatprep.subr.mxu0 0.0
    %1635 = vmatpush2.msra.mxu0 0.0
    %1636 = vmatprep.subr.mxu0 0.0
    %1637 = vmatpush2.msra.mxu0 0.0
    %1638 = vmatprep.subr.mxu0 0.0
    %1639 = vmatpush2.msra.mxu0 0.0
    %1640 = vmatprep.subr.mxu0 0.0
    %1641 = vmatpush2.msra.mxu0 0.0
    %1642 = vmatprep.subr.mxu0 0.0
    %1643 = vmatpush2.msra.mxu0 0.0
    %1644 = vmatprep.subr.mxu0 0.0
    %1645 = vmatpush2.msra.mxu0 0.0
    %1646 = vmatprep.subr.mxu0 0.0
    %1647 = vmatpush2.msra.mxu0 0.0
    %1648 = vmatprep.mubr.f32.mxu0 0.0
    %1649 = vmatmul.mubr.f32.gmra.mxu0 %v1582
    %v1650 = vpop.f32.mrf.mxu0
    %v1651 = vadd.f32 0.0, %v1650
    %v1652 = vpop.f32.mrf.mxu0
    %1653 = vdwg.mxu0
    %1654 = vmatprep.subr.mxu0 0.0
    %1655 = vmatpush1.msra.mxu0 0.0
    %1656 = vmatprep.subr.mxu0 0.0
    %1657 = vmatpush1.msra.mxu0 0.0
    %1658 = vmatprep.subr.mxu0 0.0
    %1659 = vmatpush1.msra.mxu0 0.0
    %1660 = vmatprep.subr.mxu0 0.0
    %1661 = vmatpush1.msra.mxu0 0.0
    %1662 = vmatprep.subr.mxu0 0.0
    %1663 = vmatpush1.msra.mxu0 0.0
    %1664 = vmatprep.subr.mxu0 0.0
    %1665 = vmatpush1.msra.mxu0 0.0
    %1666 = vmatprep.subr.mxu0 0.0
    %1667 = vmatpush1.msra.mxu0 0.0
    %1668 = vmatprep.subr.mxu0 0.0
    %1669 = vmatpush1.msra.mxu0 0.0
    %1670 = vmatprep.subr.mxu0 0.0
    %1671 = vmatpush1.msra.mxu0 0.0
    %1672 = vmatprep.subr.mxu0 0.0
    %1673 = vmatpush1.msra.mxu0 0.0
    %1674 = vmatprep.subr.mxu0 0.0
    %1675 = vmatpush1.msra.mxu0 0.0
    %1676 = vmatprep.subr.mxu0 0.0
    %1677 = vmatpush1.msra.mxu0 0.0
    %1678 = vmatprep.subr.mxu0 0.0
    %1679 = vmatpush1.msra.mxu0 %v38
    %1680 = vmatprep.subr.mxu0 0.0
    %1681 = vmatpush1.msra.mxu0 %v37
    %1682 = vmatprep.subr.mxu0 0.0
    %1683 = vmatpush1.msra.mxu0 %v36
    %1684 = vmatprep.subr.mxu0 0.0
    %1685 = vmatpush1.msra.mxu0 %v35
    %1686 = vmatprep.subr.mxu0 0.0
    %1687 = vmatpush2.msra.mxu0 0.0
    %1688 = vmatprep.subr.mxu0 0.0
    %1689 = vmatpush2.msra.mxu0 0.0
    %1690 = vmatprep.subr.mxu0 0.0
    %1691 = vmatpush2.msra.mxu0 0.0
    %1692 = vmatprep.subr.mxu0 0.0
    %1693 = vmatpush2.msra.mxu0 0.0
    %1694 = vmatprep.subr.mxu0 0.0
    %1695 = vmatpush2.msra.mxu0 0.0
    %1696 = vmatprep.subr.mxu0 0.0
    %1697 = vmatpush2.msra.mxu0 0.0
    %1698 = vmatprep.subr.mxu0 0.0
    %1699 = vmatpush2.msra.mxu0 0.0
    %1700 = vmatprep.subr.mxu0 0.0
    %1701 = vmatpush2.msra.mxu0 0.0
    %1702 = vmatprep.subr.mxu0 0.0
    %1703 = vmatpush2.msra.mxu0 0.0
    %1704 = vmatprep.subr.mxu0 0.0
    %1705 = vmatpush2.msra.mxu0 0.0
    %1706 = vmatprep.subr.mxu0 0.0
    %1707 = vmatpush2.msra.mxu0 0.0
    %1708 = vmatprep.subr.mxu0 0.0
    %1709 = vmatpush2.msra.mxu0 0.0
    %1710 = vmatprep.subr.mxu0 0.0
    %1711 = vmatpush2.msra.mxu0 0.0
    %1712 = vmatprep.subr.mxu0 0.0
    %1713 = vmatpush2.msra.mxu0 0.0
    %1714 = vmatprep.subr.mxu0 0.0
    %1715 = vmatpush2.msra.mxu0 0.0
    %1716 = vmatprep.subr.mxu0 0.0
    %1717 = vmatpush2.msra.mxu0 0.0
    %1718 = vmatprep.mubr.f32.mxu0 0.0
    %1719 = vmatmul.mubr.f32.gmra.mxu0 %v1482
    %v1720 = vpop.f32.mrf.mxu0
    %v1721 = vadd.f32 0.0, %v1720
    %v1722 = vpop.f32.mrf.mxu0
    %1723 = vdwg.mxu0
    %v1725 = vrot.slane %v1721, 6
    %v1727 = vadd.f32 %v185, %v1725
    %v1728 = vmul.f32 %v1727, 0.5
    %v1729 = vtanh.pop %v1728
    %v1730 = vadd.f32 %v1729, 1.0
    %v1731 = vmul.f32 %v1730, 0.5
    %v1732 = vadd.f32 %v1721, %v343
    %v1734 = vrot.slane %v1732, 6
    %1735 = vrot.lane.b32.xlu0 %v1734, 64
    %v1736 = vpop.permute.xlu0 %1735
    %v1738 = vmul.f32 %v1731, %v1736
    %1740 = vrot.lane.b32.xlu0 %v1738, 64
    %v1741 = vpop.permute.xlu0 %1740
    %v1743 = vadd.f32 %v185, %v1741
    %v1744 = vtanh.pop %v1743
    %v1745 = vsub.f32 1.0, %v1731
    %1747 = vrot.lane.b32.xlu0 %v1744, 96
    %v1748 = vpop.permute.xlu0 %1747
    %v1750 = vmul.f32 %v1745, %v1748
    %v1751 = vrot.slane %v1478, 6
    %v1753 = vmul.f32 %v1731, %v1751
    %v1754 = vadd.f32 %v1750, %v1753
    %v1756 = vrot.slane %v1754, 2
    %1757 = vrot.lane.b32.xlu0 %v1756, 96
    %v1758 = vpop.permute.xlu0 %1757
    %v1759 = vsel %vm188, %v1758, 0
    %1761 = vmatprep.subr.mxu0 0.0
    %1762 = vmatpush1.msra.mxu0 0.0
    %1763 = vmatprep.subr.mxu0 0.0
    %1764 = vmatpush1.msra.mxu0 0.0
    %1765 = vmatprep.subr.mxu0 0.0
    %1766 = vmatpush1.msra.mxu0 0.0
    %1767 = vmatprep.subr.mxu0 0.0
    %1768 = vmatpush1.msra.mxu0 0.0
    %1769 = vmatprep.subr.mxu0 0.0
    %1770 = vmatpush1.msra.mxu0 0.0
    %1771 = vmatprep.subr.mxu0 0.0
    %1772 = vmatpush1.msra.mxu0 0.0
    %1773 = vmatprep.subr.mxu0 0.0
    %1774 = vmatpush1.msra.mxu0 0.0
    %1775 = vmatprep.subr.mxu0 0.0
    %1776 = vmatpush1.msra.mxu0 0.0
    %1777 = vmatprep.subr.mxu0 0.0
    %1778 = vmatpush1.msra.mxu0 0.0
    %1779 = vmatprep.subr.mxu0 0.0
    %1780 = vmatpush1.msra.mxu0 0.0
    %1781 = vmatprep.subr.mxu0 0.0
    %1782 = vmatpush1.msra.mxu0 0.0
    %1783 = vmatprep.subr.mxu0 0.0
    %1784 = vmatpush1.msra.mxu0 0.0
    %1785 = vmatprep.subr.mxu0 0.0
    %1786 = vmatpush1.msra.mxu0 %v42
    %1787 = vmatprep.subr.mxu0 0.0
    %1788 = vmatpush1.msra.mxu0 %v41
    %1789 = vmatprep.subr.mxu0 0.0
    %1790 = vmatpush1.msra.mxu0 %v40
    %1791 = vmatprep.subr.mxu0 0.0
    %1792 = vmatpush1.msra.mxu0 %v39
    %1793 = vmatprep.subr.mxu0 0.0
    %1794 = vmatpush2.msra.mxu0 0.0
    %1795 = vmatprep.subr.mxu0 0.0
    %1796 = vmatpush2.msra.mxu0 0.0
    %1797 = vmatprep.subr.mxu0 0.0
    %1798 = vmatpush2.msra.mxu0 0.0
    %1799 = vmatprep.subr.mxu0 0.0
    %1800 = vmatpush2.msra.mxu0 0.0
    %1801 = vmatprep.subr.mxu0 0.0
    %1802 = vmatpush2.msra.mxu0 0.0
    %1803 = vmatprep.subr.mxu0 0.0
    %1804 = vmatpush2.msra.mxu0 0.0
    %1805 = vmatprep.subr.mxu0 0.0
    %1806 = vmatpush2.msra.mxu0 0.0
    %1807 = vmatprep.subr.mxu0 0.0
    %1808 = vmatpush2.msra.mxu0 0.0
    %1809 = vmatprep.subr.mxu0 0.0
    %1810 = vmatpush2.msra.mxu0 0.0
    %1811 = vmatprep.subr.mxu0 0.0
    %1812 = vmatpush2.msra.mxu0 0.0
    %1813 = vmatprep.subr.mxu0 0.0
    %1814 = vmatpush2.msra.mxu0 0.0
    %1815 = vmatprep.subr.mxu0 0.0
    %1816 = vmatpush2.msra.mxu0 0.0
    %1817 = vmatprep.subr.mxu0 0.0
    %1818 = vmatpush2.msra.mxu0 0.0
    %1819 = vmatprep.subr.mxu0 0.0
    %1820 = vmatpush2.msra.mxu0 0.0
    %1821 = vmatprep.subr.mxu0 0.0
    %1822 = vmatpush2.msra.mxu0 0.0
    %1823 = vmatprep.subr.mxu0 0.0
    %1824 = vmatpush2.msra.mxu0 0.0
    %1825 = vmatprep.mubr.f32.mxu0 0.0
    %1826 = vmatmul.mubr.f32.gmra.mxu0 %v1759
    %v1827 = vpop.f32.mrf.mxu0
    %v1828 = vadd.f32 %v368, %v1827
    %v1829 = vpop.f32.mrf.mxu0
    %1830 = vdwg.mxu0
    %v1831 = vadd.f32 %v1828, %v1651
    %v1832 = vmul.f32 %v1831, 0.5
    %v1833 = vtanh.pop %v1832
    %v1834 = vadd.f32 %v1833, 1.0
    %v1835 = vmul.f32 %v1834, 0.5
    %v1836 = vadd.f32 %v1651, %v455
    %1838 = vrot.lane.b32.xlu0 %v1836, 64
    %v1839 = vpop.permute.xlu0 %1838
    %v1841 = vmul.f32 %v1835, %v1839
    %1843 = vrot.lane.b32.xlu0 %v1841, 64
    %v1844 = vpop.permute.xlu0 %1843
    %v1846 = vadd.f32 %v1828, %v1844
    %v1847 = vtanh.pop %v1846
    %v1848 = vsub.f32 1.0, %v1835
    %1850 = vrot.lane.b32.xlu0 %v1847, 96
    %v1851 = vpop.permute.xlu0 %1850
    %v1853 = vmul.f32 %v1848, %v1851
    %v1854 = vmul.f32 %v1835, %v1578
    %v1855 = vadd.f32 %v1853, %v1854
    %1857 = vrot.lane.b32.xlu0 %v1855, 96
    %v1858 = vpop.permute.xlu0 %1857
    %v1859 = vsel %vm188, %v1858, 0
    %1861 = vmatprep.subr.mxu0 0.0
    %1862 = vmatpush1.msra.mxu0 0.0
    %1863 = vmatprep.subr.mxu0 0.0
    %1864 = vmatpush1.msra.mxu0 0.0
    %1865 = vmatprep.subr.mxu0 0.0
    %1866 = vmatpush1.msra.mxu0 0.0
    %1867 = vmatprep.subr.mxu0 0.0
    %1868 = vmatpush1.msra.mxu0 0.0
    %1869 = vmatprep.subr.mxu0 0.0
    %1870 = vmatpush1.msra.mxu0 0.0
    %1871 = vmatprep.subr.mxu0 0.0
    %1872 = vmatpush1.msra.mxu0 0.0
    %1873 = vmatprep.subr.mxu0 0.0
    %1874 = vmatpush1.msra.mxu0 0.0
    %1875 = vmatprep.subr.mxu0 0.0
    %1876 = vmatpush1.msra.mxu0 0.0
    %1877 = vmatprep.subr.mxu0 0.0
    %1878 = vmatpush1.msra.mxu0 0.0
    %1879 = vmatprep.subr.mxu0 0.0
    %1880 = vmatpush1.msra.mxu0 0.0
    %1881 = vmatprep.subr.mxu0 0.0
    %1882 = vmatpush1.msra.mxu0 0.0
    %1883 = vmatprep.subr.mxu0 0.0
    %1884 = vmatpush1.msra.mxu0 0.0
    %1885 = vmatprep.subr.mxu0 0.0
    %1886 = vmatpush1.msra.mxu0 %v46
    %1887 = vmatprep.subr.mxu0 0.0
    %1888 = vmatpush1.msra.mxu0 %v45
    %1889 = vmatprep.subr.mxu0 0.0
    %1890 = vmatpush1.msra.mxu0 %v44
    %1891 = vmatprep.subr.mxu0 0.0
    %1892 = vmatpush1.msra.mxu0 %v43
    %1893 = vmatprep.subr.mxu0 0.0
    %1894 = vmatpush2.msra.mxu0 0.0
    %1895 = vmatprep.subr.mxu0 0.0
    %1896 = vmatpush2.msra.mxu0 0.0
    %1897 = vmatprep.subr.mxu0 0.0
    %1898 = vmatpush2.msra.mxu0 0.0
    %1899 = vmatprep.subr.mxu0 0.0
    %1900 = vmatpush2.msra.mxu0 0.0
    %1901 = vmatprep.subr.mxu0 0.0
    %1902 = vmatpush2.msra.mxu0 0.0
    %1903 = vmatprep.subr.mxu0 0.0
    %1904 = vmatpush2.msra.mxu0 0.0
    %1905 = vmatprep.subr.mxu0 0.0
    %1906 = vmatpush2.msra.mxu0 0.0
    %1907 = vmatprep.subr.mxu0 0.0
    %1908 = vmatpush2.msra.mxu0 0.0
    %1909 = vmatprep.subr.mxu0 0.0
    %1910 = vmatpush2.msra.mxu0 0.0
    %1911 = vmatprep.subr.mxu0 0.0
    %1912 = vmatpush2.msra.mxu0 0.0
    %1913 = vmatprep.subr.mxu0 0.0
    %1914 = vmatpush2.msra.mxu0 0.0
    %1915 = vmatprep.subr.mxu0 0.0
    %1916 = vmatpush2.msra.mxu0 0.0
    %1917 = vmatprep.subr.mxu0 0.0
    %1918 = vmatpush2.msra.mxu0 0.0
    %1919 = vmatprep.subr.mxu0 0.0
    %1920 = vmatpush2.msra.mxu0 0.0
    %1921 = vmatprep.subr.mxu0 0.0
    %1922 = vmatpush2.msra.mxu0 0.0
    %1923 = vmatprep.subr.mxu0 0.0
    %1924 = vmatpush2.msra.mxu0 0.0
    %1925 = vmatprep.mubr.f32.mxu0 0.0
    %1926 = vmatmul.mubr.f32.gmra.mxu0 %v1859
    %v1927 = vpop.f32.mrf.mxu0
    %v1928 = vadd.f32 0.0, %v1927
    %v1929 = vpop.f32.mrf.mxu0
    %1930 = vdwg.mxu0
    %1931 = vmatprep.subr.mxu0 0.0
    %1932 = vmatpush1.msra.mxu0 0.0
    %1933 = vmatprep.subr.mxu0 0.0
    %1934 = vmatpush1.msra.mxu0 0.0
    %1935 = vmatprep.subr.mxu0 0.0
    %1936 = vmatpush1.msra.mxu0 0.0
    %1937 = vmatprep.subr.mxu0 0.0
    %1938 = vmatpush1.msra.mxu0 0.0
    %1939 = vmatprep.subr.mxu0 0.0
    %1940 = vmatpush1.msra.mxu0 0.0
    %1941 = vmatprep.subr.mxu0 0.0
    %1942 = vmatpush1.msra.mxu0 0.0
    %1943 = vmatprep.subr.mxu0 0.0
    %1944 = vmatpush1.msra.mxu0 0.0
    %1945 = vmatprep.subr.mxu0 0.0
    %1946 = vmatpush1.msra.mxu0 0.0
    %1947 = vmatprep.subr.mxu0 0.0
    %1948 = vmatpush1.msra.mxu0 0.0
    %1949 = vmatprep.subr.mxu0 0.0
    %1950 = vmatpush1.msra.mxu0 0.0
    %1951 = vmatprep.subr.mxu0 0.0
    %1952 = vmatpush1.msra.mxu0 0.0
    %1953 = vmatprep.subr.mxu0 0.0
    %1954 = vmatpush1.msra.mxu0 0.0
    %1955 = vmatprep.subr.mxu0 0.0
    %1956 = vmatpush1.msra.mxu0 %v38
    %1957 = vmatprep.subr.mxu0 0.0
    %1958 = vmatpush1.msra.mxu0 %v37
    %1959 = vmatprep.subr.mxu0 0.0
    %1960 = vmatpush1.msra.mxu0 %v36
    %1961 = vmatprep.subr.mxu0 0.0
    %1962 = vmatpush1.msra.mxu0 %v35
    %1963 = vmatprep.subr.mxu0 0.0
    %1964 = vmatpush2.msra.mxu0 0.0
    %1965 = vmatprep.subr.mxu0 0.0
    %1966 = vmatpush2.msra.mxu0 0.0
    %1967 = vmatprep.subr.mxu0 0.0
    %1968 = vmatpush2.msra.mxu0 0.0
    %1969 = vmatprep.subr.mxu0 0.0
    %1970 = vmatpush2.msra.mxu0 0.0
    %1971 = vmatprep.subr.mxu0 0.0
    %1972 = vmatpush2.msra.mxu0 0.0
    %1973 = vmatprep.subr.mxu0 0.0
    %1974 = vmatpush2.msra.mxu0 0.0
    %1975 = vmatprep.subr.mxu0 0.0
    %1976 = vmatpush2.msra.mxu0 0.0
    %1977 = vmatprep.subr.mxu0 0.0
    %1978 = vmatpush2.msra.mxu0 0.0
    %1979 = vmatprep.subr.mxu0 0.0
    %1980 = vmatpush2.msra.mxu0 0.0
    %1981 = vmatprep.subr.mxu0 0.0
    %1982 = vmatpush2.msra.mxu0 0.0
    %1983 = vmatprep.subr.mxu0 0.0
    %1984 = vmatpush2.msra.mxu0 0.0
    %1985 = vmatprep.subr.mxu0 0.0
    %1986 = vmatpush2.msra.mxu0 0.0
    %1987 = vmatprep.subr.mxu0 0.0
    %1988 = vmatpush2.msra.mxu0 0.0
    %1989 = vmatprep.subr.mxu0 0.0
    %1990 = vmatpush2.msra.mxu0 0.0
    %1991 = vmatprep.subr.mxu0 0.0
    %1992 = vmatpush2.msra.mxu0 0.0
    %1993 = vmatprep.subr.mxu0 0.0
    %1994 = vmatpush2.msra.mxu0 0.0
    %1995 = vmatprep.mubr.f32.mxu0 0.0
    %1996 = vmatmul.mubr.f32.gmra.mxu0 %v1759
    %v1997 = vpop.f32.mrf.mxu0
    %v1998 = vadd.f32 0.0, %v1997
    %v1999 = vpop.f32.mrf.mxu0
    %2000 = vdwg.mxu0
    %v2002 = vrot.slane %v1998, 4
    %v2004 = vadd.f32 %v185, %v2002
    %v2005 = vmul.f32 %v2004, 0.5
    %v2006 = vtanh.pop %v2005
    %v2007 = vadd.f32 %v2006, 1.0
    %v2008 = vmul.f32 %v2007, 0.5
    %v2009 = vadd.f32 %v1998, %v343
    %v2011 = vrot.slane %v2009, 4
    %2012 = vrot.lane.b32.xlu0 %v2011, 64
    %v2013 = vpop.permute.xlu0 %2012
    %v2015 = vmul.f32 %v2008, %v2013
    %2017 = vrot.lane.b32.xlu0 %v2015, 64
    %v2018 = vpop.permute.xlu0 %2017
    %v2020 = vadd.f32 %v185, %v2018
    %v2021 = vtanh.pop %v2020
    %v2022 = vsub.f32 1.0, %v2008
    %2024 = vrot.lane.b32.xlu0 %v2021, 96
    %v2025 = vpop.permute.xlu0 %2024
    %v2027 = vmul.f32 %v2022, %v2025
    %v2028 = vrot.slane %v1754, 6
    %v2030 = vmul.f32 %v2008, %v2028
    %v2031 = vadd.f32 %v2027, %v2030
    %v2033 = vrot.slane %v2031, 4
    %2034 = vrot.lane.b32.xlu0 %v2033, 96
    %v2035 = vpop.permute.xlu0 %2034
    %v2036 = vsel %vm188, %v2035, 0
    %2038 = vmatprep.subr.mxu0 0.0
    %2039 = vmatpush1.msra.mxu0 0.0
    %2040 = vmatprep.subr.mxu0 0.0
    %2041 = vmatpush1.msra.mxu0 0.0
    %2042 = vmatprep.subr.mxu0 0.0
    %2043 = vmatpush1.msra.mxu0 0.0
    %2044 = vmatprep.subr.mxu0 0.0
    %2045 = vmatpush1.msra.mxu0 0.0
    %2046 = vmatprep.subr.mxu0 0.0
    %2047 = vmatpush1.msra.mxu0 0.0
    %2048 = vmatprep.subr.mxu0 0.0
    %2049 = vmatpush1.msra.mxu0 0.0
    %2050 = vmatprep.subr.mxu0 0.0
    %2051 = vmatpush1.msra.mxu0 0.0
    %2052 = vmatprep.subr.mxu0 0.0
    %2053 = vmatpush1.msra.mxu0 0.0
    %2054 = vmatprep.subr.mxu0 0.0
    %2055 = vmatpush1.msra.mxu0 0.0
    %2056 = vmatprep.subr.mxu0 0.0
    %2057 = vmatpush1.msra.mxu0 0.0
    %2058 = vmatprep.subr.mxu0 0.0
    %2059 = vmatpush1.msra.mxu0 0.0
    %2060 = vmatprep.subr.mxu0 0.0
    %2061 = vmatpush1.msra.mxu0 0.0
    %2062 = vmatprep.subr.mxu0 0.0
    %2063 = vmatpush1.msra.mxu0 %v42
    %2064 = vmatprep.subr.mxu0 0.0
    %2065 = vmatpush1.msra.mxu0 %v41
    %2066 = vmatprep.subr.mxu0 0.0
    %2067 = vmatpush1.msra.mxu0 %v40
    %2068 = vmatprep.subr.mxu0 0.0
    %2069 = vmatpush1.msra.mxu0 %v39
    %2070 = vmatprep.subr.mxu0 0.0
    %2071 = vmatpush2.msra.mxu0 0.0
    %2072 = vmatprep.subr.mxu0 0.0
    %2073 = vmatpush2.msra.mxu0 0.0
    %2074 = vmatprep.subr.mxu0 0.0
    %2075 = vmatpush2.msra.mxu0 0.0
    %2076 = vmatprep.subr.mxu0 0.0
    %2077 = vmatpush2.msra.mxu0 0.0
    %2078 = vmatprep.subr.mxu0 0.0
    %2079 = vmatpush2.msra.mxu0 0.0
    %2080 = vmatprep.subr.mxu0 0.0
    %2081 = vmatpush2.msra.mxu0 0.0
    %2082 = vmatprep.subr.mxu0 0.0
    %2083 = vmatpush2.msra.mxu0 0.0
    %2084 = vmatprep.subr.mxu0 0.0
    %2085 = vmatpush2.msra.mxu0 0.0
    %2086 = vmatprep.subr.mxu0 0.0
    %2087 = vmatpush2.msra.mxu0 0.0
    %2088 = vmatprep.subr.mxu0 0.0
    %2089 = vmatpush2.msra.mxu0 0.0
    %2090 = vmatprep.subr.mxu0 0.0
    %2091 = vmatpush2.msra.mxu0 0.0
    %2092 = vmatprep.subr.mxu0 0.0
    %2093 = vmatpush2.msra.mxu0 0.0
    %2094 = vmatprep.subr.mxu0 0.0
    %2095 = vmatpush2.msra.mxu0 0.0
    %2096 = vmatprep.subr.mxu0 0.0
    %2097 = vmatpush2.msra.mxu0 0.0
    %2098 = vmatprep.subr.mxu0 0.0
    %2099 = vmatpush2.msra.mxu0 0.0
    %2100 = vmatprep.subr.mxu0 0.0
    %2101 = vmatpush2.msra.mxu0 0.0
    %2102 = vmatprep.mubr.f32.mxu0 0.0
    %2103 = vmatmul.mubr.f32.gmra.mxu0 %v2036
    %v2104 = vpop.f32.mrf.mxu0
    %v2105 = vadd.f32 %v368, %v2104
    %v2106 = vpop.f32.mrf.mxu0
    %2107 = vdwg.mxu0
    %v2108 = vadd.f32 %v2105, %v1928
    %v2109 = vmul.f32 %v2108, 0.5
    %v2110 = vtanh.pop %v2109
    %v2111 = vadd.f32 %v2110, 1.0
    %v2112 = vmul.f32 %v2111, 0.5
    %v2113 = vadd.f32 %v1928, %v455
    %2115 = vrot.lane.b32.xlu0 %v2113, 64
    %v2116 = vpop.permute.xlu0 %2115
    %v2118 = vmul.f32 %v2112, %v2116
    %2120 = vrot.lane.b32.xlu0 %v2118, 64
    %v2121 = vpop.permute.xlu0 %2120
    %v2123 = vadd.f32 %v2105, %v2121
    %v2124 = vtanh.pop %v2123
    %v2125 = vsub.f32 1.0, %v2112
    %2127 = vrot.lane.b32.xlu0 %v2124, 96
    %v2128 = vpop.permute.xlu0 %2127
    %v2130 = vmul.f32 %v2125, %v2128
    %v2131 = vmul.f32 %v2112, %v1855
    %v2132 = vadd.f32 %v2130, %v2131
    %2134 = vrot.lane.b32.xlu0 %v2132, 96
    %v2135 = vpop.permute.xlu0 %2134
    %v2136 = vsel %vm188, %v2135, 0
    %2138 = vmatprep.subr.mxu0 0.0
    %2139 = vmatpush1.msra.mxu0 0.0
    %2140 = vmatprep.subr.mxu0 0.0
    %2141 = vmatpush1.msra.mxu0 0.0
    %2142 = vmatprep.subr.mxu0 0.0
    %2143 = vmatpush1.msra.mxu0 0.0
    %2144 = vmatprep.subr.mxu0 0.0
    %2145 = vmatpush1.msra.mxu0 0.0
    %2146 = vmatprep.subr.mxu0 0.0
    %2147 = vmatpush1.msra.mxu0 0.0
    %2148 = vmatprep.subr.mxu0 0.0
    %2149 = vmatpush1.msra.mxu0 0.0
    %2150 = vmatprep.subr.mxu0 0.0
    %2151 = vmatpush1.msra.mxu0 0.0
    %2152 = vmatprep.subr.mxu0 0.0
    %2153 = vmatpush1.msra.mxu0 0.0
    %2154 = vmatprep.subr.mxu0 0.0
    %2155 = vmatpush1.msra.mxu0 0.0
    %2156 = vmatprep.subr.mxu0 0.0
    %2157 = vmatpush1.msra.mxu0 0.0
    %2158 = vmatprep.subr.mxu0 0.0
    %2159 = vmatpush1.msra.mxu0 0.0
    %2160 = vmatprep.subr.mxu0 0.0
    %2161 = vmatpush1.msra.mxu0 0.0
    %2162 = vmatprep.subr.mxu0 0.0
    %2163 = vmatpush1.msra.mxu0 %v46
    %2164 = vmatprep.subr.mxu0 0.0
    %2165 = vmatpush1.msra.mxu0 %v45
    %2166 = vmatprep.subr.mxu0 0.0
    %2167 = vmatpush1.msra.mxu0 %v44
    %2168 = vmatprep.subr.mxu0 0.0
    %2169 = vmatpush1.msra.mxu0 %v43
    %2170 = vmatprep.subr.mxu0 0.0
    %2171 = vmatpush2.msra.mxu0 0.0
    %2172 = vmatprep.subr.mxu0 0.0
    %2173 = vmatpush2.msra.mxu0 0.0
    %2174 = vmatprep.subr.mxu0 0.0
    %2175 = vmatpush2.msra.mxu0 0.0
    %2176 = vmatprep.subr.mxu0 0.0
    %2177 = vmatpush2.msra.mxu0 0.0
    %2178 = vmatprep.subr.mxu0 0.0
    %2179 = vmatpush2.msra.mxu0 0.0
    %2180 = vmatprep.subr.mxu0 0.0
    %2181 = vmatpush2.msra.mxu0 0.0
    %2182 = vmatprep.subr.mxu0 0.0
    %2183 = vmatpush2.msra.mxu0 0.0
    %2184 = vmatprep.subr.mxu0 0.0
    %2185 = vmatpush2.msra.mxu0 0.0
    %2186 = vmatprep.subr.mxu0 0.0
    %2187 = vmatpush2.msra.mxu0 0.0
    %2188 = vmatprep.subr.mxu0 0.0
    %2189 = vmatpush2.msra.mxu0 0.0
    %2190 = vmatprep.subr.mxu0 0.0
    %2191 = vmatpush2.msra.mxu0 0.0
    %2192 = vmatprep.subr.mxu0 0.0
    %2193 = vmatpush2.msra.mxu0 0.0
    %2194 = vmatprep.subr.mxu0 0.0
    %2195 = vmatpush2.msra.mxu0 0.0
    %2196 = vmatprep.subr.mxu0 0.0
    %2197 = vmatpush2.msra.mxu0 0.0
    %2198 = vmatprep.subr.mxu0 0.0
    %2199 = vmatpush2.msra.mxu0 0.0
    %2200 = vmatprep.subr.mxu0 0.0
    %2201 = vmatpush2.msra.mxu0 0.0
    %2202 = vmatprep.mubr.f32.mxu0 0.0
    %2203 = vmatmul.mubr.f32.gmra.mxu0 %v2136
    %v2204 = vpop.f32.mrf.mxu0
    %v2205 = vadd.f32 0.0, %v2204
    %v2206 = vpop.f32.mrf.mxu0
    %2207 = vdwg.mxu0
    %2208 = vmatprep.subr.mxu0 0.0
    %2209 = vmatpush1.msra.mxu0 0.0
    %2210 = vmatprep.subr.mxu0 0.0
    %2211 = vmatpush1.msra.mxu0 0.0
    %2212 = vmatprep.subr.mxu0 0.0
    %2213 = vmatpush1.msra.mxu0 0.0
    %2214 = vmatprep.subr.mxu0 0.0
    %2215 = vmatpush1.msra.mxu0 0.0
    %2216 = vmatprep.subr.mxu0 0.0
    %2217 = vmatpush1.msra.mxu0 0.0
    %2218 = vmatprep.subr.mxu0 0.0
    %2219 = vmatpush1.msra.mxu0 0.0
    %2220 = vmatprep.subr.mxu0 0.0
    %2221 = vmatpush1.msra.mxu0 0.0
    %2222 = vmatprep.subr.mxu0 0.0
    %2223 = vmatpush1.msra.mxu0 0.0
    %2224 = vmatprep.subr.mxu0 0.0
    %2225 = vmatpush1.msra.mxu0 0.0
    %2226 = vmatprep.subr.mxu0 0.0
    %2227 = vmatpush1.msra.mxu0 0.0
    %2228 = vmatprep.subr.mxu0 0.0
    %2229 = vmatpush1.msra.mxu0 0.0
    %2230 = vmatprep.subr.mxu0 0.0
    %2231 = vmatpush1.msra.mxu0 0.0
    %2232 = vmatprep.subr.mxu0 0.0
    %2233 = vmatpush1.msra.mxu0 %v38
    %2234 = vmatprep.subr.mxu0 0.0
    %2235 = vmatpush1.msra.mxu0 %v37
    %2236 = vmatprep.subr.mxu0 0.0
    %2237 = vmatpush1.msra.mxu0 %v36
    %2238 = vmatprep.subr.mxu0 0.0
    %2239 = vmatpush1.msra.mxu0 %v35
    %2240 = vmatprep.subr.mxu0 0.0
    %2241 = vmatpush2.msra.mxu0 0.0
    %2242 = vmatprep.subr.mxu0 0.0
    %2243 = vmatpush2.msra.mxu0 0.0
    %2244 = vmatprep.subr.mxu0 0.0
    %2245 = vmatpush2.msra.mxu0 0.0
    %2246 = vmatprep.subr.mxu0 0.0
    %2247 = vmatpush2.msra.mxu0 0.0
    %2248 = vmatprep.subr.mxu0 0.0
    %2249 = vmatpush2.msra.mxu0 0.0
    %2250 = vmatprep.subr.mxu0 0.0
    %2251 = vmatpush2.msra.mxu0 0.0
    %2252 = vmatprep.subr.mxu0 0.0
    %2253 = vmatpush2.msra.mxu0 0.0
    %2254 = vmatprep.subr.mxu0 0.0
    %2255 = vmatpush2.msra.mxu0 0.0
    %2256 = vmatprep.subr.mxu0 0.0
    %2257 = vmatpush2.msra.mxu0 0.0
    %2258 = vmatprep.subr.mxu0 0.0
    %2259 = vmatpush2.msra.mxu0 0.0
    %2260 = vmatprep.subr.mxu0 0.0
    %2261 = vmatpush2.msra.mxu0 0.0
    %2262 = vmatprep.subr.mxu0 0.0
    %2263 = vmatpush2.msra.mxu0 0.0
    %2264 = vmatprep.subr.mxu0 0.0
    %2265 = vmatpush2.msra.mxu0 0.0
    %2266 = vmatprep.subr.mxu0 0.0
    %2267 = vmatpush2.msra.mxu0 0.0
    %2268 = vmatprep.subr.mxu0 0.0
    %2269 = vmatpush2.msra.mxu0 0.0
    %2270 = vmatprep.subr.mxu0 0.0
    %2271 = vmatpush2.msra.mxu0 0.0
    %2272 = vmatprep.mubr.f32.mxu0 0.0
    %2273 = vmatmul.mubr.f32.gmra.mxu0 %v2036
    %v2274 = vpop.f32.mrf.mxu0
    %v2275 = vadd.f32 0.0, %v2274
    %v2276 = vpop.f32.mrf.mxu0
    %2277 = vdwg.mxu0
    %v2279 = vrot.slane %v2275, 2
    %v2281 = vadd.f32 %v185, %v2279
    %v2282 = vmul.f32 %v2281, 0.5
    %v2283 = vtanh.pop %v2282
    %v2284 = vadd.f32 %v2283, 1.0
    %v2285 = vmul.f32 %v2284, 0.5
    %v2286 = vadd.f32 %v2275, %v343
    %v2288 = vrot.slane %v2286, 2
    %2289 = vrot.lane.b32.xlu0 %v2288, 64
    %v2290 = vpop.permute.xlu0 %2289
    %v2292 = vmul.f32 %v2285, %v2290
    %2294 = vrot.lane.b32.xlu0 %v2292, 64
    %v2295 = vpop.permute.xlu0 %2294
    %v2297 = vadd.f32 %v185, %v2295
    %v2298 = vtanh.pop %v2297
    %v2299 = vsub.f32 1.0, %v2285
    %2301 = vrot.lane.b32.xlu0 %v2298, 96
    %v2302 = vpop.permute.xlu0 %2301
    %v2304 = vmul.f32 %v2299, %v2302
    %v2305 = vrot.slane %v2031, 6
    %v2307 = vmul.f32 %v2285, %v2305
    %v2308 = vadd.f32 %v2304, %v2307
    %v2310 = vrot.slane %v2308, 6
    %2311 = vrot.lane.b32.xlu0 %v2310, 96
    %v2312 = vpop.permute.xlu0 %2311
    %v2313 = vsel %vm188, %v2312, 0
    %2315 = vmatprep.subr.mxu0 0.0
    %2316 = vmatpush1.msra.mxu0 0.0
    %2317 = vmatprep.subr.mxu0 0.0
    %2318 = vmatpush1.msra.mxu0 0.0
    %2319 = vmatprep.subr.mxu0 0.0
    %2320 = vmatpush1.msra.mxu0 0.0
    %2321 = vmatprep.subr.mxu0 0.0
    %2322 = vmatpush1.msra.mxu0 0.0
    %2323 = vmatprep.subr.mxu0 0.0
    %2324 = vmatpush1.msra.mxu0 0.0
    %2325 = vmatprep.subr.mxu0 0.0
    %2326 = vmatpush1.msra.mxu0 0.0
    %2327 = vmatprep.subr.mxu0 0.0
    %2328 = vmatpush1.msra.mxu0 0.0
    %2329 = vmatprep.subr.mxu0 0.0
    %2330 = vmatpush1.msra.mxu0 0.0
    %2331 = vmatprep.subr.mxu0 0.0
    %2332 = vmatpush1.msra.mxu0 0.0
    %2333 = vmatprep.subr.mxu0 0.0
    %2334 = vmatpush1.msra.mxu0 0.0
    %2335 = vmatprep.subr.mxu0 0.0
    %2336 = vmatpush1.msra.mxu0 0.0
    %2337 = vmatprep.subr.mxu0 0.0
    %2338 = vmatpush1.msra.mxu0 0.0
    %2339 = vmatprep.subr.mxu0 0.0
    %2340 = vmatpush1.msra.mxu0 %v42
    %2341 = vmatprep.subr.mxu0 0.0
    %2342 = vmatpush1.msra.mxu0 %v41
    %2343 = vmatprep.subr.mxu0 0.0
    %2344 = vmatpush1.msra.mxu0 %v40
    %2345 = vmatprep.subr.mxu0 0.0
    %2346 = vmatpush1.msra.mxu0 %v39
    %2347 = vmatprep.subr.mxu0 0.0
    %2348 = vmatpush2.msra.mxu0 0.0
    %2349 = vmatprep.subr.mxu0 0.0
    %2350 = vmatpush2.msra.mxu0 0.0
    %2351 = vmatprep.subr.mxu0 0.0
    %2352 = vmatpush2.msra.mxu0 0.0
    %2353 = vmatprep.subr.mxu0 0.0
    %2354 = vmatpush2.msra.mxu0 0.0
    %2355 = vmatprep.subr.mxu0 0.0
    %2356 = vmatpush2.msra.mxu0 0.0
    %2357 = vmatprep.subr.mxu0 0.0
    %2358 = vmatpush2.msra.mxu0 0.0
    %2359 = vmatprep.subr.mxu0 0.0
    %2360 = vmatpush2.msra.mxu0 0.0
    %2361 = vmatprep.subr.mxu0 0.0
    %2362 = vmatpush2.msra.mxu0 0.0
    %2363 = vmatprep.subr.mxu0 0.0
    %2364 = vmatpush2.msra.mxu0 0.0
    %2365 = vmatprep.subr.mxu0 0.0
    %2366 = vmatpush2.msra.mxu0 0.0
    %2367 = vmatprep.subr.mxu0 0.0
    %2368 = vmatpush2.msra.mxu0 0.0
    %2369 = vmatprep.subr.mxu0 0.0
    %2370 = vmatpush2.msra.mxu0 0.0
    %2371 = vmatprep.subr.mxu0 0.0
    %2372 = vmatpush2.msra.mxu0 0.0
    %2373 = vmatprep.subr.mxu0 0.0
    %2374 = vmatpush2.msra.mxu0 0.0
    %2375 = vmatprep.subr.mxu0 0.0
    %2376 = vmatpush2.msra.mxu0 0.0
    %2377 = vmatprep.subr.mxu0 0.0
    %2378 = vmatpush2.msra.mxu0 0.0
    %2379 = vmatprep.mubr.f32.mxu0 0.0
    %2380 = vmatmul.mubr.f32.gmra.mxu0 %v2313
    %v2381 = vpop.f32.mrf.mxu0
    %v2382 = vadd.f32 %v368, %v2381
    %v2383 = vpop.f32.mrf.mxu0
    %2384 = vdwg.mxu0
    %v2385 = vadd.f32 %v2382, %v2205
    %v2386 = vmul.f32 %v2385, 0.5
    %v2387 = vtanh.pop %v2386
    %v2388 = vadd.f32 %v2387, 1.0
    %v2389 = vmul.f32 %v2388, 0.5
    %v2390 = vadd.f32 %v2205, %v455
    %2392 = vrot.lane.b32.xlu0 %v2390, 64
    %v2393 = vpop.permute.xlu0 %2392
    %v2395 = vmul.f32 %v2389, %v2393
    %2397 = vrot.lane.b32.xlu0 %v2395, 64
    %v2398 = vpop.permute.xlu0 %2397
    %v2400 = vadd.f32 %v2382, %v2398
    %v2401 = vtanh.pop %v2400
    %v2402 = vsub.f32 1.0, %v2389
    %2404 = vrot.lane.b32.xlu0 %v2401, 96
    %v2405 = vpop.permute.xlu0 %2404
    %v2407 = vmul.f32 %v2402, %v2405
    %v2408 = vmul.f32 %v2389, %v2132
    %v2409 = vadd.f32 %v2407, %v2408
    %2411 = vrot.lane.b32.xlu0 %v2409, 96
    %v2412 = vpop.permute.xlu0 %2411
    %vm2414 = vcmask 254976
    %v2415 = vsel %vm2414, %v2412, 0.0
    %2416 = vadd.xlane.f32.xlu0 %v2415
    %v2417 = vpop.xlane.xlu0 %2416
    %v2418 = vrcp.pop 32.0
    %v2419 = vmul.f32 %v2417, %v2418
    %v2420 = vsub.f32 %v2409, %v2419
    %v2421 = vmul.f32 %v2420, %v2420
    %2423 = vrot.lane.b32.xlu0 %v2421, 96
    %v2424 = vpop.permute.xlu0 %2423
    %v2426 = vsel %vm2414, %v2424, 0.0
    %2427 = vadd.xlane.f32.xlu0 %v2426
    %v2428 = vpop.xlane.xlu0 %2427
    %v2429 = vmul.f32 %v2428, %v2418
    %v2430 = vadd.f32 %v2429, 1e-05
    %v2431 = vrsqrt.pop %v2430
    %v2432 = vmul.f32 %v2420, %v2431
    %v2433 = vlaneseq
    %v2434 = vshrl.u32 %v2433, 7
    %v2435 = vsub.s32 4, %v2434
    %v2436 = vrot.slane %v51, %v2435
    %2438 = vrot.lane.b32.xlu0 %v2436, 32
    %v2439 = vpop.permute.xlu0 %2438
    %v2441 = vmul.f32 %v2432, %v2439
    %v2442 = vlaneseq
    %v2443 = vshrl.u32 %v2442, 7
    %v2444 = vsub.s32 5, %v2443
    %v2445 = vrot.slane %v51, %v2444
    %2447 = vrot.lane.b32.xlu0 %v2445, 32
    %v2448 = vpop.permute.xlu0 %2447
    %v2450 = vadd.f32 %v2441, %v2448
    %v2451 = vlaneseq
    %v2452 = vshrl.u32 %v2451, 7
    %v2453 = vsub.s32 6, %v2452
    %v2454 = vrot.slane %v51, %v2453
    %2456 = vrot.lane.b32.xlu0 %v2450, 96
    %v2457 = vpop.permute.xlu0 %2456
    %v2458 = vsel %vm188, %v2457, 0
    %2460 = vmatprep.subr.mxu0 0.0
    %2461 = vmatpush1.msra.mxu0 0.0
    %2462 = vmatprep.subr.mxu0 0.0
    %2463 = vmatpush1.msra.mxu0 0.0
    %2464 = vmatprep.subr.mxu0 0.0
    %2465 = vmatpush1.msra.mxu0 0.0
    %2466 = vmatprep.subr.mxu0 0.0
    %2467 = vmatpush1.msra.mxu0 0.0
    %2468 = vmatprep.subr.mxu0 0.0
    %2469 = vmatpush1.msra.mxu0 0.0
    %2470 = vmatprep.subr.mxu0 0.0
    %2471 = vmatpush1.msra.mxu0 0.0
    %2472 = vmatprep.subr.mxu0 0.0
    %2473 = vmatpush1.msra.mxu0 0.0
    %2474 = vmatprep.subr.mxu0 0.0
    %2475 = vmatpush1.msra.mxu0 0.0
    %2476 = vmatprep.subr.mxu0 0.0
    %2477 = vmatpush1.msra.mxu0 0.0
    %2478 = vmatprep.subr.mxu0 0.0
    %2479 = vmatpush1.msra.mxu0 0.0
    %2480 = vmatprep.subr.mxu0 0.0
    %2481 = vmatpush1.msra.mxu0 0.0
    %2482 = vmatprep.subr.mxu0 0.0
    %2483 = vmatpush1.msra.mxu0 0.0
    %2484 = vmatprep.subr.mxu0 0.0
    %2485 = vmatpush1.msra.mxu0 %v50
    %2486 = vmatprep.subr.mxu0 0.0
    %2487 = vmatpush1.msra.mxu0 %v49
    %2488 = vmatprep.subr.mxu0 0.0
    %2489 = vmatpush1.msra.mxu0 %v48
    %2490 = vmatprep.subr.mxu0 0.0
    %2491 = vmatpush1.msra.mxu0 %v47
    %2492 = vmatprep.subr.mxu0 0.0
    %2493 = vmatpush2.msra.mxu0 0.0
    %2494 = vmatprep.subr.mxu0 0.0
    %2495 = vmatpush2.msra.mxu0 0.0
    %2496 = vmatprep.subr.mxu0 0.0
    %2497 = vmatpush2.msra.mxu0 0.0
    %2498 = vmatprep.subr.mxu0 0.0
    %2499 = vmatpush2.msra.mxu0 0.0
    %2500 = vmatprep.subr.mxu0 0.0
    %2501 = vmatpush2.msra.mxu0 0.0
    %2502 = vmatprep.subr.mxu0 0.0
    %2503 = vmatpush2.msra.mxu0 0.0
    %2504 = vmatprep.subr.mxu0 0.0
    %2505 = vmatpush2.msra.mxu0 0.0
    %2506 = vmatprep.subr.mxu0 0.0
    %2507 = vmatpush2.msra.mxu0 0.0
    %2508 = vmatprep.subr.mxu0 0.0
    %2509 = vmatpush2.msra.mxu0 0.0
    %2510 = vmatprep.subr.mxu0 0.0
    %2511 = vmatpush2.msra.mxu0 0.0
    %2512 = vmatprep.subr.mxu0 0.0
    %2513 = vmatpush2.msra.mxu0 0.0
    %2514 = vmatprep.subr.mxu0 0.0
    %2515 = vmatpush2.msra.mxu0 0.0
    %2516 = vmatprep.subr.mxu0 0.0
    %2517 = vmatpush2.msra.mxu0 0.0
    %2518 = vmatprep.subr.mxu0 0.0
    %2519 = vmatpush2.msra.mxu0 0.0
    %2520 = vmatprep.subr.mxu0 0.0
    %2521 = vmatpush2.msra.mxu0 0.0
    %2522 = vmatprep.subr.mxu0 0.0
    %2523 = vmatpush2.msra.mxu0 0.0
    %2524 = vmatprep.mubr.f32.mxu0 0.0
    %2525 = vmatmul.mubr.f32.gmra.mxu0 %v2458
    %v2526 = vpop.f32.mrf.mxu0
    %v2527 = vadd.f32 %v2454, %v2526
    %v2528 = vpop.f32.mrf.mxu0
    %2529 = vdwg.mxu0
    %v2530 = vmax.f32 %v2527, 0.0
    %v2531 = vlaneseq
    %v2532 = vshrl.u32 %v2531, 7
    %v2533 = vsub.s32 7, %v2532
    %v2534 = vrot.slane %v51, %v2533
    %v2535 = vmul.f32 %v2530, %v2534
    %vm2536 = vcmask 123904
    %v2537 = vsel %vm2536, %v2535, 0.0
    %2538 = vadd.xlane.f32.xlu0 %v2537
    %v2539 = vpop.xlane.xlu0 %2538
    %v2540 = vadd.f32 %v2539, %v2454
    %2542 = vrot.lane.b32.xlu0 %v2540, 112
    %v2543 = vpop.permute.xlu0 %2542
    %vm2545 = vcmask 1024
    %2546 = vst.msk [vmem:[%s5] sm:$0x3] %vm2545, %v2543
    // Predicated region
    $region26: #{tpu_custom_call.1} parent=1 // pred_check
      _
    $region27: #{tpu_custom_call.1} parent=1 // pred_check_branch
      %2548 = sbr.rel (0) target = $region29
    $region28: #{tpu_custom_call.1} parent=1 // pred_region
      _
    $region29: #{tpu_custom_call.1} parent=1 // pred_fallthru
      _
    // Predicated region
    $region30: #{tpu_custom_call.1} parent=1 // pred_check
      _
    $region31: #{tpu_custom_call.1} parent=1 // pred_check_branch
      %2550 = sbr.rel (0) target = $region33
    $region32: #{tpu_custom_call.1} parent=1 // pred_region
      _
    $region33: #{tpu_custom_call.1} parent=1 // pred_fallthru
      _
    %2551 = vsyncpa [#allocation3], 1

</llo_original>
